<compile_context>
chip_gen: v6e
topology: v6e:2x2x1
jax: 0.10.0
libtpu: 0.0.40
codegen_flags: <defaults>
</compile_context>

<pallas_src>
import functools

import jax
import jax.numpy as jnp
import numpy as np
from jax import lax
from jax.experimental import pallas as pl
from jax.experimental.pallas import tpu as pltpu

# ----------------------------- model hyper-params (scaled-down, same structure) ----------
batch_size = 2
cfg_cnn = [(1, 8, 1, 1, 3), (8, 16, 1, 1, 3), (16, 16, 1, 1, 3)]  # (cin, cout, stride, pad, k)
cfg_fc = [32, 10]
cnn_dim = [16, 8, 4, 2]                       # spatial sizes: input, after pool1, pool2, pool3
fc_dim = cfg_cnn[-1][1] * cnn_dim[-1] * cnn_dim[-1]   # 64

thresh = 0.3
mem_decay = 0.6
w_decay = 0.95
tau_w = 40
time_window = 10
probs = 0.5   # dropout prob (eval-mode forward: identity)


# ----------------------------- host-built constant operators -----------------------------
def _pool_matrix_T(n, h, w):
    """(n*h*w, n*(h//2)*(w//2)) with 0.25 entries; pooled = spike_T @ P."""
    ho, wo = h // 2, w // 2
    p = np.zeros((n * h * w, n * ho * wo), np.float32)
    for b in range(n):
        for i in range(ho):
            for j in range(wo):
                rout = b * ho * wo + i * wo + j
                for di in range(2):
                    for dj in range(2):
                        p[b * h * w + (2 * i + di) * w + (2 * j + dj), rout] = 0.25
    return p


def _shift_select_T(n, h, w):
    """(9, R, R) shift/zero-pad selection: conv = sum_t (W_t @ x) @ S[t]."""
    r = n * h * w
    s = np.zeros((9, r, r), np.float32)
    for di in range(3):
        for dj in range(3):
            t = di * 3 + dj
            dh, dw = di - 1, dj - 1
            for b in range(n):
                for i in range(h):
                    for j in range(w):
                        si, sj = i + dh, j + dw
                        if 0 <= si < h and 0 <= sj < w:
                            s[t, b * h * w + si * w + sj, b * h * w + i * w + j] = 1.0
    return s


def _pool_flatten_ops(n, h, w, c):
    """avg-pool 2x2 + torch NCHW flatten, as matmuls:
       flat_T (c*4, n) = sum_s scat[s] @ (spike_T @ sel[s])."""
    ho, wo = h // 2, w // 2
    ns = ho * wo                                     # 4 pooled spatial positions
    sel = np.zeros((ns, n * h * w, n), np.float32)
    scat = np.zeros((ns, c * ns, c), np.float32)
    for s in range(ns):
        i, j = s // wo, s % wo
        for b in range(n):
            for di in range(2):
                for dj in range(2):
                    sel[s, b * h * w + (2 * i + di) * w + (2 * j + dj), b] = 0.25
        for ch in range(c):
            scat[s, ch * ns + s, ch] = 1.0           # NCHW flatten: k = c*4 + (ho*2+wo)
    return sel, scat


def build_static_ops():
    n = batch_size
    d0, d1, d2 = cnn_dim[0], cnn_dim[1], cnn_dim[2]
    sel3, scat3 = _pool_flatten_ops(n, d2, d2, cfg_cnn[2][1])
    return {
        "p1t": jnp.asarray(_pool_matrix_T(n, d0, d0)),    # (512, 128)
        "p2t": jnp.asarray(_pool_matrix_T(n, d1, d1)),    # (128, 32)
        "s2t": jnp.asarray(_shift_select_T(n, d1, d1)),   # (9, 128, 128)
        "s3t": jnp.asarray(_shift_select_T(n, d2, d2)),   # (9, 32, 32)
        "sel3t": jnp.asarray(sel3),                       # (4, 32, 2)
        "scat3t": jnp.asarray(scat3),                     # (4, 64, 16)
    }


# ----------------------------- fused Pallas kernel ----------------------------------------
def _snn_fused_kernel(decay_ref, alpha_ref,
                      cols1_ref, w1_ref, b1_ref, p1_ref,
                      w2_ref, b2_ref, s2_ref, p2_ref,
                      w3_ref, b3_ref, s3_ref,
                      sel3_ref, scat3_ref,
                      wfc1_ref, bfc1_ref, beta1_ref, eta1_ref,
                      wfc2_ref, bfc2_ref, hebb_ref,
                      h2mem_out_ref, h2sum_out_ref, hebb_out_ref, step_out_ref,
                      *, wins, rank):
    f32 = jnp.float32
    n = batch_size
    c1, c2, c3 = cfg_cnn[0][1], cfg_cnn[1][1], cfg_cnn[2][1]
    r1 = n * cnn_dim[0] * cnn_dim[0]     # 512
    r2 = n * cnn_dim[1] * cnn_dim[1]     # 128
    r3 = n * cnn_dim[2] * cnn_dim[2]     # 32
    h1n, h2n = cfg_fc
    inv_thresh = 1.0 / thresh
    inv_b = 1.0 / n

    alpha = alpha_ref[0]

    # conv1 pre-activation: raw input, no decay -> loop-invariant; compute once.
    state1 = (jnp.dot(w1_ref[...], cols1_ref[...], preferred_element_type=f32)
              + b1_ref[...])                                        # (8, 512)

    def conv3x3(x, w_ref, s_ref, bias):
        # sum_t (W_t @ x) @ S_t + b  -- zero-padded 3x3 conv, feature-major layout.
        acc = bias
        for t in range(9):
            y_t = jnp.dot(w_ref[t], x, preferred_element_type=f32)
            acc = acc + jnp.dot(y_t, s_ref[t], preferred_element_type=f32)
        return acc

    def body(step, carry):
        (c1m, c1s, c2m, c2s, c3m, c3s,
         h1m, h1s, h2m, h2s, h2sum, hebb, done, last_step) = carry
        live = done == 0
        decay = decay_ref[step]

        # --- conv1 (no decay on the raw input) ---
        c1m_n = (c1m - thresh * c1s) * mem_decay + state1
        c1s_n = (c1m_n > thresh).astype(f32)
        # pool1 * decay (eval-mode dropout == identity)
        x2 = jnp.dot(c1s_n, p1_ref[...], preferred_element_type=f32) * decay      # (8, 128)

        # --- conv2 ---
        st2 = conv3x3(x2, w2_ref, s2_ref, b2_ref[...])                            # (16, 128)
        c2m_n = (c2m - thresh * c2s) * mem_decay + st2
        c2s_n = (c2m_n > thresh).astype(f32)
        x3 = jnp.dot(c2s_n, p2_ref[...], preferred_element_type=f32) * decay      # (16, 32)

        # --- conv3 ---
        st3 = conv3x3(x3, w3_ref, s3_ref, b3_ref[...])                            # (16, 32)
        c3m_n = (c3m - thresh * c3s) * mem_decay + st3
        c3s_n = (c3m_n > thresh).astype(f32)

        # --- avg-pool + torch-NCHW flatten -> feature-major flat (fc_dim, N) ---
        flat = jnp.zeros((fc_dim, n), f32)
        for s in range(4):
            g = jnp.dot(c3s_n, sel3_ref[s], preferred_element_type=f32)           # (16, 2)
            flat = flat + jnp.dot(scat3_ref[s], g, preferred_element_type=f32)    # (64, 2)
        xf = flat * decay

        # --- fc1 (plastic: Hebbian trace) ---
        st_h1 = (jnp.dot(wfc1_ref[...], xf, preferred_element_type=f32)
                 + bfc1_ref[...]
                 + alpha * jnp.dot(hebb, xf, preferred_element_type=f32))          # (32, 2)
        h1m_n = (h1m - thresh * h1s) * mem_decay + st_h1
        h1s_n = (h1m_n > thresh).astype(f32)
        pre = xf * beta1_ref[...]                                                  # (64, 2)
        post = h1m_n * inv_thresh - eta1_ref[...]                                  # (32, 2)
        outer = lax.dot_general(post, pre, (((1,), (1,)), ((), ())),
                                preferred_element_type=f32)                        # (32, 64)
        hebb_n = jnp.clip(w_decay * hebb - outer * inv_b, -2.0, 2.0)

        # --- fc2 (non-plastic) ---
        st_h2 = (jnp.dot(wfc2_ref[...], h1s_n * decay, preferred_element_type=f32)
                 + bfc2_ref[...])                                                  # (10, 2)
        h2m_n = (h2m - thresh * h2s) * mem_decay + st_h2
        h2s_n = (h2m_n > thresh).astype(f32)
        h2sum_n = h2sum + h2s_n

        # freeze all state once the (device-side) rank-coding break has fired
        sel = lambda new, old: jnp.where(live, new, old)
        c1m, c1s = sel(c1m_n, c1m), sel(c1s_n, c1s)
        c2m, c2s = sel(c2m_n, c2m), sel(c2s_n, c2s)
        c3m, c3s = sel(c3m_n, c3m), sel(c3s_n, c3s)
        h1m, h1s = sel(h1m_n, h1m), sel(h1s_n, h1s)
        h2m, h2s = sel(h2m_n, h2m), sel(h2s_n, h2s)
        h2sum = sel(h2sum_n, h2sum)
        hebb = sel(hebb_n, hebb)
        last_step = jnp.where(live, step, last_step).astype(jnp.int32)

        if rank:
            spiked = (h2m > thresh).astype(f32)                                    # (10, 2)
            buf = jnp.sum(jnp.max(spiked, axis=0, keepdims=True)) * inv_b
            brk = jnp.logical_and(buf > 0.8, step >= 1)
            done = jnp.where(jnp.logical_and(live, brk), 1, done).astype(jnp.int32)

        return (c1m, c1s, c2m, c2s, c3m, c3s, h1m, h1s, h2m, h2s, h2sum,
                hebb, done, last_step)

    carry0 = (jnp.zeros((c1, r1), f32), jnp.zeros((c1, r1), f32),
              jnp.zeros((c2, r2), f32), jnp.zeros((c2, r2), f32),
              jnp.zeros((c3, r3), f32), jnp.zeros((c3, r3), f32),
              jnp.zeros((h1n, n), f32), jnp.zeros((h1n, n), f32),
              jnp.zeros((h2n, n), f32), jnp.zeros((h2n, n), f32),
              jnp.zeros((h2n, n), f32),
              hebb_ref[...],
              jnp.zeros((), jnp.int32), jnp.zeros((), jnp.int32))

    final = lax.fori_loop(0, wins, body, carry0)

    h2mem_out_ref[...] = final[8]
    h2sum_out_ref[...] = final[10]
    hebb_out_ref[...] = final[11]
    step_out_ref[0] = final[13]


_VMEM = pl.BlockSpec(memory_space=pltpu.MemorySpace.VMEM)
_SMEM = pl.BlockSpec(memory_space=pltpu.MemorySpace.SMEM)


# ----------------------------- jitted wrapper ---------------------------------------------
@functools.partial(jax.jit, static_argnames=("wins", "coding"))
def snn_forward(params, ops, x_nchw, hebb1, hebb2, wins=time_window, coding="rank"):
    n = batch_size
    d0 = cnn_dim[0]

    # loop-invariant conv1 im2col (9, N*H*W): built once, outside the time loop
    x = x_nchw.astype(jnp.float32)[:, 0, :, :]                     # cin == 1
    xp = jnp.pad(x, ((0, 0), (1, 1), (1, 1)))
    taps = [xp[:, i:i + d0, j:j + d0] for i in range(3) for j in range(3)]
    cols1t = jnp.stack(taps, axis=0).reshape(9, n * d0 * d0)

    decay_tab = jnp.asarray(np.exp(-np.arange(wins) / tau_w), jnp.float32)
    hebb1t = hebb1.T                                               # carried feature-major

    kernel = functools.partial(_snn_fused_kernel, wins=wins, rank=(coding == "rank"))
    out_shapes = (
        jax.ShapeDtypeStruct((cfg_fc[1], n), jnp.float32),         # h2_mem^T
        jax.ShapeDtypeStruct((cfg_fc[1], n), jnp.float32),         # h2_sumspike^T
        jax.ShapeDtypeStruct((cfg_fc[0], fc_dim), jnp.float32),    # hebb1^T
        jax.ShapeDtypeStruct((1,), jnp.int32),                     # last step taken
    )

    h2mem_t, h2sum_t, hebb1t_new, step_arr = pl.pallas_call(
        kernel,
        out_shape=out_shapes,
        in_specs=[_SMEM, _SMEM] + [_VMEM] * 20,
        out_specs=(_VMEM, _VMEM, _VMEM, _SMEM),
    )(decay_tab, params["alpha1"],
      cols1t, params["w1t"], params["b1c"], ops["p1t"],
      params["w2t"], params["b2c"], ops["s2t"], ops["p2t"],
      params["w3t"], params["b3c"], ops["s3t"],
      ops["sel3t"], ops["scat3t"],
      params["wfc1t"], params["bfc1c"], params["beta1c"], params["eta1c"],
      params["wfc2t"], params["bfc2c"], hebb1t)

    h2_mem = h2mem_t.T
    h2_sumspike = h2sum_t.T
    hebb1_new = hebb1t_new.T
    if coding == "rank":
        outs = h2_mem / thresh
    else:
        outs = h2_sumspike / wins
    return outs, jnp.mean(h2_sumspike), hebb1_new, hebb2, step_arr[0]


# ----------------------------- parameter init (torch-style uniform) -----------------------
def init_params(key):
    keys = jax.random.split(key, 10)

    def u(k, shape, fan_in):
        bound = 1.0 / np.sqrt(fan_in)
        return jax.random.uniform(k, shape, jnp.float32, -bound, bound)

    p = {}
    # conv1 (cin == 1): weight kept as (cout, 9)
    cin, cout, _, _, ksz = cfg_cnn[0]
    w = u(keys[0], (cout, cin, ksz, ksz), cin * ksz * ksz)
    b = u(keys[1], (cout,), cin * ksz * ksz)
    p["w1t"] = w.reshape(cout, cin * ksz * ksz)
    p["b1c"] = b.reshape(cout, 1)
    # conv2 / conv3: per-tap weights (9, cout, cin) so the kernel indexes w_ref[t]
    for li, (wk, bk) in zip((1, 2), ((keys[2], keys[3]), (keys[4], keys[5]))):
        cin, cout, _, _, ksz = cfg_cnn[li]
        w = u(wk, (cout, cin, ksz, ksz), cin * ksz * ksz)
        b = u(bk, (cout,), cin * ksz * ksz)
        p[f"w{li + 1}t"] = jnp.transpose(w, (2, 3, 0, 1)).reshape(ksz * ksz, cout, cin)
        p[f"b{li + 1}c"] = b.reshape(cout, 1)
    # fc layers: torch Linear weights (out, in) are already the feature-major form
    p["wfc1t"] = u(keys[6], (cfg_fc[0], fc_dim), fc_dim)
    p["bfc1c"] = u(keys[7], (cfg_fc[0],), fc_dim).reshape(cfg_fc[0], 1)
    p["wfc2t"] = u(keys[8], (cfg_fc[1], cfg_fc[0]), cfg_fc[0])
    p["bfc2c"] = u(keys[9], (cfg_fc[1],), cfg_fc[0]).reshape(cfg_fc[1], 1)
    # plastic-layer params (alpha2/beta2/eta2/gamma1/gamma2 exist in torch but unused in forward)
    p["alpha1"] = jnp.full((1,), 0.1, jnp.float32)
    p["beta1c"] = jnp.full((fc_dim, 1), 0.001, jnp.float32)
    p["eta1c"] = jnp.zeros((cfg_fc[0], 1), jnp.float32)
    return p


if __name__ == "__main__":
    key = jax.random.PRNGKey(0)
    key, k_params, k_in = jax.random.split(key, 3)
    params = init_params(k_params)
    ops = build_static_ops()

    x = jax.random.uniform(k_in, (batch_size, 1, cnn_dim[0], cnn_dim[0]), jnp.float32)
    hebb1 = jnp.zeros((fc_dim, cfg_fc[0]), jnp.float32)
    hebb2 = jnp.zeros((cfg_fc[0], cfg_fc[1]), jnp.float32)

    outs, sumspike_mean, hebb1_out, hebb2_out, last_step = snn_forward(
        params, ops, x, hebb1, hebb2, wins=time_window, coding="rank")

    jax.block_until_ready((outs, sumspike_mean, hebb1_out, hebb2_out, last_step))
    assert outs.shape == (batch_size, cfg_fc[1])
    assert hebb1_out.shape == (fc_dim, cfg_fc[0])
    assert hebb2_out.shape == (cfg_fc[0], cfg_fc[1])
    print("KERNEL_OK")
</pallas_src>

<mosaic_0001>
module attributes {stable_mosaic.version = 11 : i64} {
  func.func @_snn_fused_kernel(%arg0: memref<10xf32, #tpu.memory_space<smem>>, %arg1: memref<1xf32, #tpu.memory_space<smem>>, %arg2: memref<9x512xf32, #tpu.memory_space<vmem>>, %arg3: memref<8x9xf32, #tpu.memory_space<vmem>>, %arg4: memref<8x1xf32, #tpu.memory_space<vmem>>, %arg5: memref<512x128xf32, #tpu.memory_space<vmem>>, %arg6: memref<9x16x8xf32, #tpu.memory_space<vmem>>, %arg7: memref<16x1xf32, #tpu.memory_space<vmem>>, %arg8: memref<9x128x128xf32, #tpu.memory_space<vmem>>, %arg9: memref<128x32xf32, #tpu.memory_space<vmem>>, %arg10: memref<9x16x16xf32, #tpu.memory_space<vmem>>, %arg11: memref<16x1xf32, #tpu.memory_space<vmem>>, %arg12: memref<9x32x32xf32, #tpu.memory_space<vmem>>, %arg13: memref<4x32x2xf32, #tpu.memory_space<vmem>>, %arg14: memref<4x64x16xf32, #tpu.memory_space<vmem>>, %arg15: memref<32x64xf32, #tpu.memory_space<vmem>>, %arg16: memref<32x1xf32, #tpu.memory_space<vmem>>, %arg17: memref<64x1xf32, #tpu.memory_space<vmem>>, %arg18: memref<32x1xf32, #tpu.memory_space<vmem>>, %arg19: memref<10x32xf32, #tpu.memory_space<vmem>>, %arg20: memref<10x1xf32, #tpu.memory_space<vmem>>, %arg21: memref<32x64xf32, #tpu.memory_space<vmem>>, %arg22: memref<10x2xf32, #tpu.memory_space<vmem>>, %arg23: memref<10x2xf32, #tpu.memory_space<vmem>>, %arg24: memref<32x64xf32, #tpu.memory_space<vmem>>, %arg25: memref<1xi32, #tpu.memory_space<smem>>) attributes {dimension_semantics = [], scalar_prefetch = 0 : i64, scratch_operands = 0 : i64, tpu.core_type = #tpu.core_type<tc>} {
    %c0 = arith.constant 0 : index
    %0 = memref.load %arg1[%c0] : memref<1xf32, #tpu.memory_space<smem>>
    %c0_0 = arith.constant 0 : index
    %c0_1 = arith.constant 0 : index
    %1 = vector.load %arg3[%c0_0, %c0_1] : memref<8x9xf32, #tpu.memory_space<vmem>>, vector<8x9xf32>
    %c0_2 = arith.constant 0 : index
    %c0_3 = arith.constant 0 : index
    %2 = vector.load %arg2[%c0_2, %c0_3] : memref<9x512xf32, #tpu.memory_space<vmem>>, vector<9x512xf32>
    %cst = arith.constant dense<0.000000e+00> : vector<8x512xf32>
    %3 = tpu.matmul %1, %2, %cst {dimension_numbers = #tpu.dot_dimension_numbers<[1], [0], [0], [1], [0, 0, 1, 1], [], []>} : vector<8x9xf32>, vector<9x512xf32>, vector<8x512xf32> -> vector<8x512xf32>
    %c0_4 = arith.constant 0 : index
    %c0_5 = arith.constant 0 : index
    %4 = vector.load %arg4[%c0_4, %c0_5] : memref<8x1xf32, #tpu.memory_space<vmem>>, vector<8x1xf32>
    %5 = vector.broadcast %4 : vector<8x1xf32> to vector<8x512xf32>
    %6 = arith.addf %3, %5 : vector<8x512xf32>
    %cst_6 = arith.constant 0.000000e+00 : f32
    %7 = vector.broadcast %cst_6 : f32 to vector<8x512xf32>
    %cst_7 = arith.constant 0.000000e+00 : f32
    %8 = vector.broadcast %cst_7 : f32 to vector<8x512xf32>
    %cst_8 = arith.constant 0.000000e+00 : f32
    %9 = vector.broadcast %cst_8 : f32 to vector<16x128xf32>
    %cst_9 = arith.constant 0.000000e+00 : f32
    %10 = vector.broadcast %cst_9 : f32 to vector<16x128xf32>
    %cst_10 = arith.constant 0.000000e+00 : f32
    %11 = vector.broadcast %cst_10 : f32 to vector<16x32xf32>
    %cst_11 = arith.constant 0.000000e+00 : f32
    %12 = vector.broadcast %cst_11 : f32 to vector<16x32xf32>
    %cst_12 = arith.constant 0.000000e+00 : f32
    %13 = vector.broadcast %cst_12 : f32 to vector<32x2xf32>
    %cst_13 = arith.constant 0.000000e+00 : f32
    %14 = vector.broadcast %cst_13 : f32 to vector<32x2xf32>
    %cst_14 = arith.constant 0.000000e+00 : f32
    %15 = vector.broadcast %cst_14 : f32 to vector<10x2xf32>
    %cst_15 = arith.constant 0.000000e+00 : f32
    %16 = vector.broadcast %cst_15 : f32 to vector<10x2xf32>
    %cst_16 = arith.constant 0.000000e+00 : f32
    %17 = vector.broadcast %cst_16 : f32 to vector<10x2xf32>
    %c0_17 = arith.constant 0 : index
    %c0_18 = arith.constant 0 : index
    %18 = vector.load %arg21[%c0_17, %c0_18] : memref<32x64xf32, #tpu.memory_space<vmem>>, vector<32x64xf32>
    %c0_i32 = arith.constant 0 : i32
    %c0_i32_19 = arith.constant 0 : i32
    %c0_i32_20 = arith.constant 0 : i32
    %c10_i32 = arith.constant 10 : i32
    %19 = arith.addi %c0_i32_20, %c10_i32 : i32
    %c1_i32 = arith.constant 1 : i32
    %20:14 = scf.for %arg26 = %c0_i32_20 to %19 step %c1_i32 iter_args(%arg27 = %7, %arg28 = %8, %arg29 = %9, %arg30 = %10, %arg31 = %11, %arg32 = %12, %arg33 = %13, %arg34 = %14, %arg35 = %15, %arg36 = %16, %arg37 = %17, %arg38 = %18, %arg39 = %c0_i32, %arg40 = %c0_i32_19) -> (vector<8x512xf32>, vector<8x512xf32>, vector<16x128xf32>, vector<16x128xf32>, vector<16x32xf32>, vector<16x32xf32>, vector<32x2xf32>, vector<32x2xf32>, vector<10x2xf32>, vector<10x2xf32>, vector<10x2xf32>, vector<32x64xf32>, i32, i32)  : i32 {
      %c0_i32_29 = arith.constant 0 : i32
      %25 = arith.cmpi eq, %arg39, %c0_i32_29 : i32
      %26 = arith.index_cast %arg26 : i32 to index
      %27 = memref.load %arg0[%26] : memref<10xf32, #tpu.memory_space<smem>>
      %cst_30 = arith.constant 3.000000e-01 : f32
      %28 = vector.broadcast %cst_30 : f32 to vector<8x512xf32>
      %29 = arith.mulf %28, %arg28 : vector<8x512xf32>
      %30 = arith.subf %arg27, %29 : vector<8x512xf32>
      %cst_31 = arith.constant 6.000000e-01 : f32
      %31 = vector.broadcast %cst_31 : f32 to vector<8x512xf32>
      %32 = arith.mulf %30, %31 : vector<8x512xf32>
      %33 = arith.addf %32, %6 : vector<8x512xf32>
      %cst_32 = arith.constant 3.000000e-01 : f32
      %34 = vector.broadcast %cst_32 : f32 to vector<8x512xf32>
      %35 = arith.cmpf ogt, %33, %34 : vector<8x512xf32>
      %36 = arith.extui %35 : vector<8x512xi1> to vector<8x512xi32>
      %37 = arith.sitofp %36 : vector<8x512xi32> to vector<8x512xf32>
      %c0_33 = arith.constant 0 : index
      %c0_34 = arith.constant 0 : index
      %38 = vector.load %arg5[%c0_33, %c0_34] : memref<512x128xf32, #tpu.memory_space<vmem>>, vector<512x128xf32>
      %cst_35 = arith.constant dense<0.000000e+00> : vector<8x128xf32>
      %39 = tpu.matmul %37, %38, %cst_35 {dimension_numbers = #tpu.dot_dimension_numbers<[1], [0], [0], [1], [0, 0, 1, 1], [], []>} : vector<8x512xf32>, vector<512x128xf32>, vector<8x128xf32> -> vector<8x128xf32>
      %40 = vector.broadcast %27 : f32 to vector<8x128xf32>
      %41 = arith.mulf %39, %40 : vector<8x128xf32>
      %c0_36 = arith.constant 0 : index
      %c0_37 = arith.constant 0 : index
      %42 = vector.load %arg7[%c0_36, %c0_37] : memref<16x1xf32, #tpu.memory_space<vmem>>, vector<16x1xf32>
      %c0_38 = arith.constant 0 : index
      %c0_39 = arith.constant 0 : index
      %c0_40 = arith.constant 0 : index
      %43 = vector.load %arg6[%c0_38, %c0_39, %c0_40] : memref<9x16x8xf32, #tpu.memory_space<vmem>>, vector<1x16x8xf32>
      %44 = vector.shape_cast %43 : vector<1x16x8xf32> to vector<16x8xf32>
      %cst_41 = arith.constant dense<0.000000e+00> : vector<16x128xf32>
      %45 = tpu.matmul %44, %41, %cst_41 {dimension_numbers = #tpu.dot_dimension_numbers<[1], [0], [0], [1], [0, 0, 1, 1], [], []>} : vector<16x8xf32>, vector<8x128xf32>, vector<16x128xf32> -> vector<16x128xf32>
      %c0_42 = arith.constant 0 : index
      %c0_43 = arith.constant 0 : index
      %c0_44 = arith.constant 0 : index
      %46 = vector.load %arg8[%c0_42, %c0_43, %c0_44] : memref<9x128x128xf32, #tpu.memory_space<vmem>>, vector<1x128x128xf32>
      %47 = vector.shape_cast %46 : vector<1x128x128xf32> to vector<128x128xf32>
      %cst_45 = arith.constant dense<0.000000e+00> : vector<16x128xf32>
      %48 = tpu.matmul %45, %47, %cst_45 {dimension_numbers = #tpu.dot_dimension_numbers<[1], [0], [0], [1], [0, 0, 1, 1], [], []>} : vector<16x128xf32>, vector<128x128xf32>, vector<16x128xf32> -> vector<16x128xf32>
      %49 = vector.broadcast %42 : vector<16x1xf32> to vector<16x128xf32>
      %50 = arith.addf %49, %48 : vector<16x128xf32>
      %c1 = arith.constant 1 : index
      %c0_46 = arith.constant 0 : index
      %c0_47 = arith.constant 0 : index
      %51 = vector.load %arg6[%c1, %c0_46, %c0_47] : memref<9x16x8xf32, #tpu.memory_space<vmem>>, vector<1x16x8xf32>
      %52 = vector.shape_cast %51 : vector<1x16x8xf32> to vector<16x8xf32>
      %cst_48 = arith.constant dense<0.000000e+00> : vector<16x128xf32>
      %53 = tpu.matmul %52, %41, %cst_48 {dimension_numbers = #tpu.dot_dimension_numbers<[1], [0], [0], [1], [0, 0, 1, 1], [], []>} : vector<16x8xf32>, vector<8x128xf32>, vector<16x128xf32> -> vector<16x128xf32>
      %c1_49 = arith.constant 1 : index
      %c0_50 = arith.constant 0 : index
      %c0_51 = arith.constant 0 : index
      %54 = vector.load %arg8[%c1_49, %c0_50, %c0_51] : memref<9x128x128xf32, #tpu.memory_space<vmem>>, vector<1x128x128xf32>
      %55 = vector.shape_cast %54 : vector<1x128x128xf32> to vector<128x128xf32>
      %cst_52 = arith.constant dense<0.000000e+00> : vector<16x128xf32>
      %56 = tpu.matmul %53, %55, %cst_52 {dimension_numbers = #tpu.dot_dimension_numbers<[1], [0], [0], [1], [0, 0, 1, 1], [], []>} : vector<16x128xf32>, vector<128x128xf32>, vector<16x128xf32> -> vector<16x128xf32>
      %57 = arith.addf %50, %56 : vector<16x128xf32>
      %c2 = arith.constant 2 : index
      %c0_53 = arith.constant 0 : index
      %c0_54 = arith.constant 0 : index
      %58 = vector.load %arg6[%c2, %c0_53, %c0_54] : memref<9x16x8xf32, #tpu.memory_space<vmem>>, vector<1x16x8xf32>
      %59 = vector.shape_cast %58 : vector<1x16x8xf32> to vector<16x8xf32>
      %cst_55 = arith.constant dense<0.000000e+00> : vector<16x128xf32>
      %60 = tpu.matmul %59, %41, %cst_55 {dimension_numbers = #tpu.dot_dimension_numbers<[1], [0], [0], [1], [0, 0, 1, 1], [], []>} : vector<16x8xf32>, vector<8x128xf32>, vector<16x128xf32> -> vector<16x128xf32>
      %c2_56 = arith.constant 2 : index
      %c0_57 = arith.constant 0 : index
      %c0_58 = arith.constant 0 : index
      %61 = vector.load %arg8[%c2_56, %c0_57, %c0_58] : memref<9x128x128xf32, #tpu.memory_space<vmem>>, vector<1x128x128xf32>
      %62 = vector.shape_cast %61 : vector<1x128x128xf32> to vector<128x128xf32>
      %cst_59 = arith.constant dense<0.000000e+00> : vector<16x128xf32>
      %63 = tpu.matmul %60, %62, %cst_59 {dimension_numbers = #tpu.dot_dimension_numbers<[1], [0], [0], [1], [0, 0, 1, 1], [], []>} : vector<16x128xf32>, vector<128x128xf32>, vector<16x128xf32> -> vector<16x128xf32>
      %64 = arith.addf %57, %63 : vector<16x128xf32>
      %c3 = arith.constant 3 : index
      %c0_60 = arith.constant 0 : index
      %c0_61 = arith.constant 0 : index
      %65 = vector.load %arg6[%c3, %c0_60, %c0_61] : memref<9x16x8xf32, #tpu.memory_space<vmem>>, vector<1x16x8xf32>
      %66 = vector.shape_cast %65 : vector<1x16x8xf32> to vector<16x8xf32>
      %cst_62 = arith.constant dense<0.000000e+00> : vector<16x128xf32>
      %67 = tpu.matmul %66, %41, %cst_62 {dimension_numbers = #tpu.dot_dimension_numbers<[1], [0], [0], [1], [0, 0, 1, 1], [], []>} : vector<16x8xf32>, vector<8x128xf32>, vector<16x128xf32> -> vector<16x128xf32>
      %c3_63 = arith.constant 3 : index
      %c0_64 = arith.constant 0 : index
      %c0_65 = arith.constant 0 : index
      %68 = vector.load %arg8[%c3_63, %c0_64, %c0_65] : memref<9x128x128xf32, #tpu.memory_space<vmem>>, vector<1x128x128xf32>
      %69 = vector.shape_cast %68 : vector<1x128x128xf32> to vector<128x128xf32>
      %cst_66 = arith.constant dense<0.000000e+00> : vector<16x128xf32>
      %70 = tpu.matmul %67, %69, %cst_66 {dimension_numbers = #tpu.dot_dimension_numbers<[1], [0], [0], [1], [0, 0, 1, 1], [], []>} : vector<16x128xf32>, vector<128x128xf32>, vector<16x128xf32> -> vector<16x128xf32>
      %71 = arith.addf %64, %70 : vector<16x128xf32>
      %c4 = arith.constant 4 : index
      %c0_67 = arith.constant 0 : index
      %c0_68 = arith.constant 0 : index
      %72 = vector.load %arg6[%c4, %c0_67, %c0_68] : memref<9x16x8xf32, #tpu.memory_space<vmem>>, vector<1x16x8xf32>
      %73 = vector.shape_cast %72 : vector<1x16x8xf32> to vector<16x8xf32>
      %cst_69 = arith.constant dense<0.000000e+00> : vector<16x128xf32>
      %74 = tpu.matmul %73, %41, %cst_69 {dimension_numbers = #tpu.dot_dimension_numbers<[1], [0], [0], [1], [0, 0, 1, 1], [], []>} : vector<16x8xf32>, vector<8x128xf32>, vector<16x128xf32> -> vector<16x128xf32>
      %c4_70 = arith.constant 4 : index
      %c0_71 = arith.constant 0 : index
      %c0_72 = arith.constant 0 : index
      %75 = vector.load %arg8[%c4_70, %c0_71, %c0_72] : memref<9x128x128xf32, #tpu.memory_space<vmem>>, vector<1x128x128xf32>
      %76 = vector.shape_cast %75 : vector<1x128x128xf32> to vector<128x128xf32>
      %cst_73 = arith.constant dense<0.000000e+00> : vector<16x128xf32>
      %77 = tpu.matmul %74, %76, %cst_73 {dimension_numbers = #tpu.dot_dimension_numbers<[1], [0], [0], [1], [0, 0, 1, 1], [], []>} : vector<16x128xf32>, vector<128x128xf32>, vector<16x128xf32> -> vector<16x128xf32>
      %78 = arith.addf %71, %77 : vector<16x128xf32>
      %c5 = arith.constant 5 : index
      %c0_74 = arith.constant 0 : index
      %c0_75 = arith.constant 0 : index
      %79 = vector.load %arg6[%c5, %c0_74, %c0_75] : memref<9x16x8xf32, #tpu.memory_space<vmem>>, vector<1x16x8xf32>
      %80 = vector.shape_cast %79 : vector<1x16x8xf32> to vector<16x8xf32>
      %cst_76 = arith.constant dense<0.000000e+00> : vector<16x128xf32>
      %81 = tpu.matmul %80, %41, %cst_76 {dimension_numbers = #tpu.dot_dimension_numbers<[1], [0], [0], [1], [0, 0, 1, 1], [], []>} : vector<16x8xf32>, vector<8x128xf32>, vector<16x128xf32> -> vector<16x128xf32>
      %c5_77 = arith.constant 5 : index
      %c0_78 = arith.constant 0 : index
      %c0_79 = arith.constant 0 : index
      %82 = vector.load %arg8[%c5_77, %c0_78, %c0_79] : memref<9x128x128xf32, #tpu.memory_space<vmem>>, vector<1x128x128xf32>
      %83 = vector.shape_cast %82 : vector<1x128x128xf32> to vector<128x128xf32>
      %cst_80 = arith.constant dense<0.000000e+00> : vector<16x128xf32>
      %84 = tpu.matmul %81, %83, %cst_80 {dimension_numbers = #tpu.dot_dimension_numbers<[1], [0], [0], [1], [0, 0, 1, 1], [], []>} : vector<16x128xf32>, vector<128x128xf32>, vector<16x128xf32> -> vector<16x128xf32>
      %85 = arith.addf %78, %84 : vector<16x128xf32>
      %c6 = arith.constant 6 : index
      %c0_81 = arith.constant 0 : index
      %c0_82 = arith.constant 0 : index
      %86 = vector.load %arg6[%c6, %c0_81, %c0_82] : memref<9x16x8xf32, #tpu.memory_space<vmem>>, vector<1x16x8xf32>
      %87 = vector.shape_cast %86 : vector<1x16x8xf32> to vector<16x8xf32>
      %cst_83 = arith.constant dense<0.000000e+00> : vector<16x128xf32>
      %88 = tpu.matmul %87, %41, %cst_83 {dimension_numbers = #tpu.dot_dimension_numbers<[1], [0], [0], [1], [0, 0, 1, 1], [], []>} : vector<16x8xf32>, vector<8x128xf32>, vector<16x128xf32> -> vector<16x128xf32>
      %c6_84 = arith.constant 6 : index
      %c0_85 = arith.constant 0 : index
      %c0_86 = arith.constant 0 : index
      %89 = vector.load %arg8[%c6_84, %c0_85, %c0_86] : memref<9x128x128xf32, #tpu.memory_space<vmem>>, vector<1x128x128xf32>
      %90 = vector.shape_cast %89 : vector<1x128x128xf32> to vector<128x128xf32>
      %cst_87 = arith.constant dense<0.000000e+00> : vector<16x128xf32>
      %91 = tpu.matmul %88, %90, %cst_87 {dimension_numbers = #tpu.dot_dimension_numbers<[1], [0], [0], [1], [0, 0, 1, 1], [], []>} : vector<16x128xf32>, vector<128x128xf32>, vector<16x128xf32> -> vector<16x128xf32>
      %92 = arith.addf %85, %91 : vector<16x128xf32>
      %c7 = arith.constant 7 : index
      %c0_88 = arith.constant 0 : index
      %c0_89 = arith.constant 0 : index
      %93 = vector.load %arg6[%c7, %c0_88, %c0_89] : memref<9x16x8xf32, #tpu.memory_space<vmem>>, vector<1x16x8xf32>
      %94 = vector.shape_cast %93 : vector<1x16x8xf32> to vector<16x8xf32>
      %cst_90 = arith.constant dense<0.000000e+00> : vector<16x128xf32>
      %95 = tpu.matmul %94, %41, %cst_90 {dimension_numbers = #tpu.dot_dimension_numbers<[1], [0], [0], [1], [0, 0, 1, 1], [], []>} : vector<16x8xf32>, vector<8x128xf32>, vector<16x128xf32> -> vector<16x128xf32>
      %c7_91 = arith.constant 7 : index
      %c0_92 = arith.constant 0 : index
      %c0_93 = arith.constant 0 : index
      %96 = vector.load %arg8[%c7_91, %c0_92, %c0_93] : memref<9x128x128xf32, #tpu.memory_space<vmem>>, vector<1x128x128xf32>
      %97 = vector.shape_cast %96 : vector<1x128x128xf32> to vector<128x128xf32>
      %cst_94 = arith.constant dense<0.000000e+00> : vector<16x128xf32>
      %98 = tpu.matmul %95, %97, %cst_94 {dimension_numbers = #tpu.dot_dimension_numbers<[1], [0], [0], [1], [0, 0, 1, 1], [], []>} : vector<16x128xf32>, vector<128x128xf32>, vector<16x128xf32> -> vector<16x128xf32>
      %99 = arith.addf %92, %98 : vector<16x128xf32>
      %c8 = arith.constant 8 : index
      %c0_95 = arith.constant 0 : index
      %c0_96 = arith.constant 0 : index
      %100 = vector.load %arg6[%c8, %c0_95, %c0_96] : memref<9x16x8xf32, #tpu.memory_space<vmem>>, vector<1x16x8xf32>
      %101 = vector.shape_cast %100 : vector<1x16x8xf32> to vector<16x8xf32>
      %cst_97 = arith.constant dense<0.000000e+00> : vector<16x128xf32>
      %102 = tpu.matmul %101, %41, %cst_97 {dimension_numbers = #tpu.dot_dimension_numbers<[1], [0], [0], [1], [0, 0, 1, 1], [], []>} : vector<16x8xf32>, vector<8x128xf32>, vector<16x128xf32> -> vector<16x128xf32>
      %c8_98 = arith.constant 8 : index
      %c0_99 = arith.constant 0 : index
      %c0_100 = arith.constant 0 : index
      %103 = vector.load %arg8[%c8_98, %c0_99, %c0_100] : memref<9x128x128xf32, #tpu.memory_space<vmem>>, vector<1x128x128xf32>
      %104 = vector.shape_cast %103 : vector<1x128x128xf32> to vector<128x128xf32>
      %cst_101 = arith.constant dense<0.000000e+00> : vector<16x128xf32>
      %105 = tpu.matmul %102, %104, %cst_101 {dimension_numbers = #tpu.dot_dimension_numbers<[1], [0], [0], [1], [0, 0, 1, 1], [], []>} : vector<16x128xf32>, vector<128x128xf32>, vector<16x128xf32> -> vector<16x128xf32>
      %106 = arith.addf %99, %105 : vector<16x128xf32>
      %cst_102 = arith.constant 3.000000e-01 : f32
      %107 = vector.broadcast %cst_102 : f32 to vector<16x128xf32>
      %108 = arith.mulf %107, %arg30 : vector<16x128xf32>
      %109 = arith.subf %arg29, %108 : vector<16x128xf32>
      %cst_103 = arith.constant 6.000000e-01 : f32
      %110 = vector.broadcast %cst_103 : f32 to vector<16x128xf32>
      %111 = arith.mulf %109, %110 : vector<16x128xf32>
      %112 = arith.addf %111, %106 : vector<16x128xf32>
      %cst_104 = arith.constant 3.000000e-01 : f32
      %113 = vector.broadcast %cst_104 : f32 to vector<16x128xf32>
      %114 = arith.cmpf ogt, %112, %113 : vector<16x128xf32>
      %115 = arith.extui %114 : vector<16x128xi1> to vector<16x128xi32>
      %116 = arith.sitofp %115 : vector<16x128xi32> to vector<16x128xf32>
      %c0_105 = arith.constant 0 : index
      %c0_106 = arith.constant 0 : index
      %117 = vector.load %arg9[%c0_105, %c0_106] : memref<128x32xf32, #tpu.memory_space<vmem>>, vector<128x32xf32>
      %cst_107 = arith.constant dense<0.000000e+00> : vector<16x32xf32>
      %118 = tpu.matmul %116, %117, %cst_107 {dimension_numbers = #tpu.dot_dimension_numbers<[1], [0], [0], [1], [0, 0, 1, 1], [], []>} : vector<16x128xf32>, vector<128x32xf32>, vector<16x32xf32> -> vector<16x32xf32>
      %119 = vector.broadcast %27 : f32 to vector<16x32xf32>
      %120 = arith.mulf %118, %119 : vector<16x32xf32>
      %c0_108 = arith.constant 0 : index
      %c0_109 = arith.constant 0 : index
      %121 = vector.load %arg11[%c0_108, %c0_109] : memref<16x1xf32, #tpu.memory_space<vmem>>, vector<16x1xf32>
      %c0_110 = arith.constant 0 : index
      %c0_111 = arith.constant 0 : index
      %c0_112 = arith.constant 0 : index
      %122 = vector.load %arg10[%c0_110, %c0_111, %c0_112] : memref<9x16x16xf32, #tpu.memory_space<vmem>>, vector<1x16x16xf32>
      %123 = vector.shape_cast %122 : vector<1x16x16xf32> to vector<16x16xf32>
      %cst_113 = arith.constant dense<0.000000e+00> : vector<16x32xf32>
      %124 = tpu.matmul %123, %120, %cst_113 {dimension_numbers = #tpu.dot_dimension_numbers<[1], [0], [0], [1], [0, 0, 1, 1], [], []>} : vector<16x16xf32>, vector<16x32xf32>, vector<16x32xf32> -> vector<16x32xf32>
      %c0_114 = arith.constant 0 : index
      %c0_115 = arith.constant 0 : index
      %c0_116 = arith.constant 0 : index
      %125 = vector.load %arg12[%c0_114, %c0_115, %c0_116] : memref<9x32x32xf32, #tpu.memory_space<vmem>>, vector<1x32x32xf32>
      %126 = vector.shape_cast %125 : vector<1x32x32xf32> to vector<32x32xf32>
      %cst_117 = arith.constant dense<0.000000e+00> : vector<16x32xf32>
      %127 = tpu.matmul %124, %126, %cst_117 {dimension_numbers = #tpu.dot_dimension_numbers<[1], [0], [0], [1], [0, 0, 1, 1], [], []>} : vector<16x32xf32>, vector<32x32xf32>, vector<16x32xf32> -> vector<16x32xf32>
      %128 = vector.broadcast %121 : vector<16x1xf32> to vector<16x32xf32>
      %129 = arith.addf %128, %127 : vector<16x32xf32>
      %c1_118 = arith.constant 1 : index
      %c0_119 = arith.constant 0 : index
      %c0_120 = arith.constant 0 : index
      %130 = vector.load %arg10[%c1_118, %c0_119, %c0_120] : memref<9x16x16xf32, #tpu.memory_space<vmem>>, vector<1x16x16xf32>
      %131 = vector.shape_cast %130 : vector<1x16x16xf32> to vector<16x16xf32>
      %cst_121 = arith.constant dense<0.000000e+00> : vector<16x32xf32>
      %132 = tpu.matmul %131, %120, %cst_121 {dimension_numbers = #tpu.dot_dimension_numbers<[1], [0], [0], [1], [0, 0, 1, 1], [], []>} : vector<16x16xf32>, vector<16x32xf32>, vector<16x32xf32> -> vector<16x32xf32>
      %c1_122 = arith.constant 1 : index
      %c0_123 = arith.constant 0 : index
      %c0_124 = arith.constant 0 : index
      %133 = vector.load %arg12[%c1_122, %c0_123, %c0_124] : memref<9x32x32xf32, #tpu.memory_space<vmem>>, vector<1x32x32xf32>
      %134 = vector.shape_cast %133 : vector<1x32x32xf32> to vector<32x32xf32>
      %cst_125 = arith.constant dense<0.000000e+00> : vector<16x32xf32>
      %135 = tpu.matmul %132, %134, %cst_125 {dimension_numbers = #tpu.dot_dimension_numbers<[1], [0], [0], [1], [0, 0, 1, 1], [], []>} : vector<16x32xf32>, vector<32x32xf32>, vector<16x32xf32> -> vector<16x32xf32>
      %136 = arith.addf %129, %135 : vector<16x32xf32>
      %c2_126 = arith.constant 2 : index
      %c0_127 = arith.constant 0 : index
      %c0_128 = arith.constant 0 : index
      %137 = vector.load %arg10[%c2_126, %c0_127, %c0_128] : memref<9x16x16xf32, #tpu.memory_space<vmem>>, vector<1x16x16xf32>
      %138 = vector.shape_cast %137 : vector<1x16x16xf32> to vector<16x16xf32>
      %cst_129 = arith.constant dense<0.000000e+00> : vector<16x32xf32>
      %139 = tpu.matmul %138, %120, %cst_129 {dimension_numbers = #tpu.dot_dimension_numbers<[1], [0], [0], [1], [0, 0, 1, 1], [], []>} : vector<16x16xf32>, vector<16x32xf32>, vector<16x32xf32> -> vector<16x32xf32>
      %c2_130 = arith.constant 2 : index
      %c0_131 = arith.constant 0 : index
      %c0_132 = arith.constant 0 : index
      %140 = vector.load %arg12[%c2_130, %c0_131, %c0_132] : memref<9x32x32xf32, #tpu.memory_space<vmem>>, vector<1x32x32xf32>
      %141 = vector.shape_cast %140 : vector<1x32x32xf32> to vector<32x32xf32>
      %cst_133 = arith.constant dense<0.000000e+00> : vector<16x32xf32>
      %142 = tpu.matmul %139, %141, %cst_133 {dimension_numbers = #tpu.dot_dimension_numbers<[1], [0], [0], [1], [0, 0, 1, 1], [], []>} : vector<16x32xf32>, vector<32x32xf32>, vector<16x32xf32> -> vector<16x32xf32>
      %143 = arith.addf %136, %142 : vector<16x32xf32>
      %c3_134 = arith.constant 3 : index
      %c0_135 = arith.constant 0 : index
      %c0_136 = arith.constant 0 : index
      %144 = vector.load %arg10[%c3_134, %c0_135, %c0_136] : memref<9x16x16xf32, #tpu.memory_space<vmem>>, vector<1x16x16xf32>
      %145 = vector.shape_cast %144 : vector<1x16x16xf32> to vector<16x16xf32>
      %cst_137 = arith.constant dense<0.000000e+00> : vector<16x32xf32>
      %146 = tpu.matmul %145, %120, %cst_137 {dimension_numbers = #tpu.dot_dimension_numbers<[1], [0], [0], [1], [0, 0, 1, 1], [], []>} : vector<16x16xf32>, vector<16x32xf32>, vector<16x32xf32> -> vector<16x32xf32>
      %c3_138 = arith.constant 3 : index
      %c0_139 = arith.constant 0 : index
      %c0_140 = arith.constant 0 : index
      %147 = vector.load %arg12[%c3_138, %c0_139, %c0_140] : memref<9x32x32xf32, #tpu.memory_space<vmem>>, vector<1x32x32xf32>
      %148 = vector.shape_cast %147 : vector<1x32x32xf32> to vector<32x32xf32>
      %cst_141 = arith.constant dense<0.000000e+00> : vector<16x32xf32>
      %149 = tpu.matmul %146, %148, %cst_141 {dimension_numbers = #tpu.dot_dimension_numbers<[1], [0], [0], [1], [0, 0, 1, 1], [], []>} : vector<16x32xf32>, vector<32x32xf32>, vector<16x32xf32> -> vector<16x32xf32>
      %150 = arith.addf %143, %149 : vector<16x32xf32>
      %c4_142 = arith.constant 4 : index
      %c0_143 = arith.constant 0 : index
      %c0_144 = arith.constant 0 : index
      %151 = vector.load %arg10[%c4_142, %c0_143, %c0_144] : memref<9x16x16xf32, #tpu.memory_space<vmem>>, vector<1x16x16xf32>
      %152 = vector.shape_cast %151 : vector<1x16x16xf32> to vector<16x16xf32>
      %cst_145 = arith.constant dense<0.000000e+00> : vector<16x32xf32>
      %153 = tpu.matmul %152, %120, %cst_145 {dimension_numbers = #tpu.dot_dimension_numbers<[1], [0], [0], [1], [0, 0, 1, 1], [], []>} : vector<16x16xf32>, vector<16x32xf32>, vector<16x32xf32> -> vector<16x32xf32>
      %c4_146 = arith.constant 4 : index
      %c0_147 = arith.constant 0 : index
      %c0_148 = arith.constant 0 : index
      %154 = vector.load %arg12[%c4_146, %c0_147, %c0_148] : memref<9x32x32xf32, #tpu.memory_space<vmem>>, vector<1x32x32xf32>
      %155 = vector.shape_cast %154 : vector<1x32x32xf32> to vector<32x32xf32>
      %cst_149 = arith.constant dense<0.000000e+00> : vector<16x32xf32>
      %156 = tpu.matmul %153, %155, %cst_149 {dimension_numbers = #tpu.dot_dimension_numbers<[1], [0], [0], [1], [0, 0, 1, 1], [], []>} : vector<16x32xf32>, vector<32x32xf32>, vector<16x32xf32> -> vector<16x32xf32>
      %157 = arith.addf %150, %156 : vector<16x32xf32>
      %c5_150 = arith.constant 5 : index
      %c0_151 = arith.constant 0 : index
      %c0_152 = arith.constant 0 : index
      %158 = vector.load %arg10[%c5_150, %c0_151, %c0_152] : memref<9x16x16xf32, #tpu.memory_space<vmem>>, vector<1x16x16xf32>
      %159 = vector.shape_cast %158 : vector<1x16x16xf32> to vector<16x16xf32>
      %cst_153 = arith.constant dense<0.000000e+00> : vector<16x32xf32>
      %160 = tpu.matmul %159, %120, %cst_153 {dimension_numbers = #tpu.dot_dimension_numbers<[1], [0], [0], [1], [0, 0, 1, 1], [], []>} : vector<16x16xf32>, vector<16x32xf32>, vector<16x32xf32> -> vector<16x32xf32>
      %c5_154 = arith.constant 5 : index
      %c0_155 = arith.constant 0 : index
      %c0_156 = arith.constant 0 : index
      %161 = vector.load %arg12[%c5_154, %c0_155, %c0_156] : memref<9x32x32xf32, #tpu.memory_space<vmem>>, vector<1x32x32xf32>
      %162 = vector.shape_cast %161 : vector<1x32x32xf32> to vector<32x32xf32>
      %cst_157 = arith.constant dense<0.000000e+00> : vector<16x32xf32>
      %163 = tpu.matmul %160, %162, %cst_157 {dimension_numbers = #tpu.dot_dimension_numbers<[1], [0], [0], [1], [0, 0, 1, 1], [], []>} : vector<16x32xf32>, vector<32x32xf32>, vector<16x32xf32> -> vector<16x32xf32>
      %164 = arith.addf %157, %163 : vector<16x32xf32>
      %c6_158 = arith.constant 6 : index
      %c0_159 = arith.constant 0 : index
      %c0_160 = arith.constant 0 : index
      %165 = vector.load %arg10[%c6_158, %c0_159, %c0_160] : memref<9x16x16xf32, #tpu.memory_space<vmem>>, vector<1x16x16xf32>
      %166 = vector.shape_cast %165 : vector<1x16x16xf32> to vector<16x16xf32>
      %cst_161 = arith.constant dense<0.000000e+00> : vector<16x32xf32>
      %167 = tpu.matmul %166, %120, %cst_161 {dimension_numbers = #tpu.dot_dimension_numbers<[1], [0], [0], [1], [0, 0, 1, 1], [], []>} : vector<16x16xf32>, vector<16x32xf32>, vector<16x32xf32> -> vector<16x32xf32>
      %c6_162 = arith.constant 6 : index
      %c0_163 = arith.constant 0 : index
      %c0_164 = arith.constant 0 : index
      %168 = vector.load %arg12[%c6_162, %c0_163, %c0_164] : memref<9x32x32xf32, #tpu.memory_space<vmem>>, vector<1x32x32xf32>
      %169 = vector.shape_cast %168 : vector<1x32x32xf32> to vector<32x32xf32>
      %cst_165 = arith.constant dense<0.000000e+00> : vector<16x32xf32>
      %170 = tpu.matmul %167, %169, %cst_165 {dimension_numbers = #tpu.dot_dimension_numbers<[1], [0], [0], [1], [0, 0, 1, 1], [], []>} : vector<16x32xf32>, vector<32x32xf32>, vector<16x32xf32> -> vector<16x32xf32>
      %171 = arith.addf %164, %170 : vector<16x32xf32>
      %c7_166 = arith.constant 7 : index
      %c0_167 = arith.constant 0 : index
      %c0_168 = arith.constant 0 : index
      %172 = vector.load %arg10[%c7_166, %c0_167, %c0_168] : memref<9x16x16xf32, #tpu.memory_space<vmem>>, vector<1x16x16xf32>
      %173 = vector.shape_cast %172 : vector<1x16x16xf32> to vector<16x16xf32>
      %cst_169 = arith.constant dense<0.000000e+00> : vector<16x32xf32>
      %174 = tpu.matmul %173, %120, %cst_169 {dimension_numbers = #tpu.dot_dimension_numbers<[1], [0], [0], [1], [0, 0, 1, 1], [], []>} : vector<16x16xf32>, vector<16x32xf32>, vector<16x32xf32> -> vector<16x32xf32>
      %c7_170 = arith.constant 7 : index
      %c0_171 = arith.constant 0 : index
      %c0_172 = arith.constant 0 : index
      %175 = vector.load %arg12[%c7_170, %c0_171, %c0_172] : memref<9x32x32xf32, #tpu.memory_space<vmem>>, vector<1x32x32xf32>
      %176 = vector.shape_cast %175 : vector<1x32x32xf32> to vector<32x32xf32>
      %cst_173 = arith.constant dense<0.000000e+00> : vector<16x32xf32>
      %177 = tpu.matmul %174, %176, %cst_173 {dimension_numbers = #tpu.dot_dimension_numbers<[1], [0], [0], [1], [0, 0, 1, 1], [], []>} : vector<16x32xf32>, vector<32x32xf32>, vector<16x32xf32> -> vector<16x32xf32>
      %178 = arith.addf %171, %177 : vector<16x32xf32>
      %c8_174 = arith.constant 8 : index
      %c0_175 = arith.constant 0 : index
      %c0_176 = arith.constant 0 : index
      %179 = vector.load %arg10[%c8_174, %c0_175, %c0_176] : memref<9x16x16xf32, #tpu.memory_space<vmem>>, vector<1x16x16xf32>
      %180 = vector.shape_cast %179 : vector<1x16x16xf32> to vector<16x16xf32>
      %cst_177 = arith.constant dense<0.000000e+00> : vector<16x32xf32>
      %181 = tpu.matmul %180, %120, %cst_177 {dimension_numbers = #tpu.dot_dimension_numbers<[1], [0], [0], [1], [0, 0, 1, 1], [], []>} : vector<16x16xf32>, vector<16x32xf32>, vector<16x32xf32> -> vector<16x32xf32>
      %c8_178 = arith.constant 8 : index
      %c0_179 = arith.constant 0 : index
      %c0_180 = arith.constant 0 : index
      %182 = vector.load %arg12[%c8_178, %c0_179, %c0_180] : memref<9x32x32xf32, #tpu.memory_space<vmem>>, vector<1x32x32xf32>
      %183 = vector.shape_cast %182 : vector<1x32x32xf32> to vector<32x32xf32>
      %cst_181 = arith.constant dense<0.000000e+00> : vector<16x32xf32>
      %184 = tpu.matmul %181, %183, %cst_181 {dimension_numbers = #tpu.dot_dimension_numbers<[1], [0], [0], [1], [0, 0, 1, 1], [], []>} : vector<16x32xf32>, vector<32x32xf32>, vector<16x32xf32> -> vector<16x32xf32>
      %185 = arith.addf %178, %184 : vector<16x32xf32>
      %cst_182 = arith.constant 3.000000e-01 : f32
      %186 = vector.broadcast %cst_182 : f32 to vector<16x32xf32>
      %187 = arith.mulf %186, %arg32 : vector<16x32xf32>
      %188 = arith.subf %arg31, %187 : vector<16x32xf32>
      %cst_183 = arith.constant 6.000000e-01 : f32
      %189 = vector.broadcast %cst_183 : f32 to vector<16x32xf32>
      %190 = arith.mulf %188, %189 : vector<16x32xf32>
      %191 = arith.addf %190, %185 : vector<16x32xf32>
      %cst_184 = arith.constant 3.000000e-01 : f32
      %192 = vector.broadcast %cst_184 : f32 to vector<16x32xf32>
      %193 = arith.cmpf ogt, %191, %192 : vector<16x32xf32>
      %194 = arith.extui %193 : vector<16x32xi1> to vector<16x32xi32>
      %195 = arith.sitofp %194 : vector<16x32xi32> to vector<16x32xf32>
      %cst_185 = arith.constant 0.000000e+00 : f32
      %196 = vector.broadcast %cst_185 : f32 to vector<64x2xf32>
      %c0_186 = arith.constant 0 : index
      %c0_187 = arith.constant 0 : index
      %c0_188 = arith.constant 0 : index
      %197 = vector.load %arg13[%c0_186, %c0_187, %c0_188] : memref<4x32x2xf32, #tpu.memory_space<vmem>>, vector<1x32x2xf32>
      %198 = vector.shape_cast %197 : vector<1x32x2xf32> to vector<32x2xf32>
      %cst_189 = arith.constant dense<0.000000e+00> : vector<16x2xf32>
      %199 = tpu.matmul %195, %198, %cst_189 {dimension_numbers = #tpu.dot_dimension_numbers<[1], [0], [0], [1], [0, 0, 1, 1], [], []>} : vector<16x32xf32>, vector<32x2xf32>, vector<16x2xf32> -> vector<16x2xf32>
      %c0_190 = arith.constant 0 : index
      %c0_191 = arith.constant 0 : index
      %c0_192 = arith.constant 0 : index
      %200 = vector.load %arg14[%c0_190, %c0_191, %c0_192] : memref<4x64x16xf32, #tpu.memory_space<vmem>>, vector<1x64x16xf32>
      %201 = vector.shape_cast %200 : vector<1x64x16xf32> to vector<64x16xf32>
      %cst_193 = arith.constant dense<0.000000e+00> : vector<64x2xf32>
      %202 = tpu.matmul %201, %199, %cst_193 {dimension_numbers = #tpu.dot_dimension_numbers<[1], [0], [0], [1], [0, 0, 1, 1], [], []>} : vector<64x16xf32>, vector<16x2xf32>, vector<64x2xf32> -> vector<64x2xf32>
      %203 = arith.addf %196, %202 : vector<64x2xf32>
      %c1_194 = arith.constant 1 : index
      %c0_195 = arith.constant 0 : index
      %c0_196 = arith.constant 0 : index
      %204 = vector.load %arg13[%c1_194, %c0_195, %c0_196] : memref<4x32x2xf32, #tpu.memory_space<vmem>>, vector<1x32x2xf32>
      %205 = vector.shape_cast %204 : vector<1x32x2xf32> to vector<32x2xf32>
      %cst_197 = arith.constant dense<0.000000e+00> : vector<16x2xf32>
      %206 = tpu.matmul %195, %205, %cst_197 {dimension_numbers = #tpu.dot_dimension_numbers<[1], [0], [0], [1], [0, 0, 1, 1], [], []>} : vector<16x32xf32>, vector<32x2xf32>, vector<16x2xf32> -> vector<16x2xf32>
      %c1_198 = arith.constant 1 : index
      %c0_199 = arith.constant 0 : index
      %c0_200 = arith.constant 0 : index
      %207 = vector.load %arg14[%c1_198, %c0_199, %c0_200] : memref<4x64x16xf32, #tpu.memory_space<vmem>>, vector<1x64x16xf32>
      %208 = vector.shape_cast %207 : vector<1x64x16xf32> to vector<64x16xf32>
      %cst_201 = arith.constant dense<0.000000e+00> : vector<64x2xf32>
      %209 = tpu.matmul %208, %206, %cst_201 {dimension_numbers = #tpu.dot_dimension_numbers<[1], [0], [0], [1], [0, 0, 1, 1], [], []>} : vector<64x16xf32>, vector<16x2xf32>, vector<64x2xf32> -> vector<64x2xf32>
      %210 = arith.addf %203, %209 : vector<64x2xf32>
      %c2_202 = arith.constant 2 : index
      %c0_203 = arith.constant 0 : index
      %c0_204 = arith.constant 0 : index
      %211 = vector.load %arg13[%c2_202, %c0_203, %c0_204] : memref<4x32x2xf32, #tpu.memory_space<vmem>>, vector<1x32x2xf32>
      %212 = vector.shape_cast %211 : vector<1x32x2xf32> to vector<32x2xf32>
      %cst_205 = arith.constant dense<0.000000e+00> : vector<16x2xf32>
      %213 = tpu.matmul %195, %212, %cst_205 {dimension_numbers = #tpu.dot_dimension_numbers<[1], [0], [0], [1], [0, 0, 1, 1], [], []>} : vector<16x32xf32>, vector<32x2xf32>, vector<16x2xf32> -> vector<16x2xf32>
      %c2_206 = arith.constant 2 : index
      %c0_207 = arith.constant 0 : index
      %c0_208 = arith.constant 0 : index
      %214 = vector.load %arg14[%c2_206, %c0_207, %c0_208] : memref<4x64x16xf32, #tpu.memory_space<vmem>>, vector<1x64x16xf32>
      %215 = vector.shape_cast %214 : vector<1x64x16xf32> to vector<64x16xf32>
      %cst_209 = arith.constant dense<0.000000e+00> : vector<64x2xf32>
      %216 = tpu.matmul %215, %213, %cst_209 {dimension_numbers = #tpu.dot_dimension_numbers<[1], [0], [0], [1], [0, 0, 1, 1], [], []>} : vector<64x16xf32>, vector<16x2xf32>, vector<64x2xf32> -> vector<64x2xf32>
      %217 = arith.addf %210, %216 : vector<64x2xf32>
      %c3_210 = arith.constant 3 : index
      %c0_211 = arith.constant 0 : index
      %c0_212 = arith.constant 0 : index
      %218 = vector.load %arg13[%c3_210, %c0_211, %c0_212] : memref<4x32x2xf32, #tpu.memory_space<vmem>>, vector<1x32x2xf32>
      %219 = vector.shape_cast %218 : vector<1x32x2xf32> to vector<32x2xf32>
      %cst_213 = arith.constant dense<0.000000e+00> : vector<16x2xf32>
      %220 = tpu.matmul %195, %219, %cst_213 {dimension_numbers = #tpu.dot_dimension_numbers<[1], [0], [0], [1], [0, 0, 1, 1], [], []>} : vector<16x32xf32>, vector<32x2xf32>, vector<16x2xf32> -> vector<16x2xf32>
      %c3_214 = arith.constant 3 : index
      %c0_215 = arith.constant 0 : index
      %c0_216 = arith.constant 0 : index
      %221 = vector.load %arg14[%c3_214, %c0_215, %c0_216] : memref<4x64x16xf32, #tpu.memory_space<vmem>>, vector<1x64x16xf32>
      %222 = vector.shape_cast %221 : vector<1x64x16xf32> to vector<64x16xf32>
      %cst_217 = arith.constant dense<0.000000e+00> : vector<64x2xf32>
      %223 = tpu.matmul %222, %220, %cst_217 {dimension_numbers = #tpu.dot_dimension_numbers<[1], [0], [0], [1], [0, 0, 1, 1], [], []>} : vector<64x16xf32>, vector<16x2xf32>, vector<64x2xf32> -> vector<64x2xf32>
      %224 = arith.addf %217, %223 : vector<64x2xf32>
      %225 = vector.broadcast %27 : f32 to vector<64x2xf32>
      %226 = arith.mulf %224, %225 : vector<64x2xf32>
      %c0_218 = arith.constant 0 : index
      %c0_219 = arith.constant 0 : index
      %227 = vector.load %arg15[%c0_218, %c0_219] : memref<32x64xf32, #tpu.memory_space<vmem>>, vector<32x64xf32>
      %cst_220 = arith.constant dense<0.000000e+00> : vector<32x2xf32>
      %228 = tpu.matmul %227, %226, %cst_220 {dimension_numbers = #tpu.dot_dimension_numbers<[1], [0], [0], [1], [0, 0, 1, 1], [], []>} : vector<32x64xf32>, vector<64x2xf32>, vector<32x2xf32> -> vector<32x2xf32>
      %c0_221 = arith.constant 0 : index
      %c0_222 = arith.constant 0 : index
      %229 = vector.load %arg16[%c0_221, %c0_222] : memref<32x1xf32, #tpu.memory_space<vmem>>, vector<32x1xf32>
      %230 = vector.broadcast %229 : vector<32x1xf32> to vector<32x2xf32>
      %231 = arith.addf %228, %230 : vector<32x2xf32>
      %cst_223 = arith.constant dense<0.000000e+00> : vector<32x2xf32>
      %232 = tpu.matmul %arg38, %226, %cst_223 {dimension_numbers = #tpu.dot_dimension_numbers<[1], [0], [0], [1], [0, 0, 1, 1], [], []>} : vector<32x64xf32>, vector<64x2xf32>, vector<32x2xf32> -> vector<32x2xf32>
      %233 = vector.broadcast %0 : f32 to vector<32x2xf32>
      %234 = arith.mulf %233, %232 : vector<32x2xf32>
      %235 = arith.addf %231, %234 : vector<32x2xf32>
      %cst_224 = arith.constant 3.000000e-01 : f32
      %236 = vector.broadcast %cst_224 : f32 to vector<32x2xf32>
      %237 = arith.mulf %236, %arg34 : vector<32x2xf32>
      %238 = arith.subf %arg33, %237 : vector<32x2xf32>
      %cst_225 = arith.constant 6.000000e-01 : f32
      %239 = vector.broadcast %cst_225 : f32 to vector<32x2xf32>
      %240 = arith.mulf %238, %239 : vector<32x2xf32>
      %241 = arith.addf %240, %235 : vector<32x2xf32>
      %cst_226 = arith.constant 3.000000e-01 : f32
      %242 = vector.broadcast %cst_226 : f32 to vector<32x2xf32>
      %243 = arith.cmpf ogt, %241, %242 : vector<32x2xf32>
      %244 = arith.extui %243 : vector<32x2xi1> to vector<32x2xi32>
      %245 = arith.sitofp %244 : vector<32x2xi32> to vector<32x2xf32>
      %c0_227 = arith.constant 0 : index
      %c0_228 = arith.constant 0 : index
      %246 = vector.load %arg17[%c0_227, %c0_228] : memref<64x1xf32, #tpu.memory_space<vmem>>, vector<64x1xf32>
      %247 = vector.broadcast %246 : vector<64x1xf32> to vector<64x2xf32>
      %248 = arith.mulf %226, %247 : vector<64x2xf32>
      %cst_229 = arith.constant 3.33333325 : f32
      %249 = vector.broadcast %cst_229 : f32 to vector<32x2xf32>
      %250 = arith.mulf %241, %249 : vector<32x2xf32>
      %c0_230 = arith.constant 0 : index
      %c0_231 = arith.constant 0 : index
      %251 = vector.load %arg18[%c0_230, %c0_231] : memref<32x1xf32, #tpu.memory_space<vmem>>, vector<32x1xf32>
      %252 = vector.broadcast %251 : vector<32x1xf32> to vector<32x2xf32>
      %253 = arith.subf %250, %252 : vector<32x2xf32>
      %cst_232 = arith.constant dense<0.000000e+00> : vector<32x64xf32>
      %254 = tpu.matmul %253, %248, %cst_232 {dimension_numbers = #tpu.dot_dimension_numbers<[1], [1], [0], [0], [0, 0, 1, 0], [], []>} : vector<32x2xf32>, vector<64x2xf32>, vector<32x64xf32> -> vector<32x64xf32>
      %cst_233 = arith.constant 0.949999988 : f32
      %255 = vector.broadcast %cst_233 : f32 to vector<32x64xf32>
      %256 = arith.mulf %255, %arg38 : vector<32x64xf32>
      %cst_234 = arith.constant 5.000000e-01 : f32
      %257 = vector.broadcast %cst_234 : f32 to vector<32x64xf32>
      %258 = arith.mulf %254, %257 : vector<32x64xf32>
      %259 = arith.subf %256, %258 : vector<32x64xf32>
      %cst_235 = arith.constant -2.000000e+00 : f32
      %cst_236 = arith.constant 2.000000e+00 : f32
      %260 = vector.broadcast %cst_235 : f32 to vector<32x64xf32>
      %261 = arith.maximumf %260, %259 : vector<32x64xf32>
      %262 = vector.broadcast %cst_236 : f32 to vector<32x64xf32>
      %263 = arith.minimumf %262, %261 : vector<32x64xf32>
      %c0_237 = arith.constant 0 : index
      %c0_238 = arith.constant 0 : index
      %264 = vector.load %arg19[%c0_237, %c0_238] : memref<10x32xf32, #tpu.memory_space<vmem>>, vector<10x32xf32>
      %265 = vector.broadcast %27 : f32 to vector<32x2xf32>
      %266 = arith.mulf %245, %265 : vector<32x2xf32>
      %cst_239 = arith.constant dense<0.000000e+00> : vector<10x2xf32>
      %267 = tpu.matmul %264, %266, %cst_239 {dimension_numbers = #tpu.dot_dimension_numbers<[1], [0], [0], [1], [0, 0, 1, 1], [], []>} : vector<10x32xf32>, vector<32x2xf32>, vector<10x2xf32> -> vector<10x2xf32>
      %c0_240 = arith.constant 0 : index
      %c0_241 = arith.constant 0 : index
      %268 = vector.load %arg20[%c0_240, %c0_241] : memref<10x1xf32, #tpu.memory_space<vmem>>, vector<10x1xf32>
      %269 = vector.broadcast %268 : vector<10x1xf32> to vector<10x2xf32>
      %270 = arith.addf %267, %269 : vector<10x2xf32>
      %cst_242 = arith.constant 3.000000e-01 : f32
      %271 = vector.broadcast %cst_242 : f32 to vector<10x2xf32>
      %272 = arith.mulf %271, %arg36 : vector<10x2xf32>
      %273 = arith.subf %arg35, %272 : vector<10x2xf32>
      %cst_243 = arith.constant 6.000000e-01 : f32
      %274 = vector.broadcast %cst_243 : f32 to vector<10x2xf32>
      %275 = arith.mulf %273, %274 : vector<10x2xf32>
      %276 = arith.addf %275, %270 : vector<10x2xf32>
      %cst_244 = arith.constant 3.000000e-01 : f32
      %277 = vector.broadcast %cst_244 : f32 to vector<10x2xf32>
      %278 = arith.cmpf ogt, %276, %277 : vector<10x2xf32>
      %279 = arith.extui %278 : vector<10x2xi1> to vector<10x2xi32>
      %280 = arith.sitofp %279 : vector<10x2xi32> to vector<10x2xf32>
      %281 = arith.addf %arg37, %280 : vector<10x2xf32>
      %282 = arith.select %25, %33, %arg27 : vector<8x512xf32>
      %283 = arith.select %25, %37, %arg28 : vector<8x512xf32>
      %284 = arith.select %25, %112, %arg29 : vector<16x128xf32>
      %285 = arith.select %25, %116, %arg30 : vector<16x128xf32>
      %286 = arith.select %25, %191, %arg31 : vector<16x32xf32>
      %287 = arith.select %25, %195, %arg32 : vector<16x32xf32>
      %288 = arith.select %25, %241, %arg33 : vector<32x2xf32>
      %289 = arith.select %25, %245, %arg34 : vector<32x2xf32>
      %290 = arith.select %25, %276, %arg35 : vector<10x2xf32>
      %291 = arith.select %25, %280, %arg36 : vector<10x2xf32>
      %292 = arith.select %25, %281, %arg37 : vector<10x2xf32>
      %293 = arith.select %25, %263, %arg38 : vector<32x64xf32>
      %294 = arith.select %25, %arg26, %arg40 : i32
      %cst_245 = arith.constant 3.000000e-01 : f32
      %295 = vector.broadcast %cst_245 : f32 to vector<10x2xf32>
      %296 = arith.cmpf ogt, %290, %295 : vector<10x2xf32>
      %297 = arith.extui %296 : vector<10x2xi1> to vector<10x2xi32>
      %298 = arith.sitofp %297 : vector<10x2xi32> to vector<10x2xf32>
      %cst_246 = arith.constant dense<0xFF800000> : vector<2xf32>
      %299 = vector.multi_reduction <maximumf>, %298, %cst_246 [0] : vector<10x2xf32> to vector<2xf32>
      %300 = vector.shape_cast %299 : vector<2xf32> to vector<1x2xf32>
      %301 = vector.shape_cast %300 : vector<1x2xf32> to vector<1x1x2xf32>
      %cst_247 = arith.constant dense<0.000000e+00> : vector<1xf32>
      %302 = vector.multi_reduction <add>, %301, %cst_247 [1, 2] : vector<1x1x2xf32> to vector<1xf32>
      %303 = vector.shape_cast %302 : vector<1xf32> to vector<1x1x1xf32>
      %304 = vector.extract %303[0, 0, 0] : f32 from vector<1x1x1xf32>
      %cst_248 = arith.constant 5.000000e-01 : f32
      %305 = arith.mulf %304, %cst_248 : f32
      %cst_249 = arith.constant 8.000000e-01 : f32
      %306 = arith.cmpf ogt, %305, %cst_249 : f32
      %c1_i32_250 = arith.constant 1 : i32
      %307 = arith.cmpi sge, %arg26, %c1_i32_250 : i32
      %308 = arith.andi %306, %307 : i1
      %309 = arith.andi %25, %308 : i1
      %c1_i32_251 = arith.constant 1 : i32
      %310 = arith.select %309, %c1_i32_251, %arg39 : i32
      scf.yield %282, %283, %284, %285, %286, %287, %288, %289, %290, %291, %292, %293, %310, %294 : vector<8x512xf32>, vector<8x512xf32>, vector<16x128xf32>, vector<16x128xf32>, vector<16x32xf32>, vector<16x32xf32>, vector<32x2xf32>, vector<32x2xf32>, vector<10x2xf32>, vector<10x2xf32>, vector<10x2xf32>, vector<32x64xf32>, i32, i32
    }
    %c10_i32_21 = arith.constant 10 : i32
    %c0_22 = arith.constant 0 : index
    %c0_23 = arith.constant 0 : index
    %21 = vector.load %arg22[%c0_22, %c0_23] : memref<10x2xf32, #tpu.memory_space<vmem>>, vector<10x2xf32>
    tpu.vector_store %arg22[%c0_22, %c0_23], %20#8 {strides = array<i32>} : memref<10x2xf32, #tpu.memory_space<vmem>>, vector<10x2xf32>,
    %c0_24 = arith.constant 0 : index
    %c0_25 = arith.constant 0 : index
    %22 = vector.load %arg23[%c0_24, %c0_25] : memref<10x2xf32, #tpu.memory_space<vmem>>, vector<10x2xf32>
    tpu.vector_store %arg23[%c0_24, %c0_25], %20#10 {strides = array<i32>} : memref<10x2xf32, #tpu.memory_space<vmem>>, vector<10x2xf32>,
    %c0_26 = arith.constant 0 : index
    %c0_27 = arith.constant 0 : index
    %23 = vector.load %arg24[%c0_26, %c0_27] : memref<32x64xf32, #tpu.memory_space<vmem>>, vector<32x64xf32>
    tpu.vector_store %arg24[%c0_26, %c0_27], %20#11 {strides = array<i32>} : memref<32x64xf32, #tpu.memory_space<vmem>>, vector<32x64xf32>,
    %c0_28 = arith.constant 0 : index
    %24 = memref.load %arg25[%c0_28] : memref<1xi32, #tpu.memory_space<smem>>
    memref.store %20#13, %arg25[%c0_28] : memref<1xi32, #tpu.memory_space<smem>>
    return
  }
}

</mosaic_0001>

<llo_original>
// kernel: snn_forward.1
$region0: #{snn_forward.1}
  #allocation0 [shape = 'u32[]', space=smem, size = 0x4, offset = 0x4, fixed_abs, tag = 'smem constant byte address 0x4 - core index']
  #allocation1 [shape = 'u32[144,128]{1,0:T(1,128)}', space=vmem, size = 0x12000, scoped, tag = 'internal scratch']
  #allocation2 [shape = 'f32[1]{0:T(128)S(6)}', space=smem, size = 0x200, scoped, tag = 'scoped memory for snn_forward.1']
  %s0 = inlined_call_operand.vmem [shape: f32[10], index: 0, kind: input, shape index: {}]
  %s1 = inlined_call_operand.<no memory space> [shape: f32[1], index: 1, kind: input, shape index: {}]
  %s2 = inlined_call_operand.vmem [shape: f32[9,512], index: 2, kind: input, shape index: {}]
  %s3 = inlined_call_operand.hbm [shape: f32[8,9], index: 3, kind: input, shape index: {}]
  %s4 = inlined_call_operand.vmem [shape: f32[8,1], index: 4, kind: input, shape index: {}]
  %s5 = inlined_call_operand.vmem [shape: f32[512,128], index: 5, kind: input, shape index: {}]
  %s6 = inlined_call_operand.vmem [shape: f32[9,16,8], index: 6, kind: input, shape index: {}]
  %s7 = inlined_call_operand.vmem [shape: f32[16,1], index: 7, kind: input, shape index: {}]
  %s8 = inlined_call_operand.vmem [shape: f32[9,128,128], index: 8, kind: input, shape index: {}]
  %s9 = inlined_call_operand.vmem [shape: f32[128,32], index: 9, kind: input, shape index: {}]
  %s10 = inlined_call_operand.hbm [shape: f32[9,16,16], index: 10, kind: input, shape index: {}]
  %s11 = inlined_call_operand.vmem [shape: f32[16,1], index: 11, kind: input, shape index: {}]
  %s12 = inlined_call_operand.hbm [shape: f32[9,32,32], index: 12, kind: input, shape index: {}]
  %s13 = inlined_call_operand.vmem [shape: f32[4,32,2], index: 13, kind: input, shape index: {}]
  %s14 = inlined_call_operand.vmem [shape: f32[4,64,16], index: 14, kind: input, shape index: {}]
  %s15 = inlined_call_operand.hbm [shape: f32[32,64], index: 15, kind: input, shape index: {}]
  %s16 = inlined_call_operand.vmem [shape: f32[32,1], index: 16, kind: input, shape index: {}]
  %s17 = inlined_call_operand.vmem [shape: f32[64,1], index: 17, kind: input, shape index: {}]
  %s18 = inlined_call_operand.vmem [shape: f32[32,1], index: 18, kind: input, shape index: {}]
  %s19 = inlined_call_operand.vmem [shape: f32[10,32], index: 19, kind: input, shape index: {}]
  %s20 = inlined_call_operand.vmem [shape: f32[10,1], index: 20, kind: input, shape index: {}]
  %s21 = inlined_call_operand.hbm [shape: f32[32,64], index: 21, kind: input, shape index: {}]
  %s22 = inlined_call_operand.vmem [shape: f32[10,2], index: 22, kind: output, shape index: {0}]
  %s23 = inlined_call_operand.vmem [shape: f32[10,2], index: 23, kind: output, shape index: {1}]
  %s24 = inlined_call_operand.hbm [shape: f32[32,64], index: 24, kind: output, shape index: {2}]
  %s25 = inlined_call_operand.hbm [shape: s32[1], index: 25, kind: output, shape index: {3}]
  %26 = xla_tuple %s22, %s23, %s24, %s25
  %s27 = sld [smem:[#allocation0]]
  $region153: #{snn_forward.1} parent=0
    _
  %s29 = ssub.s32 1, %s27
  %s30 = scalar_select 0, %s29, %s27
  %31 = sst [smem:[#allocation2]] %s1
  $region1: #{snn_forward.1} parent=0
    #allocation3 [shape = 'u8[512]{0}', space=smem, size = 0x200, scoped, tag = 'input window, operand 0, single buffered']
    #allocation4 [shape = 's32[1]{0}', space=sflag, size = 0x4, scoped, tag = 'scoped memory for snn_forward.1']
    #allocation5 [shape = 's32[1]{0}', space=sflag, size = 0x4, scoped, tag = 'scoped memory for snn_forward.1']
    #allocation6 [shape = 's32[1]{0}', space=sflag, size = 0x4, scoped, tag = 'scoped memory for snn_forward.1']
    #allocation7 [shape = 's32[1]{0}', space=sflag, size = 0x4, scoped, tag = 'scoped memory for snn_forward.1']
    #allocation8 [shape = 'u8[4096]{0}', space=vmem, size = 0x1000, scoped, tag = 'input window, operand 3, single buffered']
    #allocation9 [shape = 'u8[73728]{0}', space=vmem, size = 0x12000, scoped, tag = 'input window, operand 10, single buffered']
    #allocation10 [shape = 's32[1]{0}', space=sflag, size = 0x4, scoped, tag = 'scoped memory for snn_forward.1']
    #allocation11 [shape = 'u8[147456]{0}', space=vmem, size = 0x24000, scoped, tag = 'input window, operand 12, single buffered']
    #allocation12 [shape = 'u8[16384]{0}', space=vmem, size = 0x4000, scoped, tag = 'input window, operand 15, single buffered']
    #allocation13 [shape = 's32[1]{0}', space=sflag, size = 0x4, scoped, tag = 'scoped memory for snn_forward.1']
    #allocation14 [shape = 'u8[16384]{0}', space=vmem, size = 0x4000, scoped, tag = 'input window, operand 21, single buffered']
    #allocation15 [shape = 'u8[16384]{0}', space=vmem, size = 0x4000, scoped, tag = 'output window, operand 2, single buffered']
    #allocation16 [shape = 'u8[512]{0}', space=smem, size = 0x200, scoped, tag = 'output window, operand 3, single buffered']
    %32 = vsyncpa [#allocation7], 0
    %33 = vsyncpa [#allocation4], 0
    %34 = vsyncpa [#allocation10], 0
    %35 = vsyncpa [#allocation13], 0
    %36 = vsyncpa [#allocation5], 0
    %37 = vsyncpa [#allocation6], 0
    // Predicated region
    $region2: #{snn_forward.1} parent=1 // pred_check
      _
    $region3: #{snn_forward.1} parent=1 // pred_check_branch
      %39 = sbr.rel (0) target = $region5
    $region4: #{snn_forward.1} parent=1 // pred_region
      %s41 = ssub.s32 16, 16
      %42 = vsyncadd [#allocation7], %s41
      %s44 = sshll.u32 %s0, 4
      %s45 = int_to_ptr.vmem [resolvable:$true] %s44
      %47 = dma.vmem_to_smem %s45, 16, [#allocation3], [#allocation7]
    $region5: #{snn_forward.1} parent=1 // pred_fallthru
      _
    // Predicated region
    $region6: #{snn_forward.1} parent=1 // pred_check
      _
    $region7: #{snn_forward.1} parent=1 // pred_check_branch
      %49 = sbr.rel (0) target = $region9
    $region8: #{snn_forward.1} parent=1 // pred_region
      _
    $region9: #{snn_forward.1} parent=1 // pred_fallthru
      _
    // Predicated region
    $region10: #{snn_forward.1} parent=1 // pred_check
      _
    $region11: #{snn_forward.1} parent=1 // pred_check_branch
      %51 = sbr.rel (0) target = $region13
    $region12: #{snn_forward.1} parent=1 // pred_region
      _
    $region13: #{snn_forward.1} parent=1 // pred_fallthru
      _
    // Predicated region
    $region14: #{snn_forward.1} parent=1 // pred_check
      _
    $region15: #{snn_forward.1} parent=1 // pred_check_branch
      %53 = sbr.rel (0) target = $region17
    $region16: #{snn_forward.1} parent=1 // pred_region
      %s55 = ssub.s32 128, 128
      %56 = vsyncadd [#allocation4], %s55
      %s58 = sshll.u32 [#allocation8], 4
      %s59 = int_to_ptr.vmem [resolvable:$true] %s58
      %61 = dma.hbm_to_vmem [thread:$0]  %s3, 128, %s59, [#allocation4]
    $region17: #{snn_forward.1} parent=1 // pred_fallthru
      _
    // Predicated region
    $region18: #{snn_forward.1} parent=1 // pred_check
      _
    $region19: #{snn_forward.1} parent=1 // pred_check_branch
      %63 = sbr.rel (0) target = $region21
    $region20: #{snn_forward.1} parent=1 // pred_region
      _
    $region21: #{snn_forward.1} parent=1 // pred_fallthru
      _
    // Predicated region
    $region22: #{snn_forward.1} parent=1 // pred_check
      _
    $region23: #{snn_forward.1} parent=1 // pred_check_branch
      %65 = sbr.rel (0) target = $region25
    $region24: #{snn_forward.1} parent=1 // pred_region
      _
    $region25: #{snn_forward.1} parent=1 // pred_fallthru
      _
    // Predicated region
    $region26: #{snn_forward.1} parent=1 // pred_check
      _
    $region27: #{snn_forward.1} parent=1 // pred_check_branch
      %67 = sbr.rel (0) target = $region29
    $region28: #{snn_forward.1} parent=1 // pred_region
      _
    $region29: #{snn_forward.1} parent=1 // pred_fallthru
      _
    // Predicated region
    $region30: #{snn_forward.1} parent=1 // pred_check
      _
    $region31: #{snn_forward.1} parent=1 // pred_check_branch
      %69 = sbr.rel (0) target = $region33
    $region32: #{snn_forward.1} parent=1 // pred_region
      _
    $region33: #{snn_forward.1} parent=1 // pred_fallthru
      _
    // Predicated region
    $region34: #{snn_forward.1} parent=1 // pred_check
      _
    $region35: #{snn_forward.1} parent=1 // pred_check_branch
      %71 = sbr.rel (0) target = $region37
    $region36: #{snn_forward.1} parent=1 // pred_region
      _
    $region37: #{snn_forward.1} parent=1 // pred_fallthru
      _
    // Predicated region
    $region38: #{snn_forward.1} parent=1 // pred_check
      _
    $region39: #{snn_forward.1} parent=1 // pred_check_branch
      %73 = sbr.rel (0) target = $region41
    $region40: #{snn_forward.1} parent=1 // pred_region
      _
    $region41: #{snn_forward.1} parent=1 // pred_fallthru
      _
    // Predicated region
    $region42: #{snn_forward.1} parent=1 // pred_check
      _
    $region43: #{snn_forward.1} parent=1 // pred_check_branch
      %75 = sbr.rel (0) target = $region45
    $region44: #{snn_forward.1} parent=1 // pred_region
      %s77 = ssub.s32 2304, 2304
      %78 = vsyncadd [#allocation10], %s77
      %s79 = sshll.u32 [#allocation9], 4
      %s80 = int_to_ptr.vmem [resolvable:$true] %s79
      %85 = dma.hbm_to_vmem [thread:$0]  %s10, 2304, %s80, [#allocation10], 128, 128, 8
    $region45: #{snn_forward.1} parent=1 // pred_fallthru
      _
    // Predicated region
    $region46: #{snn_forward.1} parent=1 // pred_check
      _
    $region47: #{snn_forward.1} parent=1 // pred_check_branch
      %87 = sbr.rel (0) target = $region49
    $region48: #{snn_forward.1} parent=1 // pred_region
      _
    $region49: #{snn_forward.1} parent=1 // pred_fallthru
      _
    // Predicated region
    $region50: #{snn_forward.1} parent=1 // pred_check
      _
    $region51: #{snn_forward.1} parent=1 // pred_check_branch
      %89 = sbr.rel (0) target = $region53
    $region52: #{snn_forward.1} parent=1 // pred_region
      %s91 = ssub.s32 4608, 4608
      %92 = vsyncadd [#allocation10], %s91
      %s93 = sshll.u32 [#allocation11], 4
      %s94 = int_to_ptr.vmem [resolvable:$true] %s93
      %99 = dma.hbm_to_vmem [thread:$0]  %s12, 4608, %s94, [#allocation10], 128, 128, 8
    $region53: #{snn_forward.1} parent=1 // pred_fallthru
      _
    // Predicated region
    $region54: #{snn_forward.1} parent=1 // pred_check
      _
    $region55: #{snn_forward.1} parent=1 // pred_check_branch
      %101 = sbr.rel (0) target = $region57
    $region56: #{snn_forward.1} parent=1 // pred_region
      _
    $region57: #{snn_forward.1} parent=1 // pred_fallthru
      _
    // Predicated region
    $region58: #{snn_forward.1} parent=1 // pred_check
      _
    $region59: #{snn_forward.1} parent=1 // pred_check_branch
      %103 = sbr.rel (0) target = $region61
    $region60: #{snn_forward.1} parent=1 // pred_region
      _
    $region61: #{snn_forward.1} parent=1 // pred_fallthru
      _
    // Predicated region
    $region62: #{snn_forward.1} parent=1 // pred_check
      _
    $region63: #{snn_forward.1} parent=1 // pred_check_branch
      %105 = sbr.rel (0) target = $region65
    $region64: #{snn_forward.1} parent=1 // pred_region
      %s107 = ssub.s32 512, 512
      %108 = vsyncadd [#allocation13], %s107
      %s109 = sshll.u32 [#allocation12], 4
      %s110 = int_to_ptr.vmem [resolvable:$true] %s109
      %115 = dma.hbm_to_vmem [thread:$0]  %s15, 512, %s110, [#allocation13], 128, 128, 8
    $region65: #{snn_forward.1} parent=1 // pred_fallthru
      _
    // Predicated region
    $region66: #{snn_forward.1} parent=1 // pred_check
      _
    $region67: #{snn_forward.1} parent=1 // pred_check_branch
      %117 = sbr.rel (0) target = $region69
    $region68: #{snn_forward.1} parent=1 // pred_region
      _
    $region69: #{snn_forward.1} parent=1 // pred_fallthru
      _
    // Predicated region
    $region70: #{snn_forward.1} parent=1 // pred_check
      _
    $region71: #{snn_forward.1} parent=1 // pred_check_branch
      %119 = sbr.rel (0) target = $region73
    $region72: #{snn_forward.1} parent=1 // pred_region
      _
    $region73: #{snn_forward.1} parent=1 // pred_fallthru
      _
    // Predicated region
    $region74: #{snn_forward.1} parent=1 // pred_check
      _
    $region75: #{snn_forward.1} parent=1 // pred_check_branch
      %121 = sbr.rel (0) target = $region77
    $region76: #{snn_forward.1} parent=1 // pred_region
      _
    $region77: #{snn_forward.1} parent=1 // pred_fallthru
      _
    // Predicated region
    $region78: #{snn_forward.1} parent=1 // pred_check
      _
    $region79: #{snn_forward.1} parent=1 // pred_check_branch
      %123 = sbr.rel (0) target = $region81
    $region80: #{snn_forward.1} parent=1 // pred_region
      _
    $region81: #{snn_forward.1} parent=1 // pred_fallthru
      _
    // Predicated region
    $region82: #{snn_forward.1} parent=1 // pred_check
      _
    $region83: #{snn_forward.1} parent=1 // pred_check_branch
      %125 = sbr.rel (0) target = $region85
    $region84: #{snn_forward.1} parent=1 // pred_region
      _
    $region85: #{snn_forward.1} parent=1 // pred_fallthru
      _
    // Predicated region
    $region86: #{snn_forward.1} parent=1 // pred_check
      _
    $region87: #{snn_forward.1} parent=1 // pred_check_branch
      %127 = sbr.rel (0) target = $region89
    $region88: #{snn_forward.1} parent=1 // pred_region
      %s129 = ssub.s32 512, 512
      %130 = vsyncadd [#allocation13], %s129
      %s131 = sshll.u32 [#allocation14], 4
      %s132 = int_to_ptr.vmem [resolvable:$true] %s131
      %137 = dma.hbm_to_vmem [thread:$0]  %s21, 512, %s132, [#allocation13], 128, 128, 8
    $region89: #{snn_forward.1} parent=1 // pred_fallthru
      _
    // Predicated region
    $region90: #{snn_forward.1} parent=1 // pred_check
      _
    $region91: #{snn_forward.1} parent=1 // pred_check_branch
      %139 = sbr.rel (0) target = $region93
    $region92: #{snn_forward.1} parent=1 // pred_region
      %140 = dma.done [#allocation7], 16
    $region93: #{snn_forward.1} parent=1 // pred_fallthru
      _
    // Predicated region
    $region94: #{snn_forward.1} parent=1 // pred_check
      _
    $region95: #{snn_forward.1} parent=1 // pred_check_branch
      %142 = sbr.rel (0) target = $region97
    $region96: #{snn_forward.1} parent=1 // pred_region
      %143 = dma.done [#allocation4], 128
    $region97: #{snn_forward.1} parent=1 // pred_fallthru
      _
    // Predicated region
    $region98: #{snn_forward.1} parent=1 // pred_check
      _
    $region99: #{snn_forward.1} parent=1 // pred_check_branch
      %145 = sbr.rel (0) target = $region101
    $region100: #{snn_forward.1} parent=1 // pred_region
      %146 = dma.done [#allocation10], 2304
    $region101: #{snn_forward.1} parent=1 // pred_fallthru
      _
    // Predicated region
    $region102: #{snn_forward.1} parent=1 // pred_check
      _
    $region103: #{snn_forward.1} parent=1 // pred_check_branch
      %148 = sbr.rel (0) target = $region105
    $region104: #{snn_forward.1} parent=1 // pred_region
      %149 = dma.done [#allocation10], 4608
    $region105: #{snn_forward.1} parent=1 // pred_fallthru
      _
    // Predicated region
    $region106: #{snn_forward.1} parent=1 // pred_check
      _
    $region107: #{snn_forward.1} parent=1 // pred_check_branch
      %151 = sbr.rel (0) target = $region109
    $region108: #{snn_forward.1} parent=1 // pred_region
      %152 = dma.done [#allocation13], 512
    $region109: #{snn_forward.1} parent=1 // pred_fallthru
      _
    // Predicated region
    $region110: #{snn_forward.1} parent=1 // pred_check
      _
    $region111: #{snn_forward.1} parent=1 // pred_check_branch
      %154 = sbr.rel (0) target = $region113
    $region112: #{snn_forward.1} parent=1 // pred_region
      %155 = dma.done [#allocation13], 512
    $region113: #{snn_forward.1} parent=1 // pred_fallthru
      _
    %156 = sfence
    %s157 = sld [smem:[#allocation2]]
    %v158 = vld [vmem:[#allocation8] sm:$0xff]
    %v159 = vld [vmem:[%s2] sm:$0xff]
    %v160 = vld [vmem:[%s2 + $0x8] sm:$0xff]
    %v161 = vld [vmem:[%s2 + $0x10] sm:$0xff]
    %v162 = vld [vmem:[%s2 + $0x18] sm:$0xff]
    %v163 = vld [vmem:[%s2 + $0x20] sm:$0x1]
    %v164 = vld [vmem:[%s2 + $0x28] sm:$0x1]
    %v165 = vld [vmem:[%s2 + $0x30] sm:$0x1]
    %v166 = vld [vmem:[%s2 + $0x38] sm:$0x1]
    %v167 = vld [vmem:[%s4] sm:$0xff]
    %169 = vset.pattern.permute.xlu0 0
    %170 = vperm.xlu0 %169, %v167
    %v171 = vpop.permute.xlu0 %170
    %vm173 = vcmask 72704
    %v175 = vsel %vm173, %v158, 0
    %vm177 = vcmask 1040384
    %v179 = vsel %vm177, %v163, 0
    %v182 = vsel %vm177, %v164, 0
    %v185 = vsel %vm177, %v165, 0
    %v188 = vsel %vm177, %v166, 0
    %190 = vmatprep.subr.mxu0 0.0
    %191 = vmatpush1.msra.mxu0 0.0
    %192 = vmatprep.subr.mxu0 0.0
    %193 = vmatpush1.msra.mxu0 0.0
    %194 = vmatprep.subr.mxu0 0.0
    %195 = vmatpush1.msra.mxu0 0.0
    %196 = vmatprep.subr.mxu0 0.0
    %197 = vmatpush1.msra.mxu0 0.0
    %198 = vmatprep.subr.mxu0 0.0
    %199 = vmatpush1.msra.mxu0 0.0
    %200 = vmatprep.subr.mxu0 0.0
    %201 = vmatpush1.msra.mxu0 0.0
    %202 = vmatprep.subr.mxu0 0.0
    %203 = vmatpush1.msra.mxu0 0.0
    %204 = vmatprep.subr.mxu0 0.0
    %205 = vmatpush1.msra.mxu0 0.0
    %206 = vmatprep.subr.mxu0 0.0
    %207 = vmatpush1.msra.mxu0 0.0
    %208 = vmatprep.subr.mxu0 0.0
    %209 = vmatpush1.msra.mxu0 0.0
    %210 = vmatprep.subr.mxu0 0.0
    %211 = vmatpush1.msra.mxu0 0.0
    %212 = vmatprep.subr.mxu0 0.0
    %213 = vmatpush1.msra.mxu0 0.0
    %214 = vmatprep.subr.mxu0 0.0
    %215 = vmatpush1.msra.mxu0 0.0
    %216 = vmatprep.subr.mxu0 0.0
    %217 = vmatpush1.msra.mxu0 0.0
    %218 = vmatprep.subr.mxu0 %v182
    %219 = vmatpush1.msra.mxu0 %v179
    %220 = vmatprep.subr.mxu0 %v160
    %221 = vmatpush1.msra.mxu0 %v159
    %222 = vmatprep.subr.mxu0 0.0
    %223 = vmatpush2.msra.mxu0 0.0
    %224 = vmatprep.subr.mxu0 0.0
    %225 = vmatpush2.msra.mxu0 0.0
    %226 = vmatprep.subr.mxu0 0.0
    %227 = vmatpush2.msra.mxu0 0.0
    %228 = vmatprep.subr.mxu0 0.0
    %229 = vmatpush2.msra.mxu0 0.0
    %230 = vmatprep.subr.mxu0 0.0
    %231 = vmatpush2.msra.mxu0 0.0
    %232 = vmatprep.subr.mxu0 0.0
    %233 = vmatpush2.msra.mxu0 0.0
    %234 = vmatprep.subr.mxu0 0.0
    %235 = vmatpush2.msra.mxu0 0.0
    %236 = vmatprep.subr.mxu0 0.0
    %237 = vmatpush2.msra.mxu0 0.0
    %238 = vmatprep.subr.mxu0 0.0
    %239 = vmatpush2.msra.mxu0 0.0
    %240 = vmatprep.subr.mxu0 0.0
    %241 = vmatpush2.msra.mxu0 0.0
    %242 = vmatprep.subr.mxu0 0.0
    %243 = vmatpush2.msra.mxu0 0.0
    %244 = vmatprep.subr.mxu0 0.0
    %245 = vmatpush2.msra.mxu0 0.0
    %246 = vmatprep.subr.mxu0 0.0
    %247 = vmatpush2.msra.mxu0 0.0
    %248 = vmatprep.subr.mxu0 0.0
    %249 = vmatpush2.msra.mxu0 0.0
    %250 = vmatprep.subr.mxu0 0.0
    %251 = vmatpush2.msra.mxu0 0.0
    %252 = vmatprep.subr.mxu0 0.0
    %253 = vmatpush2.msra.mxu0 0.0
    %254 = vmatprep.mubr.f32.mxu0 0.0
    %255 = vmatmul.mubr.f32.gmra.mxu0 %v175
    %v256 = vpop.f32.mrf.mxu0
    %v257 = vadd.f32 %v171, %v256
    %v258 = vpop.f32.mrf.mxu0
    %v259 = vadd.f32 %v171, %v258
    %260 = vdwg.mxu0
    %261 = vmatprep.subr.mxu0 0.0
    %262 = vmatpush1.msra.mxu0 0.0
    %263 = vmatprep.subr.mxu0 0.0
    %264 = vmatpush1.msra.mxu0 0.0
    %265 = vmatprep.subr.mxu0 0.0
    %266 = vmatpush1.msra.mxu0 0.0
    %267 = vmatprep.subr.mxu0 0.0
    %268 = vmatpush1.msra.mxu0 0.0
    %269 = vmatprep.subr.mxu0 0.0
    %270 = vmatpush1.msra.mxu0 0.0
    %271 = vmatprep.subr.mxu0 0.0
    %272 = vmatpush1.msra.mxu0 0.0
    %273 = vmatprep.subr.mxu0 0.0
    %274 = vmatpush1.msra.mxu0 0.0
    %275 = vmatprep.subr.mxu0 0.0
    %276 = vmatpush1.msra.mxu0 0.0
    %277 = vmatprep.subr.mxu0 0.0
    %278 = vmatpush1.msra.mxu0 0.0
    %279 = vmatprep.subr.mxu0 0.0
    %280 = vmatpush1.msra.mxu0 0.0
    %281 = vmatprep.subr.mxu0 0.0
    %282 = vmatpush1.msra.mxu0 0.0
    %283 = vmatprep.subr.mxu0 0.0
    %284 = vmatpush1.msra.mxu0 0.0
    %285 = vmatprep.subr.mxu0 0.0
    %286 = vmatpush1.msra.mxu0 0.0
    %287 = vmatprep.subr.mxu0 0.0
    %288 = vmatpush1.msra.mxu0 0.0
    %289 = vmatprep.subr.mxu0 %v188
    %290 = vmatpush1.msra.mxu0 %v185
    %291 = vmatprep.subr.mxu0 %v162
    %292 = vmatpush1.msra.mxu0 %v161
    %293 = vmatprep.subr.mxu0 0.0
    %294 = vmatpush2.msra.mxu0 0.0
    %295 = vmatprep.subr.mxu0 0.0
    %296 = vmatpush2.msra.mxu0 0.0
    %297 = vmatprep.subr.mxu0 0.0
    %298 = vmatpush2.msra.mxu0 0.0
    %299 = vmatprep.subr.mxu0 0.0
    %300 = vmatpush2.msra.mxu0 0.0
    %301 = vmatprep.subr.mxu0 0.0
    %302 = vmatpush2.msra.mxu0 0.0
    %303 = vmatprep.subr.mxu0 0.0
    %304 = vmatpush2.msra.mxu0 0.0
    %305 = vmatprep.subr.mxu0 0.0
    %306 = vmatpush2.msra.mxu0 0.0
    %307 = vmatprep.subr.mxu0 0.0
    %308 = vmatpush2.msra.mxu0 0.0
    %309 = vmatprep.subr.mxu0 0.0
    %310 = vmatpush2.msra.mxu0 0.0
    %311 = vmatprep.subr.mxu0 0.0
    %312 = vmatpush2.msra.mxu0 0.0
    %313 = vmatprep.subr.mxu0 0.0
    %314 = vmatpush2.msra.mxu0 0.0
    %315 = vmatprep.subr.mxu0 0.0
    %316 = vmatpush2.msra.mxu0 0.0
    %317 = vmatprep.subr.mxu0 0.0
    %318 = vmatpush2.msra.mxu0 0.0
    %319 = vmatprep.subr.mxu0 0.0
    %320 = vmatpush2.msra.mxu0 0.0
    %321 = vmatprep.subr.mxu0 0.0
    %322 = vmatpush2.msra.mxu0 0.0
    %323 = vmatprep.subr.mxu0 0.0
    %324 = vmatpush2.msra.mxu0 0.0
    %325 = vmatprep.mubr.f32.mxu0 0.0
    %326 = vmatmul.mubr.f32.gmra.mxu0 %v175
    %v327 = vpop.f32.mrf.mxu0
    %v328 = vadd.f32 %v171, %v327
    %v329 = vpop.f32.mrf.mxu0
    %v330 = vadd.f32 %v171, %v329
    %331 = vdwg.mxu0
    %v332 = vld [vmem:[#allocation14] sm:$0xff]
    %v333 = vld [vmem:[#allocation14 + $0x8] sm:$0xff]
    %v334 = vld [vmem:[#allocation14 + $0x10] sm:$0xff]
    %v335 = vld [vmem:[#allocation14 + $0x18] sm:$0xff]
    loop: start=0, step=1, limit=10
    $region114: #{snn_forward.1} parent=1 // loop_pre_header
      _
    $region115: #{snn_forward.1} parent=1 // loop_header
      %s337 = sphi 0, %s341
      %p338 = scmp.ge.s32.totalorder %s337, 10
      %v342 = vphi 0.0, %v5416
      %v343 = vphi 0.0, %v5417
      %v344 = vphi 0.0, %v5418
      %v345 = vphi 0.0, %v5419
      %v346 = vphi 0.0, %v5420
      %v347 = vphi 0.0, %v5421
      %v348 = vphi 0.0, %v5422
      %v349 = vphi 0.0, %v5423
      %v350 = vphi 0.0, %v5424
      %v351 = vphi 0.0, %v5425
      %v352 = vphi 0.0, %v5426
      %v353 = vphi 0.0, %v5427
      %v354 = vphi 0.0, %v5428
      %v355 = vphi 0.0, %v5429
      %v356 = vphi 0.0, %v5430
      %v357 = vphi 0.0, %v5431
      %v358 = vphi 0.0, %v5432
      %v359 = vphi 0.0, %v5433
      %v360 = vphi 0.0, %v5434
      %v361 = vphi 0.0, %v5435
      %v362 = vphi 0.0, %v5436
      %v363 = vphi 0.0, %v5437
      %v364 = vphi 0.0, %v5438
      %v365 = vphi 0.0, %v5439
      %v366 = vphi 0.0, %v5440
      %v367 = vphi 0.0, %v5441
      %v368 = vphi 0.0, %v5442
      %v369 = vphi 0.0, %v5443
      %v370 = vphi 0.0, %v5444
      %v371 = vphi 0.0, %v5445
      %v372 = vphi %v332, %v5446
      %v373 = vphi %v333, %v5447
      %v374 = vphi %v334, %v5448
      %v375 = vphi %v335, %v5449
      %s376 = sphi 0, %s5485
      %s377 = sphi 0, %s5450
    $region116: #{snn_forward.1} parent=1 // loop_header_branch
      %340 = sbr.rel (%p338) target = $region120
    $region117: #{snn_forward.1} parent=1 // loop_body
      %p378 = scmp.eq.s32.totalorder %s376, 0
      %s379 = sld [smem:[#allocation3 + %s337]]
      %v380 = vmul.f32 %v346, 0.3
      %v381 = vmul.f32 %v347, 0.3
      %v382 = vmul.f32 %v348, 0.3
      %v383 = vmul.f32 %v349, 0.3
      %v384 = vsub.f32 %v342, %v380
      %v385 = vsub.f32 %v343, %v381
      %v386 = vsub.f32 %v344, %v382
      %v387 = vsub.f32 %v345, %v383
      %v388 = vmul.f32 %v384, 0.6
      %v389 = vmul.f32 %v385, 0.6
      %v390 = vmul.f32 %v386, 0.6
      %v391 = vmul.f32 %v387, 0.6
      %v392 = vadd.f32 %v388, %v257
      %v393 = vadd.f32 %v389, %v259
      %v394 = vadd.f32 %v390, %v328
      %v395 = vadd.f32 %v391, %v330
      %vm396 = vcmp.gt.f32.partialorder %v392, 0.3
      %vm397 = vcmp.gt.f32.partialorder %v393, 0.3
      %vm398 = vcmp.gt.f32.partialorder %v394, 0.3
      %vm399 = vcmp.gt.f32.partialorder %v395, 0.3
      %v400 = vsel %vm396, 1, 0
      %v401 = vsel %vm397, 1, 0
      %v402 = vsel %vm398, 1, 0
      %v403 = vsel %vm399, 1, 0
      %v404 = vcvt.s32.f32 %v400
      %v405 = vcvt.s32.f32 %v401
      %v406 = vcvt.s32.f32 %v402
      %v407 = vcvt.s32.f32 %v403
      %v408 = vld [vmem:[%s5] sm:$0xff]
      %v409 = vld [vmem:[%s5 + $0x8] sm:$0xff]
      %v410 = vld [vmem:[%s5 + $0x10] sm:$0xff]
      %v411 = vld [vmem:[%s5 + $0x18] sm:$0xff]
      %v412 = vld [vmem:[%s5 + $0x20] sm:$0xff]
      %v413 = vld [vmem:[%s5 + $0x28] sm:$0xff]
      %v414 = vld [vmem:[%s5 + $0x30] sm:$0xff]
      %v415 = vld [vmem:[%s5 + $0x38] sm:$0xff]
      %v416 = vld [vmem:[%s5 + $0x40] sm:$0xff]
      %v417 = vld [vmem:[%s5 + $0x48] sm:$0xff]
      %v418 = vld [vmem:[%s5 + $0x50] sm:$0xff]
      %v419 = vld [vmem:[%s5 + $0x58] sm:$0xff]
      %v420 = vld [vmem:[%s5 + $0x60] sm:$0xff]
      %v421 = vld [vmem:[%s5 + $0x68] sm:$0xff]
      %v422 = vld [vmem:[%s5 + $0x70] sm:$0xff]
      %v423 = vld [vmem:[%s5 + $0x78] sm:$0xff]
      %v424 = vld [vmem:[%s5 + $0x80] sm:$0xff]
      %v425 = vld [vmem:[%s5 + $0x88] sm:$0xff]
      %v426 = vld [vmem:[%s5 + $0x90] sm:$0xff]
      %v427 = vld [vmem:[%s5 + $0x98] sm:$0xff]
      %v428 = vld [vmem:[%s5 + $0xa0] sm:$0xff]
      %v429 = vld [vmem:[%s5 + $0xa8] sm:$0xff]
      %v430 = vld [vmem:[%s5 + $0xb0] sm:$0xff]
      %v431 = vld [vmem:[%s5 + $0xb8] sm:$0xff]
      %v432 = vld [vmem:[%s5 + $0xc0] sm:$0xff]
      %v433 = vld [vmem:[%s5 + $0xc8] sm:$0xff]
      %v434 = vld [vmem:[%s5 + $0xd0] sm:$0xff]
      %v435 = vld [vmem:[%s5 + $0xd8] sm:$0xff]
      %v436 = vld [vmem:[%s5 + $0xe0] sm:$0xff]
      %v437 = vld [vmem:[%s5 + $0xe8] sm:$0xff]
      %v438 = vld [vmem:[%s5 + $0xf0] sm:$0xff]
      %v439 = vld [vmem:[%s5 + $0xf8] sm:$0xff]
      %v440 = vld [vmem:[%s5 + $0x100] sm:$0xff]
      %v441 = vld [vmem:[%s5 + $0x108] sm:$0xff]
      %v442 = vld [vmem:[%s5 + $0x110] sm:$0xff]
      %v443 = vld [vmem:[%s5 + $0x118] sm:$0xff]
      %v444 = vld [vmem:[%s5 + $0x120] sm:$0xff]
      %v445 = vld [vmem:[%s5 + $0x128] sm:$0xff]
      %v446 = vld [vmem:[%s5 + $0x130] sm:$0xff]
      %v447 = vld [vmem:[%s5 + $0x138] sm:$0xff]
      %v448 = vld [vmem:[%s5 + $0x140] sm:$0xff]
      %v449 = vld [vmem:[%s5 + $0x148] sm:$0xff]
      %v450 = vld [vmem:[%s5 + $0x150] sm:$0xff]
      %v451 = vld [vmem:[%s5 + $0x158] sm:$0xff]
      %v452 = vld [vmem:[%s5 + $0x160] sm:$0xff]
      %v453 = vld [vmem:[%s5 + $0x168] sm:$0xff]
      %v454 = vld [vmem:[%s5 + $0x170] sm:$0xff]
      %v455 = vld [vmem:[%s5 + $0x178] sm:$0xff]
      %v456 = vld [vmem:[%s5 + $0x180] sm:$0xff]
      %v457 = vld [vmem:[%s5 + $0x188] sm:$0xff]
      %v458 = vld [vmem:[%s5 + $0x190] sm:$0xff]
      %v459 = vld [vmem:[%s5 + $0x198] sm:$0xff]
      %v460 = vld [vmem:[%s5 + $0x1a0] sm:$0xff]
      %v461 = vld [vmem:[%s5 + $0x1a8] sm:$0xff]
      %v462 = vld [vmem:[%s5 + $0x1b0] sm:$0xff]
      %v463 = vld [vmem:[%s5 + $0x1b8] sm:$0xff]
      %v464 = vld [vmem:[%s5 + $0x1c0] sm:$0xff]
      %v465 = vld [vmem:[%s5 + $0x1c8] sm:$0xff]
      %v466 = vld [vmem:[%s5 + $0x1d0] sm:$0xff]
      %v467 = vld [vmem:[%s5 + $0x1d8] sm:$0xff]
      %v468 = vld [vmem:[%s5 + $0x1e0] sm:$0xff]
      %v469 = vld [vmem:[%s5 + $0x1e8] sm:$0xff]
      %v470 = vld [vmem:[%s5 + $0x1f0] sm:$0xff]
      %v471 = vld [vmem:[%s5 + $0x1f8] sm:$0xff]
      %472 = vmatprep.subr.mxu0 0.0
      %473 = vmatpush1.msra.mxu0 %v423
      %474 = vmatprep.subr.mxu0 0.0
      %475 = vmatpush1.msra.mxu0 %v422
      %476 = vmatprep.subr.mxu0 0.0
      %477 = vmatpush1.msra.mxu0 %v421
      %478 = vmatprep.subr.mxu0 0.0
      %479 = vmatpush1.msra.mxu0 %v420
      %480 = vmatprep.subr.mxu0 0.0
      %481 = vmatpush1.msra.mxu0 %v419
      %482 = vmatprep.subr.mxu0 0.0
      %483 = vmatpush1.msra.mxu0 %v418
      %484 = vmatprep.subr.mxu0 0.0
      %485 = vmatpush1.msra.mxu0 %v417
      %486 = vmatprep.subr.mxu0 0.0
      %487 = vmatpush1.msra.mxu0 %v416
      %488 = vmatprep.subr.mxu0 0.0
      %489 = vmatpush1.msra.mxu0 %v415
      %490 = vmatprep.subr.mxu0 0.0
      %491 = vmatpush1.msra.mxu0 %v414
      %492 = vmatprep.subr.mxu0 0.0
      %493 = vmatpush1.msra.mxu0 %v413
      %494 = vmatprep.subr.mxu0 0.0
      %495 = vmatpush1.msra.mxu0 %v412
      %496 = vmatprep.subr.mxu0 0.0
      %497 = vmatpush1.msra.mxu0 %v411
      %498 = vmatprep.subr.mxu0 0.0
      %499 = vmatpush1.msra.mxu0 %v410
      %500 = vmatprep.subr.mxu0 0.0
      %501 = vmatpush1.msra.mxu0 %v409
      %502 = vmatprep.subr.mxu0 0.0
      %503 = vmatpush1.msra.mxu0 %v408
      %504 = vmatprep.subr.mxu0 0.0
      %505 = vmatpush2.msra.mxu0 %v439
      %506 = vmatprep.subr.mxu0 0.0
      %507 = vmatpush2.msra.mxu0 %v438
      %508 = vmatprep.subr.mxu0 0.0
      %509 = vmatpush2.msra.mxu0 %v437
      %510 = vmatprep.subr.mxu0 0.0
      %511 = vmatpush2.msra.mxu0 %v436
      %512 = vmatprep.subr.mxu0 0.0
      %513 = vmatpush2.msra.mxu0 %v435
      %514 = vmatprep.subr.mxu0 0.0
      %515 = vmatpush2.msra.mxu0 %v434
      %516 = vmatprep.subr.mxu0 0.0
      %517 = vmatpush2.msra.mxu0 %v433
      %518 = vmatprep.subr.mxu0 0.0
      %519 = vmatpush2.msra.mxu0 %v432
      %520 = vmatprep.subr.mxu0 0.0
      %521 = vmatpush2.msra.mxu0 %v431
      %522 = vmatprep.subr.mxu0 0.0
      %523 = vmatpush2.msra.mxu0 %v430
      %524 = vmatprep.subr.mxu0 0.0
      %525 = vmatpush2.msra.mxu0 %v429
      %526 = vmatprep.subr.mxu0 0.0
      %527 = vmatpush2.msra.mxu0 %v428
      %528 = vmatprep.subr.mxu0 0.0
      %529 = vmatpush2.msra.mxu0 %v427
      %530 = vmatprep.subr.mxu0 0.0
      %531 = vmatpush2.msra.mxu0 %v426
      %532 = vmatprep.subr.mxu0 0.0
      %533 = vmatpush2.msra.mxu0 %v425
      %534 = vmatprep.subr.mxu0 0.0
      %535 = vmatpush2.msra.mxu0 %v424
      %536 = vmatprep.mubr.f32.mxu0 %v405
      %537 = vmatmul.mubr.f32.gmra.mxu0 %v404
      %v538 = vpop.f32.mrf.mxu0
      %v539 = vadd.f32 0.0, %v538
      %v540 = vpop.f32.mrf.mxu0
      %541 = vdwg.mxu0
      %542 = vmatprep.subr.mxu0 0.0
      %543 = vmatpush1.msra.mxu0 %v455
      %544 = vmatprep.subr.mxu0 0.0
      %545 = vmatpush1.msra.mxu0 %v454
      %546 = vmatprep.subr.mxu0 0.0
      %547 = vmatpush1.msra.mxu0 %v453
      %548 = vmatprep.subr.mxu0 0.0
      %549 = vmatpush1.msra.mxu0 %v452
      %550 = vmatprep.subr.mxu0 0.0
      %551 = vmatpush1.msra.mxu0 %v451
      %552 = vmatprep.subr.mxu0 0.0
      %553 = vmatpush1.msra.mxu0 %v450
      %554 = vmatprep.subr.mxu0 0.0
      %555 = vmatpush1.msra.mxu0 %v449
      %556 = vmatprep.subr.mxu0 0.0
      %557 = vmatpush1.msra.mxu0 %v448
      %558 = vmatprep.subr.mxu0 0.0
      %559 = vmatpush1.msra.mxu0 %v447
      %560 = vmatprep.subr.mxu0 0.0
      %561 = vmatpush1.msra.mxu0 %v446
      %562 = vmatprep.subr.mxu0 0.0
      %563 = vmatpush1.msra.mxu0 %v445
      %564 = vmatprep.subr.mxu0 0.0
      %565 = vmatpush1.msra.mxu0 %v444
      %566 = vmatprep.subr.mxu0 0.0
      %567 = vmatpush1.msra.mxu0 %v443
      %568 = vmatprep.subr.mxu0 0.0
      %569 = vmatpush1.msra.mxu0 %v442
      %570 = vmatprep.subr.mxu0 0.0
      %571 = vmatpush1.msra.mxu0 %v441
      %572 = vmatprep.subr.mxu0 0.0
      %573 = vmatpush1.msra.mxu0 %v440
      %574 = vmatprep.subr.mxu0 0.0
      %575 = vmatpush2.msra.mxu0 %v471
      %576 = vmatprep.subr.mxu0 0.0
      %577 = vmatpush2.msra.mxu0 %v470
      %578 = vmatprep.subr.mxu0 0.0
      %579 = vmatpush2.msra.mxu0 %v469
      %580 = vmatprep.subr.mxu0 0.0
      %581 = vmatpush2.msra.mxu0 %v468
      %582 = vmatprep.subr.mxu0 0.0
      %583 = vmatpush2.msra.mxu0 %v467
      %584 = vmatprep.subr.mxu0 0.0
      %585 = vmatpush2.msra.mxu0 %v466
      %586 = vmatprep.subr.mxu0 0.0
      %587 = vmatpush2.msra.mxu0 %v465
      %588 = vmatprep.subr.mxu0 0.0
      %589 = vmatpush2.msra.mxu0 %v464
      %590 = vmatprep.subr.mxu0 0.0
      %591 = vmatpush2.msra.mxu0 %v463
      %592 = vmatprep.subr.mxu0 0.0
      %593 = vmatpush2.msra.mxu0 %v462
      %594 = vmatprep.subr.mxu0 0.0
      %595 = vmatpush2.msra.mxu0 %v461
      %596 = vmatprep.subr.mxu0 0.0
      %597 = vmatpush2.msra.mxu0 %v460
      %598 = vmatprep.subr.mxu0 0.0
      %599 = vmatpush2.msra.mxu0 %v459
      %600 = vmatprep.subr.mxu0 0.0
      %601 = vmatpush2.msra.mxu0 %v458
      %602 = vmatprep.subr.mxu0 0.0
      %603 = vmatpush2.msra.mxu0 %v457
      %604 = vmatprep.subr.mxu0 0.0
      %605 = vmatpush2.msra.mxu0 %v456
      %606 = vmatprep.mubr.f32.mxu0 %v407
      %607 = vmatmul.mubr.f32.gmra.mxu0 %v406
      %v608 = vpop.f32.mrf.mxu0
      %v609 = vadd.f32 %v539, %v608
      %v610 = vpop.f32.mrf.mxu0
      %611 = vdwg.mxu0
      %v612 = vstv %s379
      %v613 = vmul.f32 %v609, %v612
      %v614 = vld [vmem:[%s7] sm:$0xff]
      %v615 = vld [vmem:[%s7 + $0x8] sm:$0xff]
      %v616 = vld [vmem:[%s6] sm:$0xff]
      %v617 = vld [vmem:[%s6 + $0x8] sm:$0xff]
      %vm618 = vcmask 64512
      %v620 = vsel %vm618, %v616, 0
      %v623 = vsel %vm618, %v617, 0
      %625 = vmatprep.subr.mxu0 0.0
      %626 = vmatpush1.msra.mxu0 0.0
      %627 = vmatprep.subr.mxu0 0.0
      %628 = vmatpush1.msra.mxu0 0.0
      %629 = vmatprep.subr.mxu0 0.0
      %630 = vmatpush1.msra.mxu0 0.0
      %631 = vmatprep.subr.mxu0 0.0
      %632 = vmatpush1.msra.mxu0 0.0
      %633 = vmatprep.subr.mxu0 0.0
      %634 = vmatpush1.msra.mxu0 0.0
      %635 = vmatprep.subr.mxu0 0.0
      %636 = vmatpush1.msra.mxu0 0.0
      %637 = vmatprep.subr.mxu0 0.0
      %638 = vmatpush1.msra.mxu0 0.0
      %639 = vmatprep.subr.mxu0 0.0
      %640 = vmatpush1.msra.mxu0 0.0
      %641 = vmatprep.subr.mxu0 0.0
      %642 = vmatpush1.msra.mxu0 0.0
      %643 = vmatprep.subr.mxu0 0.0
      %644 = vmatpush1.msra.mxu0 0.0
      %645 = vmatprep.subr.mxu0 0.0
      %646 = vmatpush1.msra.mxu0 0.0
      %647 = vmatprep.subr.mxu0 0.0
      %648 = vmatpush1.msra.mxu0 0.0
      %649 = vmatprep.subr.mxu0 0.0
      %650 = vmatpush1.msra.mxu0 0.0
      %651 = vmatprep.subr.mxu0 0.0
      %652 = vmatpush1.msra.mxu0 0.0
      %653 = vmatprep.subr.mxu0 0.0
      %654 = vmatpush1.msra.mxu0 0.0
      %655 = vmatprep.subr.mxu0 0.0
      %656 = vmatpush1.msra.mxu0 %v613
      %657 = vmatprep.subr.mxu0 0.0
      %658 = vmatpush2.msra.mxu0 0.0
      %659 = vmatprep.subr.mxu0 0.0
      %660 = vmatpush2.msra.mxu0 0.0
      %661 = vmatprep.subr.mxu0 0.0
      %662 = vmatpush2.msra.mxu0 0.0
      %663 = vmatprep.subr.mxu0 0.0
      %664 = vmatpush2.msra.mxu0 0.0
      %665 = vmatprep.subr.mxu0 0.0
      %666 = vmatpush2.msra.mxu0 0.0
      %667 = vmatprep.subr.mxu0 0.0
      %668 = vmatpush2.msra.mxu0 0.0
      %669 = vmatprep.subr.mxu0 0.0
      %670 = vmatpush2.msra.mxu0 0.0
      %671 = vmatprep.subr.mxu0 0.0
      %672 = vmatpush2.msra.mxu0 0.0
      %673 = vmatprep.subr.mxu0 0.0
      %674 = vmatpush2.msra.mxu0 0.0
      %675 = vmatprep.subr.mxu0 0.0
      %676 = vmatpush2.msra.mxu0 0.0
      %677 = vmatprep.subr.mxu0 0.0
      %678 = vmatpush2.msra.mxu0 0.0
      %679 = vmatprep.subr.mxu0 0.0
      %680 = vmatpush2.msra.mxu0 0.0
      %681 = vmatprep.subr.mxu0 0.0
      %682 = vmatpush2.msra.mxu0 0.0
      %683 = vmatprep.subr.mxu0 0.0
      %684 = vmatpush2.msra.mxu0 0.0
      %685 = vmatprep.subr.mxu0 0.0
      %686 = vmatpush2.msra.mxu0 0.0
      %687 = vmatprep.subr.mxu0 0.0
      %688 = vmatpush2.msra.mxu0 0.0
      %689 = vmatprep.mubr.f32.mxu0 0.0
      %690 = vmatmul.mubr.f32.gmra.mxu0 %v620
      %v691 = vpop.f32.mrf.mxu0
      %v692 = vadd.f32 0.0, %v691
      %v693 = vpop.f32.mrf.mxu0
      %694 = vmatprep.mubr.f32.mxu0 0.0
      %695 = vmatmul.mubr.f32.gmra.mxu0 %v623
      %v696 = vpop.f32.mrf.mxu0
      %v697 = vadd.f32 0.0, %v696
      %v698 = vpop.f32.mrf.mxu0
      %699 = vdwg.mxu0
      %v700 = vld [vmem:[%s8] sm:$0xff]
      %v701 = vld [vmem:[%s8 + $0x8] sm:$0xff]
      %v702 = vld [vmem:[%s8 + $0x10] sm:$0xff]
      %v703 = vld [vmem:[%s8 + $0x18] sm:$0xff]
      %v704 = vld [vmem:[%s8 + $0x20] sm:$0xff]
      %v705 = vld [vmem:[%s8 + $0x28] sm:$0xff]
      %v706 = vld [vmem:[%s8 + $0x30] sm:$0xff]
      %v707 = vld [vmem:[%s8 + $0x38] sm:$0xff]
      %v708 = vld [vmem:[%s8 + $0x40] sm:$0xff]
      %v709 = vld [vmem:[%s8 + $0x48] sm:$0xff]
      %v710 = vld [vmem:[%s8 + $0x50] sm:$0xff]
      %v711 = vld [vmem:[%s8 + $0x58] sm:$0xff]
      %v712 = vld [vmem:[%s8 + $0x60] sm:$0xff]
      %v713 = vld [vmem:[%s8 + $0x68] sm:$0xff]
      %v714 = vld [vmem:[%s8 + $0x70] sm:$0xff]
      %v715 = vld [vmem:[%s8 + $0x78] sm:$0xff]
      %716 = vmatprep.subr.mxu0 0.0
      %717 = vmatpush1.msra.mxu0 %v715
      %718 = vmatprep.subr.mxu0 0.0
      %719 = vmatpush1.msra.mxu0 %v714
      %720 = vmatprep.subr.mxu0 0.0
      %721 = vmatpush1.msra.mxu0 %v713
      %722 = vmatprep.subr.mxu0 0.0
      %723 = vmatpush1.msra.mxu0 %v712
      %724 = vmatprep.subr.mxu0 0.0
      %725 = vmatpush1.msra.mxu0 %v711
      %726 = vmatprep.subr.mxu0 0.0
      %727 = vmatpush1.msra.mxu0 %v710
      %728 = vmatprep.subr.mxu0 0.0
      %729 = vmatpush1.msra.mxu0 %v709
      %730 = vmatprep.subr.mxu0 0.0
      %731 = vmatpush1.msra.mxu0 %v708
      %732 = vmatprep.subr.mxu0 0.0
      %733 = vmatpush1.msra.mxu0 %v707
      %734 = vmatprep.subr.mxu0 0.0
      %735 = vmatpush1.msra.mxu0 %v706
      %736 = vmatprep.subr.mxu0 0.0
      %737 = vmatpush1.msra.mxu0 %v705
      %738 = vmatprep.subr.mxu0 0.0
      %739 = vmatpush1.msra.mxu0 %v704
      %740 = vmatprep.subr.mxu0 0.0
      %741 = vmatpush1.msra.mxu0 %v703
      %742 = vmatprep.subr.mxu0 0.0
      %743 = vmatpush1.msra.mxu0 %v702
      %744 = vmatprep.subr.mxu0 0.0
      %745 = vmatpush1.msra.mxu0 %v701
      %746 = vmatprep.subr.mxu0 0.0
      %747 = vmatpush1.msra.mxu0 %v700
      %748 = vmatprep.subr.mxu0 0.0
      %749 = vmatpush2.msra.mxu0 0.0
      %750 = vmatprep.subr.mxu0 0.0
      %751 = vmatpush2.msra.mxu0 0.0
      %752 = vmatprep.subr.mxu0 0.0
      %753 = vmatpush2.msra.mxu0 0.0
      %754 = vmatprep.subr.mxu0 0.0
      %755 = vmatpush2.msra.mxu0 0.0
      %756 = vmatprep.subr.mxu0 0.0
      %757 = vmatpush2.msra.mxu0 0.0
      %758 = vmatprep.subr.mxu0 0.0
      %759 = vmatpush2.msra.mxu0 0.0
      %760 = vmatprep.subr.mxu0 0.0
      %761 = vmatpush2.msra.mxu0 0.0
      %762 = vmatprep.subr.mxu0 0.0
      %763 = vmatpush2.msra.mxu0 0.0
      %764 = vmatprep.subr.mxu0 0.0
      %765 = vmatpush2.msra.mxu0 0.0
      %766 = vmatprep.subr.mxu0 0.0
      %767 = vmatpush2.msra.mxu0 0.0
      %768 = vmatprep.subr.mxu0 0.0
      %769 = vmatpush2.msra.mxu0 0.0
      %770 = vmatprep.subr.mxu0 0.0
      %771 = vmatpush2.msra.mxu0 0.0
      %772 = vmatprep.subr.mxu0 0.0
      %773 = vmatpush2.msra.mxu0 0.0
      %774 = vmatprep.subr.mxu0 0.0
      %775 = vmatpush2.msra.mxu0 0.0
      %776 = vmatprep.subr.mxu0 0.0
      %777 = vmatpush2.msra.mxu0 0.0
      %778 = vmatprep.subr.mxu0 0.0
      %779 = vmatpush2.msra.mxu0 0.0
      %780 = vmatprep.mubr.f32.mxu0 0.0
      %781 = vmatmul.mubr.f32.gmra.mxu0 %v692
      %v782 = vpop.f32.mrf.mxu0
      %v783 = vadd.f32 0.0, %v782
      %v784 = vpop.f32.mrf.mxu0
      %785 = vmatprep.mubr.f32.mxu0 0.0
      %786 = vmatmul.mubr.f32.gmra.mxu0 %v697
      %v787 = vpop.f32.mrf.mxu0
      %v788 = vadd.f32 0.0, %v787
      %v789 = vpop.f32.mrf.mxu0
      %790 = vdwg.mxu0
      %792 = vset.pattern.permute.xlu0 0
      %793 = vperm.xlu0 %792, %v614
      %v794 = vpop.permute.xlu0 %793
      %797 = vset.pattern.permute.xlu0 0
      %798 = vperm.xlu0 %797, %v615
      %v799 = vpop.permute.xlu0 %798
      %v801 = vadd.f32 %v794, %v783
      %v802 = vadd.f32 %v799, %v788
      %s803 = scalar_lea.vmem %s6, 16
      %v804 = vld [vmem:[%s803] sm:$0xff]
      %v805 = vld [vmem:[%s803 + $0x8] sm:$0xff]
      %v807 = vsel %vm618, %v804, 0
      %v810 = vsel %vm618, %v805, 0
      %812 = vmatprep.subr.mxu0 0.0
      %813 = vmatpush1.msra.mxu0 0.0
      %814 = vmatprep.subr.mxu0 0.0
      %815 = vmatpush1.msra.mxu0 0.0
      %816 = vmatprep.subr.mxu0 0.0
      %817 = vmatpush1.msra.mxu0 0.0
      %818 = vmatprep.subr.mxu0 0.0
      %819 = vmatpush1.msra.mxu0 0.0
      %820 = vmatprep.subr.mxu0 0.0
      %821 = vmatpush1.msra.mxu0 0.0
      %822 = vmatprep.subr.mxu0 0.0
      %823 = vmatpush1.msra.mxu0 0.0
      %824 = vmatprep.subr.mxu0 0.0
      %825 = vmatpush1.msra.mxu0 0.0
      %826 = vmatprep.subr.mxu0 0.0
      %827 = vmatpush1.msra.mxu0 0.0
      %828 = vmatprep.subr.mxu0 0.0
      %829 = vmatpush1.msra.mxu0 0.0
      %830 = vmatprep.subr.mxu0 0.0
      %831 = vmatpush1.msra.mxu0 0.0
      %832 = vmatprep.subr.mxu0 0.0
      %833 = vmatpush1.msra.mxu0 0.0
      %834 = vmatprep.subr.mxu0 0.0
      %835 = vmatpush1.msra.mxu0 0.0
      %836 = vmatprep.subr.mxu0 0.0
      %837 = vmatpush1.msra.mxu0 0.0
      %838 = vmatprep.subr.mxu0 0.0
      %839 = vmatpush1.msra.mxu0 0.0
      %840 = vmatprep.subr.mxu0 0.0
      %841 = vmatpush1.msra.mxu0 0.0
      %842 = vmatprep.subr.mxu0 0.0
      %843 = vmatpush1.msra.mxu0 %v613
      %844 = vmatprep.subr.mxu0 0.0
      %845 = vmatpush2.msra.mxu0 0.0
      %846 = vmatprep.subr.mxu0 0.0
      %847 = vmatpush2.msra.mxu0 0.0
      %848 = vmatprep.subr.mxu0 0.0
      %849 = vmatpush2.msra.mxu0 0.0
      %850 = vmatprep.subr.mxu0 0.0
      %851 = vmatpush2.msra.mxu0 0.0
      %852 = vmatprep.subr.mxu0 0.0
      %853 = vmatpush2.msra.mxu0 0.0
      %854 = vmatprep.subr.mxu0 0.0
      %855 = vmatpush2.msra.mxu0 0.0
      %856 = vmatprep.subr.mxu0 0.0
      %857 = vmatpush2.msra.mxu0 0.0
      %858 = vmatprep.subr.mxu0 0.0
      %859 = vmatpush2.msra.mxu0 0.0
      %860 = vmatprep.subr.mxu0 0.0
      %861 = vmatpush2.msra.mxu0 0.0
      %862 = vmatprep.subr.mxu0 0.0
      %863 = vmatpush2.msra.mxu0 0.0
      %864 = vmatprep.subr.mxu0 0.0
      %865 = vmatpush2.msra.mxu0 0.0
      %866 = vmatprep.subr.mxu0 0.0
      %867 = vmatpush2.msra.mxu0 0.0
      %868 = vmatprep.subr.mxu0 0.0
      %869 = vmatpush2.msra.mxu0 0.0
      %870 = vmatprep.subr.mxu0 0.0
      %871 = vmatpush2.msra.mxu0 0.0
      %872 = vmatprep.subr.mxu0 0.0
      %873 = vmatpush2.msra.mxu0 0.0
      %874 = vmatprep.subr.mxu0 0.0
      %875 = vmatpush2.msra.mxu0 0.0
      %876 = vmatprep.mubr.f32.mxu0 0.0
      %877 = vmatmul.mubr.f32.gmra.mxu0 %v807
      %v878 = vpop.f32.mrf.mxu0
      %v879 = vadd.f32 0.0, %v878
      %v880 = vpop.f32.mrf.mxu0
      %881 = vmatprep.mubr.f32.mxu0 0.0
      %882 = vmatmul.mubr.f32.gmra.mxu0 %v810
      %v883 = vpop.f32.mrf.mxu0
      %v884 = vadd.f32 0.0, %v883
      %v885 = vpop.f32.mrf.mxu0
      %886 = vdwg.mxu0
      %s887 = scalar_lea.vmem %s8, 128
      %v888 = vld [vmem:[%s887] sm:$0xff]
      %v889 = vld [vmem:[%s887 + $0x8] sm:$0xff]
      %v890 = vld [vmem:[%s887 + $0x10] sm:$0xff]
      %v891 = vld [vmem:[%s887 + $0x18] sm:$0xff]
      %v892 = vld [vmem:[%s887 + $0x20] sm:$0xff]
      %v893 = vld [vmem:[%s887 + $0x28] sm:$0xff]
      %v894 = vld [vmem:[%s887 + $0x30] sm:$0xff]
      %v895 = vld [vmem:[%s887 + $0x38] sm:$0xff]
      %v896 = vld [vmem:[%s887 + $0x40] sm:$0xff]
      %v897 = vld [vmem:[%s887 + $0x48] sm:$0xff]
      %v898 = vld [vmem:[%s887 + $0x50] sm:$0xff]
      %v899 = vld [vmem:[%s887 + $0x58] sm:$0xff]
      %v900 = vld [vmem:[%s887 + $0x60] sm:$0xff]
      %v901 = vld [vmem:[%s887 + $0x68] sm:$0xff]
      %v902 = vld [vmem:[%s887 + $0x70] sm:$0xff]
      %v903 = vld [vmem:[%s887 + $0x78] sm:$0xff]
      %904 = vmatprep.subr.mxu0 0.0
      %905 = vmatpush1.msra.mxu0 %v903
      %906 = vmatprep.subr.mxu0 0.0
      %907 = vmatpush1.msra.mxu0 %v902
      %908 = vmatprep.subr.mxu0 0.0
      %909 = vmatpush1.msra.mxu0 %v901
      %910 = vmatprep.subr.mxu0 0.0
      %911 = vmatpush1.msra.mxu0 %v900
      %912 = vmatprep.subr.mxu0 0.0
      %913 = vmatpush1.msra.mxu0 %v899
      %914 = vmatprep.subr.mxu0 0.0
      %915 = vmatpush1.msra.mxu0 %v898
      %916 = vmatprep.subr.mxu0 0.0
      %917 = vmatpush1.msra.mxu0 %v897
      %918 = vmatprep.subr.mxu0 0.0
      %919 = vmatpush1.msra.mxu0 %v896
      %920 = vmatprep.subr.mxu0 0.0
      %921 = vmatpush1.msra.mxu0 %v895
      %922 = vmatprep.subr.mxu0 0.0
      %923 = vmatpush1.msra.mxu0 %v894
      %924 = vmatprep.subr.mxu0 0.0
      %925 = vmatpush1.msra.mxu0 %v893
      %926 = vmatprep.subr.mxu0 0.0
      %927 = vmatpush1.msra.mxu0 %v892
      %928 = vmatprep.subr.mxu0 0.0
      %929 = vmatpush1.msra.mxu0 %v891
      %930 = vmatprep.subr.mxu0 0.0
      %931 = vmatpush1.msra.mxu0 %v890
      %932 = vmatprep.subr.mxu0 0.0
      %933 = vmatpush1.msra.mxu0 %v889
      %934 = vmatprep.subr.mxu0 0.0
      %935 = vmatpush1.msra.mxu0 %v888
      %936 = vmatprep.subr.mxu0 0.0
      %937 = vmatpush2.msra.mxu0 0.0
      %938 = vmatprep.subr.mxu0 0.0
      %939 = vmatpush2.msra.mxu0 0.0
      %940 = vmatprep.subr.mxu0 0.0
      %941 = vmatpush2.msra.mxu0 0.0
      %942 = vmatprep.subr.mxu0 0.0
      %943 = vmatpush2.msra.mxu0 0.0
      %944 = vmatprep.subr.mxu0 0.0
      %945 = vmatpush2.msra.mxu0 0.0
      %946 = vmatprep.subr.mxu0 0.0
      %947 = vmatpush2.msra.mxu0 0.0
      %948 = vmatprep.subr.mxu0 0.0
      %949 = vmatpush2.msra.mxu0 0.0
      %950 = vmatprep.subr.mxu0 0.0
      %951 = vmatpush2.msra.mxu0 0.0
      %952 = vmatprep.subr.mxu0 0.0
      %953 = vmatpush2.msra.mxu0 0.0
      %954 = vmatprep.subr.mxu0 0.0
      %955 = vmatpush2.msra.mxu0 0.0
      %956 = vmatprep.subr.mxu0 0.0
      %957 = vmatpush2.msra.mxu0 0.0
      %958 = vmatprep.subr.mxu0 0.0
      %959 = vmatpush2.msra.mxu0 0.0
      %960 = vmatprep.subr.mxu0 0.0
      %961 = vmatpush2.msra.mxu0 0.0
      %962 = vmatprep.subr.mxu0 0.0
      %963 = vmatpush2.msra.mxu0 0.0
      %964 = vmatprep.subr.mxu0 0.0
      %965 = vmatpush2.msra.mxu0 0.0
      %966 = vmatprep.subr.mxu0 0.0
      %967 = vmatpush2.msra.mxu0 0.0
      %968 = vmatprep.mubr.f32.mxu0 0.0
      %969 = vmatmul.mubr.f32.gmra.mxu0 %v879
      %v970 = vpop.f32.mrf.mxu0
      %v971 = vadd.f32 0.0, %v970
      %v972 = vpop.f32.mrf.mxu0
      %973 = vmatprep.mubr.f32.mxu0 0.0
      %974 = vmatmul.mubr.f32.gmra.mxu0 %v884
      %v975 = vpop.f32.mrf.mxu0
      %v976 = vadd.f32 0.0, %v975
      %v977 = vpop.f32.mrf.mxu0
      %978 = vdwg.mxu0
      %v979 = vadd.f32 %v801, %v971
      %v980 = vadd.f32 %v802, %v976
      %s981 = scalar_lea.vmem %s6, 32
      %v982 = vld [vmem:[%s981] sm:$0xff]
      %v983 = vld [vmem:[%s981 + $0x8] sm:$0xff]
      %v985 = vsel %vm618, %v982, 0
      %v988 = vsel %vm618, %v983, 0
      %990 = vmatprep.subr.mxu0 0.0
      %991 = vmatpush1.msra.mxu0 0.0
      %992 = vmatprep.subr.mxu0 0.0
      %993 = vmatpush1.msra.mxu0 0.0
      %994 = vmatprep.subr.mxu0 0.0
      %995 = vmatpush1.msra.mxu0 0.0
      %996 = vmatprep.subr.mxu0 0.0
      %997 = vmatpush1.msra.mxu0 0.0
      %998 = vmatprep.subr.mxu0 0.0
      %999 = vmatpush1.msra.mxu0 0.0
      %1000 = vmatprep.subr.mxu0 0.0
      %1001 = vmatpush1.msra.mxu0 0.0
      %1002 = vmatprep.subr.mxu0 0.0
      %1003 = vmatpush1.msra.mxu0 0.0
      %1004 = vmatprep.subr.mxu0 0.0
      %1005 = vmatpush1.msra.mxu0 0.0
      %1006 = vmatprep.subr.mxu0 0.0
      %1007 = vmatpush1.msra.mxu0 0.0
      %1008 = vmatprep.subr.mxu0 0.0
      %1009 = vmatpush1.msra.mxu0 0.0
      %1010 = vmatprep.subr.mxu0 0.0
      %1011 = vmatpush1.msra.mxu0 0.0
      %1012 = vmatprep.subr.mxu0 0.0
      %1013 = vmatpush1.msra.mxu0 0.0
      %1014 = vmatprep.subr.mxu0 0.0
      %1015 = vmatpush1.msra.mxu0 0.0
      %1016 = vmatprep.subr.mxu0 0.0
      %1017 = vmatpush1.msra.mxu0 0.0
      %1018 = vmatprep.subr.mxu0 0.0
      %1019 = vmatpush1.msra.mxu0 0.0
      %1020 = vmatprep.subr.mxu0 0.0
      %1021 = vmatpush1.msra.mxu0 %v613
      %1022 = vmatprep.subr.mxu0 0.0
      %1023 = vmatpush2.msra.mxu0 0.0
      %1024 = vmatprep.subr.mxu0 0.0
      %1025 = vmatpush2.msra.mxu0 0.0
      %1026 = vmatprep.subr.mxu0 0.0
      %1027 = vmatpush2.msra.mxu0 0.0
      %1028 = vmatprep.subr.mxu0 0.0
      %1029 = vmatpush2.msra.mxu0 0.0
      %1030 = vmatprep.subr.mxu0 0.0
      %1031 = vmatpush2.msra.mxu0 0.0
      %1032 = vmatprep.subr.mxu0 0.0
      %1033 = vmatpush2.msra.mxu0 0.0
      %1034 = vmatprep.subr.mxu0 0.0
      %1035 = vmatpush2.msra.mxu0 0.0
      %1036 = vmatprep.subr.mxu0 0.0
      %1037 = vmatpush2.msra.mxu0 0.0
      %1038 = vmatprep.subr.mxu0 0.0
      %1039 = vmatpush2.msra.mxu0 0.0
      %1040 = vmatprep.subr.mxu0 0.0
      %1041 = vmatpush2.msra.mxu0 0.0
      %1042 = vmatprep.subr.mxu0 0.0
      %1043 = vmatpush2.msra.mxu0 0.0
      %1044 = vmatprep.subr.mxu0 0.0
      %1045 = vmatpush2.msra.mxu0 0.0
      %1046 = vmatprep.subr.mxu0 0.0
      %1047 = vmatpush2.msra.mxu0 0.0
      %1048 = vmatprep.subr.mxu0 0.0
      %1049 = vmatpush2.msra.mxu0 0.0
      %1050 = vmatprep.subr.mxu0 0.0
      %1051 = vmatpush2.msra.mxu0 0.0
      %1052 = vmatprep.subr.mxu0 0.0
      %1053 = vmatpush2.msra.mxu0 0.0
      %1054 = vmatprep.mubr.f32.mxu0 0.0
      %1055 = vmatmul.mubr.f32.gmra.mxu0 %v985
      %v1056 = vpop.f32.mrf.mxu0
      %v1057 = vadd.f32 0.0, %v1056
      %v1058 = vpop.f32.mrf.mxu0
      %1059 = vmatprep.mubr.f32.mxu0 0.0
      %1060 = vmatmul.mubr.f32.gmra.mxu0 %v988
      %v1061 = vpop.f32.mrf.mxu0
      %v1062 = vadd.f32 0.0, %v1061
      %v1063 = vpop.f32.mrf.mxu0
      %1064 = vdwg.mxu0
      %s1065 = scalar_lea.vmem %s8, 256
      %v1066 = vld [vmem:[%s1065] sm:$0xff]
      %v1067 = vld [vmem:[%s1065 + $0x8] sm:$0xff]
      %v1068 = vld [vmem:[%s1065 + $0x10] sm:$0xff]
      %v1069 = vld [vmem:[%s1065 + $0x18] sm:$0xff]
      %v1070 = vld [vmem:[%s1065 + $0x20] sm:$0xff]
      %v1071 = vld [vmem:[%s1065 + $0x28] sm:$0xff]
      %v1072 = vld [vmem:[%s1065 + $0x30] sm:$0xff]
      %v1073 = vld [vmem:[%s1065 + $0x38] sm:$0xff]
      %v1074 = vld [vmem:[%s1065 + $0x40] sm:$0xff]
      %v1075 = vld [vmem:[%s1065 + $0x48] sm:$0xff]
      %v1076 = vld [vmem:[%s1065 + $0x50] sm:$0xff]
      %v1077 = vld [vmem:[%s1065 + $0x58] sm:$0xff]
      %v1078 = vld [vmem:[%s1065 + $0x60] sm:$0xff]
      %v1079 = vld [vmem:[%s1065 + $0x68] sm:$0xff]
      %v1080 = vld [vmem:[%s1065 + $0x70] sm:$0xff]
      %v1081 = vld [vmem:[%s1065 + $0x78] sm:$0xff]
      %1082 = vmatprep.subr.mxu0 0.0
      %1083 = vmatpush1.msra.mxu0 %v1081
      %1084 = vmatprep.subr.mxu0 0.0
      %1085 = vmatpush1.msra.mxu0 %v1080
      %1086 = vmatprep.subr.mxu0 0.0
      %1087 = vmatpush1.msra.mxu0 %v1079
      %1088 = vmatprep.subr.mxu0 0.0
      %1089 = vmatpush1.msra.mxu0 %v1078
      %1090 = vmatprep.subr.mxu0 0.0
      %1091 = vmatpush1.msra.mxu0 %v1077
      %1092 = vmatprep.subr.mxu0 0.0
      %1093 = vmatpush1.msra.mxu0 %v1076
      %1094 = vmatprep.subr.mxu0 0.0
      %1095 = vmatpush1.msra.mxu0 %v1075
      %1096 = vmatprep.subr.mxu0 0.0
      %1097 = vmatpush1.msra.mxu0 %v1074
      %1098 = vmatprep.subr.mxu0 0.0
      %1099 = vmatpush1.msra.mxu0 %v1073
      %1100 = vmatprep.subr.mxu0 0.0
      %1101 = vmatpush1.msra.mxu0 %v1072
      %1102 = vmatprep.subr.mxu0 0.0
      %1103 = vmatpush1.msra.mxu0 %v1071
      %1104 = vmatprep.subr.mxu0 0.0
      %1105 = vmatpush1.msra.mxu0 %v1070
      %1106 = vmatprep.subr.mxu0 0.0
      %1107 = vmatpush1.msra.mxu0 %v1069
      %1108 = vmatprep.subr.mxu0 0.0
      %1109 = vmatpush1.msra.mxu0 %v1068
      %1110 = vmatprep.subr.mxu0 0.0
      %1111 = vmatpush1.msra.mxu0 %v1067
      %1112 = vmatprep.subr.mxu0 0.0
      %1113 = vmatpush1.msra.mxu0 %v1066
      %1114 = vmatprep.subr.mxu0 0.0
      %1115 = vmatpush2.msra.mxu0 0.0
      %1116 = vmatprep.subr.mxu0 0.0
      %1117 = vmatpush2.msra.mxu0 0.0
      %1118 = vmatprep.subr.mxu0 0.0
      %1119 = vmatpush2.msra.mxu0 0.0
      %1120 = vmatprep.subr.mxu0 0.0
      %1121 = vmatpush2.msra.mxu0 0.0
      %1122 = vmatprep.subr.mxu0 0.0
      %1123 = vmatpush2.msra.mxu0 0.0
      %1124 = vmatprep.subr.mxu0 0.0
      %1125 = vmatpush2.msra.mxu0 0.0
      %1126 = vmatprep.subr.mxu0 0.0
      %1127 = vmatpush2.msra.mxu0 0.0
      %1128 = vmatprep.subr.mxu0 0.0
      %1129 = vmatpush2.msra.mxu0 0.0
      %1130 = vmatprep.subr.mxu0 0.0
      %1131 = vmatpush2.msra.mxu0 0.0
      %1132 = vmatprep.subr.mxu0 0.0
      %1133 = vmatpush2.msra.mxu0 0.0
      %1134 = vmatprep.subr.mxu0 0.0
      %1135 = vmatpush2.msra.mxu0 0.0
      %1136 = vmatprep.subr.mxu0 0.0
      %1137 = vmatpush2.msra.mxu0 0.0
      %1138 = vmatprep.subr.mxu0 0.0
      %1139 = vmatpush2.msra.mxu0 0.0
      %1140 = vmatprep.subr.mxu0 0.0
      %1141 = vmatpush2.msra.mxu0 0.0
      %1142 = vmatprep.subr.mxu0 0.0
      %1143 = vmatpush2.msra.mxu0 0.0
      %1144 = vmatprep.subr.mxu0 0.0
      %1145 = vmatpush2.msra.mxu0 0.0
      %1146 = vmatprep.mubr.f32.mxu0 0.0
      %1147 = vmatmul.mubr.f32.gmra.mxu0 %v1057
      %v1148 = vpop.f32.mrf.mxu0
      %v1149 = vadd.f32 0.0, %v1148
      %v1150 = vpop.f32.mrf.mxu0
      %1151 = vmatprep.mubr.f32.mxu0 0.0
      %1152 = vmatmul.mubr.f32.gmra.mxu0 %v1062
      %v1153 = vpop.f32.mrf.mxu0
      %v1154 = vadd.f32 0.0, %v1153
      %v1155 = vpop.f32.mrf.mxu0
      %1156 = vdwg.mxu0
      %v1157 = vadd.f32 %v979, %v1149
      %v1158 = vadd.f32 %v980, %v1154
      %s1159 = scalar_lea.vmem %s6, 48
      %v1160 = vld [vmem:[%s1159] sm:$0xff]
      %v1161 = vld [vmem:[%s1159 + $0x8] sm:$0xff]
      %v1163 = vsel %vm618, %v1160, 0
      %v1166 = vsel %vm618, %v1161, 0
      %1168 = vmatprep.subr.mxu0 0.0
      %1169 = vmatpush1.msra.mxu0 0.0
      %1170 = vmatprep.subr.mxu0 0.0
      %1171 = vmatpush1.msra.mxu0 0.0
      %1172 = vmatprep.subr.mxu0 0.0
      %1173 = vmatpush1.msra.mxu0 0.0
      %1174 = vmatprep.subr.mxu0 0.0
      %1175 = vmatpush1.msra.mxu0 0.0
      %1176 = vmatprep.subr.mxu0 0.0
      %1177 = vmatpush1.msra.mxu0 0.0
      %1178 = vmatprep.subr.mxu0 0.0
      %1179 = vmatpush1.msra.mxu0 0.0
      %1180 = vmatprep.subr.mxu0 0.0
      %1181 = vmatpush1.msra.mxu0 0.0
      %1182 = vmatprep.subr.mxu0 0.0
      %1183 = vmatpush1.msra.mxu0 0.0
      %1184 = vmatprep.subr.mxu0 0.0
      %1185 = vmatpush1.msra.mxu0 0.0
      %1186 = vmatprep.subr.mxu0 0.0
      %1187 = vmatpush1.msra.mxu0 0.0
      %1188 = vmatprep.subr.mxu0 0.0
      %1189 = vmatpush1.msra.mxu0 0.0
      %1190 = vmatprep.subr.mxu0 0.0
      %1191 = vmatpush1.msra.mxu0 0.0
      %1192 = vmatprep.subr.mxu0 0.0
      %1193 = vmatpush1.msra.mxu0 0.0
      %1194 = vmatprep.subr.mxu0 0.0
      %1195 = vmatpush1.msra.mxu0 0.0
      %1196 = vmatprep.subr.mxu0 0.0
      %1197 = vmatpush1.msra.mxu0 0.0
      %1198 = vmatprep.subr.mxu0 0.0
      %1199 = vmatpush1.msra.mxu0 %v613
      %1200 = vmatprep.subr.mxu0 0.0
      %1201 = vmatpush2.msra.mxu0 0.0
      %1202 = vmatprep.subr.mxu0 0.0
      %1203 = vmatpush2.msra.mxu0 0.0
      %1204 = vmatprep.subr.mxu0 0.0
      %1205 = vmatpush2.msra.mxu0 0.0
      %1206 = vmatprep.subr.mxu0 0.0
      %1207 = vmatpush2.msra.mxu0 0.0
      %1208 = vmatprep.subr.mxu0 0.0
      %1209 = vmatpush2.msra.mxu0 0.0
      %1210 = vmatprep.subr.mxu0 0.0
      %1211 = vmatpush2.msra.mxu0 0.0
      %1212 = vmatprep.subr.mxu0 0.0
      %1213 = vmatpush2.msra.mxu0 0.0
      %1214 = vmatprep.subr.mxu0 0.0
      %1215 = vmatpush2.msra.mxu0 0.0
      %1216 = vmatprep.subr.mxu0 0.0
      %1217 = vmatpush2.msra.mxu0 0.0
      %1218 = vmatprep.subr.mxu0 0.0
      %1219 = vmatpush2.msra.mxu0 0.0
      %1220 = vmatprep.subr.mxu0 0.0
      %1221 = vmatpush2.msra.mxu0 0.0
      %1222 = vmatprep.subr.mxu0 0.0
      %1223 = vmatpush2.msra.mxu0 0.0
      %1224 = vmatprep.subr.mxu0 0.0
      %1225 = vmatpush2.msra.mxu0 0.0
      %1226 = vmatprep.subr.mxu0 0.0
      %1227 = vmatpush2.msra.mxu0 0.0
      %1228 = vmatprep.subr.mxu0 0.0
      %1229 = vmatpush2.msra.mxu0 0.0
      %1230 = vmatprep.subr.mxu0 0.0
      %1231 = vmatpush2.msra.mxu0 0.0
      %1232 = vmatprep.mubr.f32.mxu0 0.0
      %1233 = vmatmul.mubr.f32.gmra.mxu0 %v1163
      %v1234 = vpop.f32.mrf.mxu0
      %v1235 = vadd.f32 0.0, %v1234
      %v1236 = vpop.f32.mrf.mxu0
      %1237 = vmatprep.mubr.f32.mxu0 0.0
      %1238 = vmatmul.mubr.f32.gmra.mxu0 %v1166
      %v1239 = vpop.f32.mrf.mxu0
      %v1240 = vadd.f32 0.0, %v1239
      %v1241 = vpop.f32.mrf.mxu0
      %1242 = vdwg.mxu0
      %s1243 = scalar_lea.vmem %s8, 384
      %v1244 = vld [vmem:[%s1243] sm:$0xff]
      %v1245 = vld [vmem:[%s1243 + $0x8] sm:$0xff]
      %v1246 = vld [vmem:[%s1243 + $0x10] sm:$0xff]
      %v1247 = vld [vmem:[%s1243 + $0x18] sm:$0xff]
      %v1248 = vld [vmem:[%s1243 + $0x20] sm:$0xff]
      %v1249 = vld [vmem:[%s1243 + $0x28] sm:$0xff]
      %v1250 = vld [vmem:[%s1243 + $0x30] sm:$0xff]
      %v1251 = vld [vmem:[%s1243 + $0x38] sm:$0xff]
      %v1252 = vld [vmem:[%s1243 + $0x40] sm:$0xff]
      %v1253 = vld [vmem:[%s1243 + $0x48] sm:$0xff]
      %v1254 = vld [vmem:[%s1243 + $0x50] sm:$0xff]
      %v1255 = vld [vmem:[%s1243 + $0x58] sm:$0xff]
      %v1256 = vld [vmem:[%s1243 + $0x60] sm:$0xff]
      %v1257 = vld [vmem:[%s1243 + $0x68] sm:$0xff]
      %v1258 = vld [vmem:[%s1243 + $0x70] sm:$0xff]
      %v1259 = vld [vmem:[%s1243 + $0x78] sm:$0xff]
      %1260 = vmatprep.subr.mxu0 0.0
      %1261 = vmatpush1.msra.mxu0 %v1259
      %1262 = vmatprep.subr.mxu0 0.0
      %1263 = vmatpush1.msra.mxu0 %v1258
      %1264 = vmatprep.subr.mxu0 0.0
      %1265 = vmatpush1.msra.mxu0 %v1257
      %1266 = vmatprep.subr.mxu0 0.0
      %1267 = vmatpush1.msra.mxu0 %v1256
      %1268 = vmatprep.subr.mxu0 0.0
      %1269 = vmatpush1.msra.mxu0 %v1255
      %1270 = vmatprep.subr.mxu0 0.0
      %1271 = vmatpush1.msra.mxu0 %v1254
      %1272 = vmatprep.subr.mxu0 0.0
      %1273 = vmatpush1.msra.mxu0 %v1253
      %1274 = vmatprep.subr.mxu0 0.0
      %1275 = vmatpush1.msra.mxu0 %v1252
      %1276 = vmatprep.subr.mxu0 0.0
      %1277 = vmatpush1.msra.mxu0 %v1251
      %1278 = vmatprep.subr.mxu0 0.0
      %1279 = vmatpush1.msra.mxu0 %v1250
      %1280 = vmatprep.subr.mxu0 0.0
      %1281 = vmatpush1.msra.mxu0 %v1249
      %1282 = vmatprep.subr.mxu0 0.0
      %1283 = vmatpush1.msra.mxu0 %v1248
      %1284 = vmatprep.subr.mxu0 0.0
      %1285 = vmatpush1.msra.mxu0 %v1247
      %1286 = vmatprep.subr.mxu0 0.0
      %1287 = vmatpush1.msra.mxu0 %v1246
      %1288 = vmatprep.subr.mxu0 0.0
      %1289 = vmatpush1.msra.mxu0 %v1245
      %1290 = vmatprep.subr.mxu0 0.0
      %1291 = vmatpush1.msra.mxu0 %v1244
      %1292 = vmatprep.subr.mxu0 0.0
      %1293 = vmatpush2.msra.mxu0 0.0
      %1294 = vmatprep.subr.mxu0 0.0
      %1295 = vmatpush2.msra.mxu0 0.0
      %1296 = vmatprep.subr.mxu0 0.0
      %1297 = vmatpush2.msra.mxu0 0.0
      %1298 = vmatprep.subr.mxu0 0.0
      %1299 = vmatpush2.msra.mxu0 0.0
      %1300 = vmatprep.subr.mxu0 0.0
      %1301 = vmatpush2.msra.mxu0 0.0
      %1302 = vmatprep.subr.mxu0 0.0
      %1303 = vmatpush2.msra.mxu0 0.0
      %1304 = vmatprep.subr.mxu0 0.0
      %1305 = vmatpush2.msra.mxu0 0.0
      %1306 = vmatprep.subr.mxu0 0.0
      %1307 = vmatpush2.msra.mxu0 0.0
      %1308 = vmatprep.subr.mxu0 0.0
      %1309 = vmatpush2.msra.mxu0 0.0
      %1310 = vmatprep.subr.mxu0 0.0
      %1311 = vmatpush2.msra.mxu0 0.0
      %1312 = vmatprep.subr.mxu0 0.0
      %1313 = vmatpush2.msra.mxu0 0.0
      %1314 = vmatprep.subr.mxu0 0.0
      %1315 = vmatpush2.msra.mxu0 0.0
      %1316 = vmatprep.subr.mxu0 0.0
      %1317 = vmatpush2.msra.mxu0 0.0
      %1318 = vmatprep.subr.mxu0 0.0
      %1319 = vmatpush2.msra.mxu0 0.0
      %1320 = vmatprep.subr.mxu0 0.0
      %1321 = vmatpush2.msra.mxu0 0.0
      %1322 = vmatprep.subr.mxu0 0.0
      %1323 = vmatpush2.msra.mxu0 0.0
      %1324 = vmatprep.mubr.f32.mxu0 0.0
      %1325 = vmatmul.mubr.f32.gmra.mxu0 %v1235
      %v1326 = vpop.f32.mrf.mxu0
      %v1327 = vadd.f32 0.0, %v1326
      %v1328 = vpop.f32.mrf.mxu0
      %1329 = vmatprep.mubr.f32.mxu0 0.0
      %1330 = vmatmul.mubr.f32.gmra.mxu0 %v1240
      %v1331 = vpop.f32.mrf.mxu0
      %v1332 = vadd.f32 0.0, %v1331
      %v1333 = vpop.f32.mrf.mxu0
      %1334 = vdwg.mxu0
      %v1335 = vadd.f32 %v1157, %v1327
      %v1336 = vadd.f32 %v1158, %v1332
      %s1337 = scalar_lea.vmem %s6, 64
      %v1338 = vld [vmem:[%s1337] sm:$0xff]
      %v1339 = vld [vmem:[%s1337 + $0x8] sm:$0xff]
      %v1341 = vsel %vm618, %v1338, 0
      %v1344 = vsel %vm618, %v1339, 0
      %1346 = vmatprep.subr.mxu0 0.0
      %1347 = vmatpush1.msra.mxu0 0.0
      %1348 = vmatprep.subr.mxu0 0.0
      %1349 = vmatpush1.msra.mxu0 0.0
      %1350 = vmatprep.subr.mxu0 0.0
      %1351 = vmatpush1.msra.mxu0 0.0
      %1352 = vmatprep.subr.mxu0 0.0
      %1353 = vmatpush1.msra.mxu0 0.0
      %1354 = vmatprep.subr.mxu0 0.0
      %1355 = vmatpush1.msra.mxu0 0.0
      %1356 = vmatprep.subr.mxu0 0.0
      %1357 = vmatpush1.msra.mxu0 0.0
      %1358 = vmatprep.subr.mxu0 0.0
      %1359 = vmatpush1.msra.mxu0 0.0
      %1360 = vmatprep.subr.mxu0 0.0
      %1361 = vmatpush1.msra.mxu0 0.0
      %1362 = vmatprep.subr.mxu0 0.0
      %1363 = vmatpush1.msra.mxu0 0.0
      %1364 = vmatprep.subr.mxu0 0.0
      %1365 = vmatpush1.msra.mxu0 0.0
      %1366 = vmatprep.subr.mxu0 0.0
      %1367 = vmatpush1.msra.mxu0 0.0
      %1368 = vmatprep.subr.mxu0 0.0
      %1369 = vmatpush1.msra.mxu0 0.0
      %1370 = vmatprep.subr.mxu0 0.0
      %1371 = vmatpush1.msra.mxu0 0.0
      %1372 = vmatprep.subr.mxu0 0.0
      %1373 = vmatpush1.msra.mxu0 0.0
      %1374 = vmatprep.subr.mxu0 0.0
      %1375 = vmatpush1.msra.mxu0 0.0
      %1376 = vmatprep.subr.mxu0 0.0
      %1377 = vmatpush1.msra.mxu0 %v613
      %1378 = vmatprep.subr.mxu0 0.0
      %1379 = vmatpush2.msra.mxu0 0.0
      %1380 = vmatprep.subr.mxu0 0.0
      %1381 = vmatpush2.msra.mxu0 0.0
      %1382 = vmatprep.subr.mxu0 0.0
      %1383 = vmatpush2.msra.mxu0 0.0
      %1384 = vmatprep.subr.mxu0 0.0
      %1385 = vmatpush2.msra.mxu0 0.0
      %1386 = vmatprep.subr.mxu0 0.0
      %1387 = vmatpush2.msra.mxu0 0.0
      %1388 = vmatprep.subr.mxu0 0.0
      %1389 = vmatpush2.msra.mxu0 0.0
      %1390 = vmatprep.subr.mxu0 0.0
      %1391 = vmatpush2.msra.mxu0 0.0
      %1392 = vmatprep.subr.mxu0 0.0
      %1393 = vmatpush2.msra.mxu0 0.0
      %1394 = vmatprep.subr.mxu0 0.0
      %1395 = vmatpush2.msra.mxu0 0.0
      %1396 = vmatprep.subr.mxu0 0.0
      %1397 = vmatpush2.msra.mxu0 0.0
      %1398 = vmatprep.subr.mxu0 0.0
      %1399 = vmatpush2.msra.mxu0 0.0
      %1400 = vmatprep.subr.mxu0 0.0
      %1401 = vmatpush2.msra.mxu0 0.0
      %1402 = vmatprep.subr.mxu0 0.0
      %1403 = vmatpush2.msra.mxu0 0.0
      %1404 = vmatprep.subr.mxu0 0.0
      %1405 = vmatpush2.msra.mxu0 0.0
      %1406 = vmatprep.subr.mxu0 0.0
      %1407 = vmatpush2.msra.mxu0 0.0
      %1408 = vmatprep.subr.mxu0 0.0
      %1409 = vmatpush2.msra.mxu0 0.0
      %1410 = vmatprep.mubr.f32.mxu0 0.0
      %1411 = vmatmul.mubr.f32.gmra.mxu0 %v1341
      %v1412 = vpop.f32.mrf.mxu0
      %v1413 = vadd.f32 0.0, %v1412
      %v1414 = vpop.f32.mrf.mxu0
      %1415 = vmatprep.mubr.f32.mxu0 0.0
      %1416 = vmatmul.mubr.f32.gmra.mxu0 %v1344
      %v1417 = vpop.f32.mrf.mxu0
      %v1418 = vadd.f32 0.0, %v1417
      %v1419 = vpop.f32.mrf.mxu0
      %1420 = vdwg.mxu0
      %s1421 = scalar_lea.vmem %s8, 512
      %v1422 = vld [vmem:[%s1421] sm:$0xff]
      %v1423 = vld [vmem:[%s1421 + $0x8] sm:$0xff]
      %v1424 = vld [vmem:[%s1421 + $0x10] sm:$0xff]
      %v1425 = vld [vmem:[%s1421 + $0x18] sm:$0xff]
      %v1426 = vld [vmem:[%s1421 + $0x20] sm:$0xff]
      %v1427 = vld [vmem:[%s1421 + $0x28] sm:$0xff]
      %v1428 = vld [vmem:[%s1421 + $0x30] sm:$0xff]
      %v1429 = vld [vmem:[%s1421 + $0x38] sm:$0xff]
      %v1430 = vld [vmem:[%s1421 + $0x40] sm:$0xff]
      %v1431 = vld [vmem:[%s1421 + $0x48] sm:$0xff]
      %v1432 = vld [vmem:[%s1421 + $0x50] sm:$0xff]
      %v1433 = vld [vmem:[%s1421 + $0x58] sm:$0xff]
      %v1434 = vld [vmem:[%s1421 + $0x60] sm:$0xff]
      %v1435 = vld [vmem:[%s1421 + $0x68] sm:$0xff]
      %v1436 = vld [vmem:[%s1421 + $0x70] sm:$0xff]
      %v1437 = vld [vmem:[%s1421 + $0x78] sm:$0xff]
      %1438 = vmatprep.subr.mxu0 0.0
      %1439 = vmatpush1.msra.mxu0 %v1437
      %1440 = vmatprep.subr.mxu0 0.0
      %1441 = vmatpush1.msra.mxu0 %v1436
      %1442 = vmatprep.subr.mxu0 0.0
      %1443 = vmatpush1.msra.mxu0 %v1435
      %1444 = vmatprep.subr.mxu0 0.0
      %1445 = vmatpush1.msra.mxu0 %v1434
      %1446 = vmatprep.subr.mxu0 0.0
      %1447 = vmatpush1.msra.mxu0 %v1433
      %1448 = vmatprep.subr.mxu0 0.0
      %1449 = vmatpush1.msra.mxu0 %v1432
      %1450 = vmatprep.subr.mxu0 0.0
      %1451 = vmatpush1.msra.mxu0 %v1431
      %1452 = vmatprep.subr.mxu0 0.0
      %1453 = vmatpush1.msra.mxu0 %v1430
      %1454 = vmatprep.subr.mxu0 0.0
      %1455 = vmatpush1.msra.mxu0 %v1429
      %1456 = vmatprep.subr.mxu0 0.0
      %1457 = vmatpush1.msra.mxu0 %v1428
      %1458 = vmatprep.subr.mxu0 0.0
      %1459 = vmatpush1.msra.mxu0 %v1427
      %1460 = vmatprep.subr.mxu0 0.0
      %1461 = vmatpush1.msra.mxu0 %v1426
      %1462 = vmatprep.subr.mxu0 0.0
      %1463 = vmatpush1.msra.mxu0 %v1425
      %1464 = vmatprep.subr.mxu0 0.0
      %1465 = vmatpush1.msra.mxu0 %v1424
      %1466 = vmatprep.subr.mxu0 0.0
      %1467 = vmatpush1.msra.mxu0 %v1423
      %1468 = vmatprep.subr.mxu0 0.0
      %1469 = vmatpush1.msra.mxu0 %v1422
      %1470 = vmatprep.subr.mxu0 0.0
      %1471 = vmatpush2.msra.mxu0 0.0
      %1472 = vmatprep.subr.mxu0 0.0
      %1473 = vmatpush2.msra.mxu0 0.0
      %1474 = vmatprep.subr.mxu0 0.0
      %1475 = vmatpush2.msra.mxu0 0.0
      %1476 = vmatprep.subr.mxu0 0.0
      %1477 = vmatpush2.msra.mxu0 0.0
      %1478 = vmatprep.subr.mxu0 0.0
      %1479 = vmatpush2.msra.mxu0 0.0
      %1480 = vmatprep.subr.mxu0 0.0
      %1481 = vmatpush2.msra.mxu0 0.0
      %1482 = vmatprep.subr.mxu0 0.0
      %1483 = vmatpush2.msra.mxu0 0.0
      %1484 = vmatprep.subr.mxu0 0.0
      %1485 = vmatpush2.msra.mxu0 0.0
      %1486 = vmatprep.subr.mxu0 0.0
      %1487 = vmatpush2.msra.mxu0 0.0
      %1488 = vmatprep.subr.mxu0 0.0
      %1489 = vmatpush2.msra.mxu0 0.0
      %1490 = vmatprep.subr.mxu0 0.0
      %1491 = vmatpush2.msra.mxu0 0.0
      %1492 = vmatprep.subr.mxu0 0.0
      %1493 = vmatpush2.msra.mxu0 0.0
      %1494 = vmatprep.subr.mxu0 0.0
      %1495 = vmatpush2.msra.mxu0 0.0
      %1496 = vmatprep.subr.mxu0 0.0
      %1497 = vmatpush2.msra.mxu0 0.0
      %1498 = vmatprep.subr.mxu0 0.0
      %1499 = vmatpush2.msra.mxu0 0.0
      %1500 = vmatprep.subr.mxu0 0.0
      %1501 = vmatpush2.msra.mxu0 0.0
      %1502 = vmatprep.mubr.f32.mxu0 0.0
      %1503 = vmatmul.mubr.f32.gmra.mxu0 %v1413
      %v1504 = vpop.f32.mrf.mxu0
      %v1505 = vadd.f32 0.0, %v1504
      %v1506 = vpop.f32.mrf.mxu0
      %1507 = vmatprep.mubr.f32.mxu0 0.0
      %1508 = vmatmul.mubr.f32.gmra.mxu0 %v1418
      %v1509 = vpop.f32.mrf.mxu0
      %v1510 = vadd.f32 0.0, %v1509
      %v1511 = vpop.f32.mrf.mxu0
      %1512 = vdwg.mxu0
      %v1513 = vadd.f32 %v1335, %v1505
      %v1514 = vadd.f32 %v1336, %v1510
      %s1515 = scalar_lea.vmem %s6, 80
      %v1516 = vld [vmem:[%s1515] sm:$0xff]
      %v1517 = vld [vmem:[%s1515 + $0x8] sm:$0xff]
      %v1519 = vsel %vm618, %v1516, 0
      %v1522 = vsel %vm618, %v1517, 0
      %1524 = vmatprep.subr.mxu0 0.0
      %1525 = vmatpush1.msra.mxu0 0.0
      %1526 = vmatprep.subr.mxu0 0.0
      %1527 = vmatpush1.msra.mxu0 0.0
      %1528 = vmatprep.subr.mxu0 0.0
      %1529 = vmatpush1.msra.mxu0 0.0
      %1530 = vmatprep.subr.mxu0 0.0
      %1531 = vmatpush1.msra.mxu0 0.0
      %1532 = vmatprep.subr.mxu0 0.0
      %1533 = vmatpush1.msra.mxu0 0.0
      %1534 = vmatprep.subr.mxu0 0.0
      %1535 = vmatpush1.msra.mxu0 0.0
      %1536 = vmatprep.subr.mxu0 0.0
      %1537 = vmatpush1.msra.mxu0 0.0
      %1538 = vmatprep.subr.mxu0 0.0
      %1539 = vmatpush1.msra.mxu0 0.0
      %1540 = vmatprep.subr.mxu0 0.0
      %1541 = vmatpush1.msra.mxu0 0.0
      %1542 = vmatprep.subr.mxu0 0.0
      %1543 = vmatpush1.msra.mxu0 0.0
      %1544 = vmatprep.subr.mxu0 0.0
      %1545 = vmatpush1.msra.mxu0 0.0
      %1546 = vmatprep.subr.mxu0 0.0
      %1547 = vmatpush1.msra.mxu0 0.0
      %1548 = vmatprep.subr.mxu0 0.0
      %1549 = vmatpush1.msra.mxu0 0.0
      %1550 = vmatprep.subr.mxu0 0.0
      %1551 = vmatpush1.msra.mxu0 0.0
      %1552 = vmatprep.subr.mxu0 0.0
      %1553 = vmatpush1.msra.mxu0 0.0
      %1554 = vmatprep.subr.mxu0 0.0
      %1555 = vmatpush1.msra.mxu0 %v613
      %1556 = vmatprep.subr.mxu0 0.0
      %1557 = vmatpush2.msra.mxu0 0.0
      %1558 = vmatprep.subr.mxu0 0.0
      %1559 = vmatpush2.msra.mxu0 0.0
      %1560 = vmatprep.subr.mxu0 0.0
      %1561 = vmatpush2.msra.mxu0 0.0
      %1562 = vmatprep.subr.mxu0 0.0
      %1563 = vmatpush2.msra.mxu0 0.0
      %1564 = vmatprep.subr.mxu0 0.0
      %1565 = vmatpush2.msra.mxu0 0.0
      %1566 = vmatprep.subr.mxu0 0.0
      %1567 = vmatpush2.msra.mxu0 0.0
      %1568 = vmatprep.subr.mxu0 0.0
      %1569 = vmatpush2.msra.mxu0 0.0
      %1570 = vmatprep.subr.mxu0 0.0
      %1571 = vmatpush2.msra.mxu0 0.0
      %1572 = vmatprep.subr.mxu0 0.0
      %1573 = vmatpush2.msra.mxu0 0.0
      %1574 = vmatprep.subr.mxu0 0.0
      %1575 = vmatpush2.msra.mxu0 0.0
      %1576 = vmatprep.subr.mxu0 0.0
      %1577 = vmatpush2.msra.mxu0 0.0
      %1578 = vmatprep.subr.mxu0 0.0
      %1579 = vmatpush2.msra.mxu0 0.0
      %1580 = vmatprep.subr.mxu0 0.0
      %1581 = vmatpush2.msra.mxu0 0.0
      %1582 = vmatprep.subr.mxu0 0.0
      %1583 = vmatpush2.msra.mxu0 0.0
      %1584 = vmatprep.subr.mxu0 0.0
      %1585 = vmatpush2.msra.mxu0 0.0
      %1586 = vmatprep.subr.mxu0 0.0
      %1587 = vmatpush2.msra.mxu0 0.0
      %1588 = vmatprep.mubr.f32.mxu0 0.0
      %1589 = vmatmul.mubr.f32.gmra.mxu0 %v1519
      %v1590 = vpop.f32.mrf.mxu0
      %v1591 = vadd.f32 0.0, %v1590
      %v1592 = vpop.f32.mrf.mxu0
      %1593 = vmatprep.mubr.f32.mxu0 0.0
      %1594 = vmatmul.mubr.f32.gmra.mxu0 %v1522
      %v1595 = vpop.f32.mrf.mxu0
      %v1596 = vadd.f32 0.0, %v1595
      %v1597 = vpop.f32.mrf.mxu0
      %1598 = vdwg.mxu0
      %s1599 = scalar_lea.vmem %s8, 640
      %v1600 = vld [vmem:[%s1599] sm:$0xff]
      %v1601 = vld [vmem:[%s1599 + $0x8] sm:$0xff]
      %v1602 = vld [vmem:[%s1599 + $0x10] sm:$0xff]
      %v1603 = vld [vmem:[%s1599 + $0x18] sm:$0xff]
      %v1604 = vld [vmem:[%s1599 + $0x20] sm:$0xff]
      %v1605 = vld [vmem:[%s1599 + $0x28] sm:$0xff]
      %v1606 = vld [vmem:[%s1599 + $0x30] sm:$0xff]
      %v1607 = vld [vmem:[%s1599 + $0x38] sm:$0xff]
      %v1608 = vld [vmem:[%s1599 + $0x40] sm:$0xff]
      %v1609 = vld [vmem:[%s1599 + $0x48] sm:$0xff]
      %v1610 = vld [vmem:[%s1599 + $0x50] sm:$0xff]
      %v1611 = vld [vmem:[%s1599 + $0x58] sm:$0xff]
      %v1612 = vld [vmem:[%s1599 + $0x60] sm:$0xff]
      %v1613 = vld [vmem:[%s1599 + $0x68] sm:$0xff]
      %v1614 = vld [vmem:[%s1599 + $0x70] sm:$0xff]
      %v1615 = vld [vmem:[%s1599 + $0x78] sm:$0xff]
      %1616 = vmatprep.subr.mxu0 0.0
      %1617 = vmatpush1.msra.mxu0 %v1615
      %1618 = vmatprep.subr.mxu0 0.0
      %1619 = vmatpush1.msra.mxu0 %v1614
      %1620 = vmatprep.subr.mxu0 0.0
      %1621 = vmatpush1.msra.mxu0 %v1613
      %1622 = vmatprep.subr.mxu0 0.0
      %1623 = vmatpush1.msra.mxu0 %v1612
      %1624 = vmatprep.subr.mxu0 0.0
      %1625 = vmatpush1.msra.mxu0 %v1611
      %1626 = vmatprep.subr.mxu0 0.0
      %1627 = vmatpush1.msra.mxu0 %v1610
      %1628 = vmatprep.subr.mxu0 0.0
      %1629 = vmatpush1.msra.mxu0 %v1609
      %1630 = vmatprep.subr.mxu0 0.0
      %1631 = vmatpush1.msra.mxu0 %v1608
      %1632 = vmatprep.subr.mxu0 0.0
      %1633 = vmatpush1.msra.mxu0 %v1607
      %1634 = vmatprep.subr.mxu0 0.0
      %1635 = vmatpush1.msra.mxu0 %v1606
      %1636 = vmatprep.subr.mxu0 0.0
      %1637 = vmatpush1.msra.mxu0 %v1605
      %1638 = vmatprep.subr.mxu0 0.0
      %1639 = vmatpush1.msra.mxu0 %v1604
      %1640 = vmatprep.subr.mxu0 0.0
      %1641 = vmatpush1.msra.mxu0 %v1603
      %1642 = vmatprep.subr.mxu0 0.0
      %1643 = vmatpush1.msra.mxu0 %v1602
      %1644 = vmatprep.subr.mxu0 0.0
      %1645 = vmatpush1.msra.mxu0 %v1601
      %1646 = vmatprep.subr.mxu0 0.0
      %1647 = vmatpush1.msra.mxu0 %v1600
      %1648 = vmatprep.subr.mxu0 0.0
      %1649 = vmatpush2.msra.mxu0 0.0
      %1650 = vmatprep.subr.mxu0 0.0
      %1651 = vmatpush2.msra.mxu0 0.0
      %1652 = vmatprep.subr.mxu0 0.0
      %1653 = vmatpush2.msra.mxu0 0.0
      %1654 = vmatprep.subr.mxu0 0.0
      %1655 = vmatpush2.msra.mxu0 0.0
      %1656 = vmatprep.subr.mxu0 0.0
      %1657 = vmatpush2.msra.mxu0 0.0
      %1658 = vmatprep.subr.mxu0 0.0
      %1659 = vmatpush2.msra.mxu0 0.0
      %1660 = vmatprep.subr.mxu0 0.0
      %1661 = vmatpush2.msra.mxu0 0.0
      %1662 = vmatprep.subr.mxu0 0.0
      %1663 = vmatpush2.msra.mxu0 0.0
      %1664 = vmatprep.subr.mxu0 0.0
      %1665 = vmatpush2.msra.mxu0 0.0
      %1666 = vmatprep.subr.mxu0 0.0
      %1667 = vmatpush2.msra.mxu0 0.0
      %1668 = vmatprep.subr.mxu0 0.0
      %1669 = vmatpush2.msra.mxu0 0.0
      %1670 = vmatprep.subr.mxu0 0.0
      %1671 = vmatpush2.msra.mxu0 0.0
      %1672 = vmatprep.subr.mxu0 0.0
      %1673 = vmatpush2.msra.mxu0 0.0
      %1674 = vmatprep.subr.mxu0 0.0
      %1675 = vmatpush2.msra.mxu0 0.0
      %1676 = vmatprep.subr.mxu0 0.0
      %1677 = vmatpush2.msra.mxu0 0.0
      %1678 = vmatprep.subr.mxu0 0.0
      %1679 = vmatpush2.msra.mxu0 0.0
      %1680 = vmatprep.mubr.f32.mxu0 0.0
      %1681 = vmatmul.mubr.f32.gmra.mxu0 %v1591
      %v1682 = vpop.f32.mrf.mxu0
      %v1683 = vadd.f32 0.0, %v1682
      %v1684 = vpop.f32.mrf.mxu0
      %1685 = vmatprep.mubr.f32.mxu0 0.0
      %1686 = vmatmul.mubr.f32.gmra.mxu0 %v1596
      %v1687 = vpop.f32.mrf.mxu0
      %v1688 = vadd.f32 0.0, %v1687
      %v1689 = vpop.f32.mrf.mxu0
      %1690 = vdwg.mxu0
      %v1691 = vadd.f32 %v1513, %v1683
      %v1692 = vadd.f32 %v1514, %v1688
      %s1693 = scalar_lea.vmem %s6, 96
      %v1694 = vld [vmem:[%s1693] sm:$0xff]
      %v1695 = vld [vmem:[%s1693 + $0x8] sm:$0xff]
      %v1697 = vsel %vm618, %v1694, 0
      %v1700 = vsel %vm618, %v1695, 0
      %1702 = vmatprep.subr.mxu0 0.0
      %1703 = vmatpush1.msra.mxu0 0.0
      %1704 = vmatprep.subr.mxu0 0.0
      %1705 = vmatpush1.msra.mxu0 0.0
      %1706 = vmatprep.subr.mxu0 0.0
      %1707 = vmatpush1.msra.mxu0 0.0
      %1708 = vmatprep.subr.mxu0 0.0
      %1709 = vmatpush1.msra.mxu0 0.0
      %1710 = vmatprep.subr.mxu0 0.0
      %1711 = vmatpush1.msra.mxu0 0.0
      %1712 = vmatprep.subr.mxu0 0.0
      %1713 = vmatpush1.msra.mxu0 0.0
      %1714 = vmatprep.subr.mxu0 0.0
      %1715 = vmatpush1.msra.mxu0 0.0
      %1716 = vmatprep.subr.mxu0 0.0
      %1717 = vmatpush1.msra.mxu0 0.0
      %1718 = vmatprep.subr.mxu0 0.0
      %1719 = vmatpush1.msra.mxu0 0.0
      %1720 = vmatprep.subr.mxu0 0.0
      %1721 = vmatpush1.msra.mxu0 0.0
      %1722 = vmatprep.subr.mxu0 0.0
      %1723 = vmatpush1.msra.mxu0 0.0
      %1724 = vmatprep.subr.mxu0 0.0
      %1725 = vmatpush1.msra.mxu0 0.0
      %1726 = vmatprep.subr.mxu0 0.0
      %1727 = vmatpush1.msra.mxu0 0.0
      %1728 = vmatprep.subr.mxu0 0.0
      %1729 = vmatpush1.msra.mxu0 0.0
      %1730 = vmatprep.subr.mxu0 0.0
      %1731 = vmatpush1.msra.mxu0 0.0
      %1732 = vmatprep.subr.mxu0 0.0
      %1733 = vmatpush1.msra.mxu0 %v613
      %1734 = vmatprep.subr.mxu0 0.0
      %1735 = vmatpush2.msra.mxu0 0.0
      %1736 = vmatprep.subr.mxu0 0.0
      %1737 = vmatpush2.msra.mxu0 0.0
      %1738 = vmatprep.subr.mxu0 0.0
      %1739 = vmatpush2.msra.mxu0 0.0
      %1740 = vmatprep.subr.mxu0 0.0
      %1741 = vmatpush2.msra.mxu0 0.0
      %1742 = vmatprep.subr.mxu0 0.0
      %1743 = vmatpush2.msra.mxu0 0.0
      %1744 = vmatprep.subr.mxu0 0.0
      %1745 = vmatpush2.msra.mxu0 0.0
      %1746 = vmatprep.subr.mxu0 0.0
      %1747 = vmatpush2.msra.mxu0 0.0
      %1748 = vmatprep.subr.mxu0 0.0
      %1749 = vmatpush2.msra.mxu0 0.0
      %1750 = vmatprep.subr.mxu0 0.0
      %1751 = vmatpush2.msra.mxu0 0.0
      %1752 = vmatprep.subr.mxu0 0.0
      %1753 = vmatpush2.msra.mxu0 0.0
      %1754 = vmatprep.subr.mxu0 0.0
      %1755 = vmatpush2.msra.mxu0 0.0
      %1756 = vmatprep.subr.mxu0 0.0
      %1757 = vmatpush2.msra.mxu0 0.0
      %1758 = vmatprep.subr.mxu0 0.0
      %1759 = vmatpush2.msra.mxu0 0.0
      %1760 = vmatprep.subr.mxu0 0.0
      %1761 = vmatpush2.msra.mxu0 0.0
      %1762 = vmatprep.subr.mxu0 0.0
      %1763 = vmatpush2.msra.mxu0 0.0
      %1764 = vmatprep.subr.mxu0 0.0
      %1765 = vmatpush2.msra.mxu0 0.0
      %1766 = vmatprep.mubr.f32.mxu0 0.0
      %1767 = vmatmul.mubr.f32.gmra.mxu0 %v1697
      %v1768 = vpop.f32.mrf.mxu0
      %v1769 = vadd.f32 0.0, %v1768
      %v1770 = vpop.f32.mrf.mxu0
      %1771 = vmatprep.mubr.f32.mxu0 0.0
      %1772 = vmatmul.mubr.f32.gmra.mxu0 %v1700
      %v1773 = vpop.f32.mrf.mxu0
      %v1774 = vadd.f32 0.0, %v1773
      %v1775 = vpop.f32.mrf.mxu0
      %1776 = vdwg.mxu0
      %s1777 = scalar_lea.vmem %s8, 768
      %v1778 = vld [vmem:[%s1777] sm:$0xff]
      %v1779 = vld [vmem:[%s1777 + $0x8] sm:$0xff]
      %v1780 = vld [vmem:[%s1777 + $0x10] sm:$0xff]
      %v1781 = vld [vmem:[%s1777 + $0x18] sm:$0xff]
      %v1782 = vld [vmem:[%s1777 + $0x20] sm:$0xff]
      %v1783 = vld [vmem:[%s1777 + $0x28] sm:$0xff]
      %v1784 = vld [vmem:[%s1777 + $0x30] sm:$0xff]
      %v1785 = vld [vmem:[%s1777 + $0x38] sm:$0xff]
      %v1786 = vld [vmem:[%s1777 + $0x40] sm:$0xff]
      %v1787 = vld [vmem:[%s1777 + $0x48] sm:$0xff]
      %v1788 = vld [vmem:[%s1777 + $0x50] sm:$0xff]
      %v1789 = vld [vmem:[%s1777 + $0x58] sm:$0xff]
      %v1790 = vld [vmem:[%s1777 + $0x60] sm:$0xff]
      %v1791 = vld [vmem:[%s1777 + $0x68] sm:$0xff]
      %v1792 = vld [vmem:[%s1777 + $0x70] sm:$0xff]
      %v1793 = vld [vmem:[%s1777 + $0x78] sm:$0xff]
      %1794 = vmatprep.subr.mxu0 0.0
      %1795 = vmatpush1.msra.mxu0 %v1793
      %1796 = vmatprep.subr.mxu0 0.0
      %1797 = vmatpush1.msra.mxu0 %v1792
      %1798 = vmatprep.subr.mxu0 0.0
      %1799 = vmatpush1.msra.mxu0 %v1791
      %1800 = vmatprep.subr.mxu0 0.0
      %1801 = vmatpush1.msra.mxu0 %v1790
      %1802 = vmatprep.subr.mxu0 0.0
      %1803 = vmatpush1.msra.mxu0 %v1789
      %1804 = vmatprep.subr.mxu0 0.0
      %1805 = vmatpush1.msra.mxu0 %v1788
      %1806 = vmatprep.subr.mxu0 0.0
      %1807 = vmatpush1.msra.mxu0 %v1787
      %1808 = vmatprep.subr.mxu0 0.0
      %1809 = vmatpush1.msra.mxu0 %v1786
      %1810 = vmatprep.subr.mxu0 0.0
      %1811 = vmatpush1.msra.mxu0 %v1785
      %1812 = vmatprep.subr.mxu0 0.0
      %1813 = vmatpush1.msra.mxu0 %v1784
      %1814 = vmatprep.subr.mxu0 0.0
      %1815 = vmatpush1.msra.mxu0 %v1783
      %1816 = vmatprep.subr.mxu0 0.0
      %1817 = vmatpush1.msra.mxu0 %v1782
      %1818 = vmatprep.subr.mxu0 0.0
      %1819 = vmatpush1.msra.mxu0 %v1781
      %1820 = vmatprep.subr.mxu0 0.0
      %1821 = vmatpush1.msra.mxu0 %v1780
      %1822 = vmatprep.subr.mxu0 0.0
      %1823 = vmatpush1.msra.mxu0 %v1779
      %1824 = vmatprep.subr.mxu0 0.0
      %1825 = vmatpush1.msra.mxu0 %v1778
      %1826 = vmatprep.subr.mxu0 0.0
      %1827 = vmatpush2.msra.mxu0 0.0
      %1828 = vmatprep.subr.mxu0 0.0
      %1829 = vmatpush2.msra.mxu0 0.0
      %1830 = vmatprep.subr.mxu0 0.0
      %1831 = vmatpush2.msra.mxu0 0.0
      %1832 = vmatprep.subr.mxu0 0.0
      %1833 = vmatpush2.msra.mxu0 0.0
      %1834 = vmatprep.subr.mxu0 0.0
      %1835 = vmatpush2.msra.mxu0 0.0
      %1836 = vmatprep.subr.mxu0 0.0
      %1837 = vmatpush2.msra.mxu0 0.0
      %1838 = vmatprep.subr.mxu0 0.0
      %1839 = vmatpush2.msra.mxu0 0.0
      %1840 = vmatprep.subr.mxu0 0.0
      %1841 = vmatpush2.msra.mxu0 0.0
      %1842 = vmatprep.subr.mxu0 0.0
      %1843 = vmatpush2.msra.mxu0 0.0
      %1844 = vmatprep.subr.mxu0 0.0
      %1845 = vmatpush2.msra.mxu0 0.0
      %1846 = vmatprep.subr.mxu0 0.0
      %1847 = vmatpush2.msra.mxu0 0.0
      %1848 = vmatprep.subr.mxu0 0.0
      %1849 = vmatpush2.msra.mxu0 0.0
      %1850 = vmatprep.subr.mxu0 0.0
      %1851 = vmatpush2.msra.mxu0 0.0
      %1852 = vmatprep.subr.mxu0 0.0
      %1853 = vmatpush2.msra.mxu0 0.0
      %1854 = vmatprep.subr.mxu0 0.0
      %1855 = vmatpush2.msra.mxu0 0.0
      %1856 = vmatprep.subr.mxu0 0.0
      %1857 = vmatpush2.msra.mxu0 0.0
      %1858 = vmatprep.mubr.f32.mxu0 0.0
      %1859 = vmatmul.mubr.f32.gmra.mxu0 %v1769
      %v1860 = vpop.f32.mrf.mxu0
      %v1861 = vadd.f32 0.0, %v1860
      %v1862 = vpop.f32.mrf.mxu0
      %1863 = vmatprep.mubr.f32.mxu0 0.0
      %1864 = vmatmul.mubr.f32.gmra.mxu0 %v1774
      %v1865 = vpop.f32.mrf.mxu0
      %v1866 = vadd.f32 0.0, %v1865
      %v1867 = vpop.f32.mrf.mxu0
      %1868 = vdwg.mxu0
      %v1869 = vadd.f32 %v1691, %v1861
      %v1870 = vadd.f32 %v1692, %v1866
      %s1871 = scalar_lea.vmem %s6, 112
      %v1872 = vld [vmem:[%s1871] sm:$0xff]
      %v1873 = vld [vmem:[%s1871 + $0x8] sm:$0xff]
      %v1875 = vsel %vm618, %v1872, 0
      %v1878 = vsel %vm618, %v1873, 0
      %1880 = vmatprep.subr.mxu0 0.0
      %1881 = vmatpush1.msra.mxu0 0.0
      %1882 = vmatprep.subr.mxu0 0.0
      %1883 = vmatpush1.msra.mxu0 0.0
      %1884 = vmatprep.subr.mxu0 0.0
      %1885 = vmatpush1.msra.mxu0 0.0
      %1886 = vmatprep.subr.mxu0 0.0
      %1887 = vmatpush1.msra.mxu0 0.0
      %1888 = vmatprep.subr.mxu0 0.0
      %1889 = vmatpush1.msra.mxu0 0.0
      %1890 = vmatprep.subr.mxu0 0.0
      %1891 = vmatpush1.msra.mxu0 0.0
      %1892 = vmatprep.subr.mxu0 0.0
      %1893 = vmatpush1.msra.mxu0 0.0
      %1894 = vmatprep.subr.mxu0 0.0
      %1895 = vmatpush1.msra.mxu0 0.0
      %1896 = vmatprep.subr.mxu0 0.0
      %1897 = vmatpush1.msra.mxu0 0.0
      %1898 = vmatprep.subr.mxu0 0.0
      %1899 = vmatpush1.msra.mxu0 0.0
      %1900 = vmatprep.subr.mxu0 0.0
      %1901 = vmatpush1.msra.mxu0 0.0
      %1902 = vmatprep.subr.mxu0 0.0
      %1903 = vmatpush1.msra.mxu0 0.0
      %1904 = vmatprep.subr.mxu0 0.0
      %1905 = vmatpush1.msra.mxu0 0.0
      %1906 = vmatprep.subr.mxu0 0.0
      %1907 = vmatpush1.msra.mxu0 0.0
      %1908 = vmatprep.subr.mxu0 0.0
      %1909 = vmatpush1.msra.mxu0 0.0
      %1910 = vmatprep.subr.mxu0 0.0
      %1911 = vmatpush1.msra.mxu0 %v613
      %1912 = vmatprep.subr.mxu0 0.0
      %1913 = vmatpush2.msra.mxu0 0.0
      %1914 = vmatprep.subr.mxu0 0.0
      %1915 = vmatpush2.msra.mxu0 0.0
      %1916 = vmatprep.subr.mxu0 0.0
      %1917 = vmatpush2.msra.mxu0 0.0
      %1918 = vmatprep.subr.mxu0 0.0
      %1919 = vmatpush2.msra.mxu0 0.0
      %1920 = vmatprep.subr.mxu0 0.0
      %1921 = vmatpush2.msra.mxu0 0.0
      %1922 = vmatprep.subr.mxu0 0.0
      %1923 = vmatpush2.msra.mxu0 0.0
      %1924 = vmatprep.subr.mxu0 0.0
      %1925 = vmatpush2.msra.mxu0 0.0
      %1926 = vmatprep.subr.mxu0 0.0
      %1927 = vmatpush2.msra.mxu0 0.0
      %1928 = vmatprep.subr.mxu0 0.0
      %1929 = vmatpush2.msra.mxu0 0.0
      %1930 = vmatprep.subr.mxu0 0.0
      %1931 = vmatpush2.msra.mxu0 0.0
      %1932 = vmatprep.subr.mxu0 0.0
      %1933 = vmatpush2.msra.mxu0 0.0
      %1934 = vmatprep.subr.mxu0 0.0
      %1935 = vmatpush2.msra.mxu0 0.0
      %1936 = vmatprep.subr.mxu0 0.0
      %1937 = vmatpush2.msra.mxu0 0.0
      %1938 = vmatprep.subr.mxu0 0.0
      %1939 = vmatpush2.msra.mxu0 0.0
      %1940 = vmatprep.subr.mxu0 0.0
      %1941 = vmatpush2.msra.mxu0 0.0
      %1942 = vmatprep.subr.mxu0 0.0
      %1943 = vmatpush2.msra.mxu0 0.0
      %1944 = vmatprep.mubr.f32.mxu0 0.0
      %1945 = vmatmul.mubr.f32.gmra.mxu0 %v1875
      %v1946 = vpop.f32.mrf.mxu0
      %v1947 = vadd.f32 0.0, %v1946
      %v1948 = vpop.f32.mrf.mxu0
      %1949 = vmatprep.mubr.f32.mxu0 0.0
      %1950 = vmatmul.mubr.f32.gmra.mxu0 %v1878
      %v1951 = vpop.f32.mrf.mxu0
      %v1952 = vadd.f32 0.0, %v1951
      %v1953 = vpop.f32.mrf.mxu0
      %1954 = vdwg.mxu0
      %s1955 = scalar_lea.vmem %s8, 896
      %v1956 = vld [vmem:[%s1955] sm:$0xff]
      %v1957 = vld [vmem:[%s1955 + $0x8] sm:$0xff]
      %v1958 = vld [vmem:[%s1955 + $0x10] sm:$0xff]
      %v1959 = vld [vmem:[%s1955 + $0x18] sm:$0xff]
      %v1960 = vld [vmem:[%s1955 + $0x20] sm:$0xff]
      %v1961 = vld [vmem:[%s1955 + $0x28] sm:$0xff]
      %v1962 = vld [vmem:[%s1955 + $0x30] sm:$0xff]
      %v1963 = vld [vmem:[%s1955 + $0x38] sm:$0xff]
      %v1964 = vld [vmem:[%s1955 + $0x40] sm:$0xff]
      %v1965 = vld [vmem:[%s1955 + $0x48] sm:$0xff]
      %v1966 = vld [vmem:[%s1955 + $0x50] sm:$0xff]
      %v1967 = vld [vmem:[%s1955 + $0x58] sm:$0xff]
      %v1968 = vld [vmem:[%s1955 + $0x60] sm:$0xff]
      %v1969 = vld [vmem:[%s1955 + $0x68] sm:$0xff]
      %v1970 = vld [vmem:[%s1955 + $0x70] sm:$0xff]
      %v1971 = vld [vmem:[%s1955 + $0x78] sm:$0xff]
      %1972 = vmatprep.subr.mxu0 0.0
      %1973 = vmatpush1.msra.mxu0 %v1971
      %1974 = vmatprep.subr.mxu0 0.0
      %1975 = vmatpush1.msra.mxu0 %v1970
      %1976 = vmatprep.subr.mxu0 0.0
      %1977 = vmatpush1.msra.mxu0 %v1969
      %1978 = vmatprep.subr.mxu0 0.0
      %1979 = vmatpush1.msra.mxu0 %v1968
      %1980 = vmatprep.subr.mxu0 0.0
      %1981 = vmatpush1.msra.mxu0 %v1967
      %1982 = vmatprep.subr.mxu0 0.0
      %1983 = vmatpush1.msra.mxu0 %v1966
      %1984 = vmatprep.subr.mxu0 0.0
      %1985 = vmatpush1.msra.mxu0 %v1965
      %1986 = vmatprep.subr.mxu0 0.0
      %1987 = vmatpush1.msra.mxu0 %v1964
      %1988 = vmatprep.subr.mxu0 0.0
      %1989 = vmatpush1.msra.mxu0 %v1963
      %1990 = vmatprep.subr.mxu0 0.0
      %1991 = vmatpush1.msra.mxu0 %v1962
      %1992 = vmatprep.subr.mxu0 0.0
      %1993 = vmatpush1.msra.mxu0 %v1961
      %1994 = vmatprep.subr.mxu0 0.0
      %1995 = vmatpush1.msra.mxu0 %v1960
      %1996 = vmatprep.subr.mxu0 0.0
      %1997 = vmatpush1.msra.mxu0 %v1959
      %1998 = vmatprep.subr.mxu0 0.0
      %1999 = vmatpush1.msra.mxu0 %v1958
      %2000 = vmatprep.subr.mxu0 0.0
      %2001 = vmatpush1.msra.mxu0 %v1957
      %2002 = vmatprep.subr.mxu0 0.0
      %2003 = vmatpush1.msra.mxu0 %v1956
      %2004 = vmatprep.subr.mxu0 0.0
      %2005 = vmatpush2.msra.mxu0 0.0
      %2006 = vmatprep.subr.mxu0 0.0
      %2007 = vmatpush2.msra.mxu0 0.0
      %2008 = vmatprep.subr.mxu0 0.0
      %2009 = vmatpush2.msra.mxu0 0.0
      %2010 = vmatprep.subr.mxu0 0.0
      %2011 = vmatpush2.msra.mxu0 0.0
      %2012 = vmatprep.subr.mxu0 0.0
      %2013 = vmatpush2.msra.mxu0 0.0
      %2014 = vmatprep.subr.mxu0 0.0
      %2015 = vmatpush2.msra.mxu0 0.0
      %2016 = vmatprep.subr.mxu0 0.0
      %2017 = vmatpush2.msra.mxu0 0.0
      %2018 = vmatprep.subr.mxu0 0.0
      %2019 = vmatpush2.msra.mxu0 0.0
      %2020 = vmatprep.subr.mxu0 0.0
      %2021 = vmatpush2.msra.mxu0 0.0
      %2022 = vmatprep.subr.mxu0 0.0
      %2023 = vmatpush2.msra.mxu0 0.0
      %2024 = vmatprep.subr.mxu0 0.0
      %2025 = vmatpush2.msra.mxu0 0.0
      %2026 = vmatprep.subr.mxu0 0.0
      %2027 = vmatpush2.msra.mxu0 0.0
      %2028 = vmatprep.subr.mxu0 0.0
      %2029 = vmatpush2.msra.mxu0 0.0
      %2030 = vmatprep.subr.mxu0 0.0
      %2031 = vmatpush2.msra.mxu0 0.0
      %2032 = vmatprep.subr.mxu0 0.0
      %2033 = vmatpush2.msra.mxu0 0.0
      %2034 = vmatprep.subr.mxu0 0.0
      %2035 = vmatpush2.msra.mxu0 0.0
      %2036 = vmatprep.mubr.f32.mxu0 0.0
      %2037 = vmatmul.mubr.f32.gmra.mxu0 %v1947
      %v2038 = vpop.f32.mrf.mxu0
      %v2039 = vadd.f32 0.0, %v2038
      %v2040 = vpop.f32.mrf.mxu0
      %2041 = vmatprep.mubr.f32.mxu0 0.0
      %2042 = vmatmul.mubr.f32.gmra.mxu0 %v1952
      %v2043 = vpop.f32.mrf.mxu0
      %v2044 = vadd.f32 0.0, %v2043
      %v2045 = vpop.f32.mrf.mxu0
      %2046 = vdwg.mxu0
      %v2047 = vadd.f32 %v1869, %v2039
      %v2048 = vadd.f32 %v1870, %v2044
      %s2049 = scalar_lea.vmem %s6, 128
      %v2050 = vld [vmem:[%s2049] sm:$0xff]
      %v2051 = vld [vmem:[%s2049 + $0x8] sm:$0xff]
      %v2053 = vsel %vm618, %v2050, 0
      %v2056 = vsel %vm618, %v2051, 0
      %2058 = vmatprep.subr.mxu0 0.0
      %2059 = vmatpush1.msra.mxu0 0.0
      %2060 = vmatprep.subr.mxu0 0.0
      %2061 = vmatpush1.msra.mxu0 0.0
      %2062 = vmatprep.subr.mxu0 0.0
      %2063 = vmatpush1.msra.mxu0 0.0
      %2064 = vmatprep.subr.mxu0 0.0
      %2065 = vmatpush1.msra.mxu0 0.0
      %2066 = vmatprep.subr.mxu0 0.0
      %2067 = vmatpush1.msra.mxu0 0.0
      %2068 = vmatprep.subr.mxu0 0.0
      %2069 = vmatpush1.msra.mxu0 0.0
      %2070 = vmatprep.subr.mxu0 0.0
      %2071 = vmatpush1.msra.mxu0 0.0
      %2072 = vmatprep.subr.mxu0 0.0
      %2073 = vmatpush1.msra.mxu0 0.0
      %2074 = vmatprep.subr.mxu0 0.0
      %2075 = vmatpush1.msra.mxu0 0.0
      %2076 = vmatprep.subr.mxu0 0.0
      %2077 = vmatpush1.msra.mxu0 0.0
      %2078 = vmatprep.subr.mxu0 0.0
      %2079 = vmatpush1.msra.mxu0 0.0
      %2080 = vmatprep.subr.mxu0 0.0
      %2081 = vmatpush1.msra.mxu0 0.0
      %2082 = vmatprep.subr.mxu0 0.0
      %2083 = vmatpush1.msra.mxu0 0.0
      %2084 = vmatprep.subr.mxu0 0.0
      %2085 = vmatpush1.msra.mxu0 0.0
      %2086 = vmatprep.subr.mxu0 0.0
      %2087 = vmatpush1.msra.mxu0 0.0
      %2088 = vmatprep.subr.mxu0 0.0
      %2089 = vmatpush1.msra.mxu0 %v613
      %2090 = vmatprep.subr.mxu0 0.0
      %2091 = vmatpush2.msra.mxu0 0.0
      %2092 = vmatprep.subr.mxu0 0.0
      %2093 = vmatpush2.msra.mxu0 0.0
      %2094 = vmatprep.subr.mxu0 0.0
      %2095 = vmatpush2.msra.mxu0 0.0
      %2096 = vmatprep.subr.mxu0 0.0
      %2097 = vmatpush2.msra.mxu0 0.0
      %2098 = vmatprep.subr.mxu0 0.0
      %2099 = vmatpush2.msra.mxu0 0.0
      %2100 = vmatprep.subr.mxu0 0.0
      %2101 = vmatpush2.msra.mxu0 0.0
      %2102 = vmatprep.subr.mxu0 0.0
      %2103 = vmatpush2.msra.mxu0 0.0
      %2104 = vmatprep.subr.mxu0 0.0
      %2105 = vmatpush2.msra.mxu0 0.0
      %2106 = vmatprep.subr.mxu0 0.0
      %2107 = vmatpush2.msra.mxu0 0.0
      %2108 = vmatprep.subr.mxu0 0.0
      %2109 = vmatpush2.msra.mxu0 0.0
      %2110 = vmatprep.subr.mxu0 0.0
      %2111 = vmatpush2.msra.mxu0 0.0
      %2112 = vmatprep.subr.mxu0 0.0
      %2113 = vmatpush2.msra.mxu0 0.0
      %2114 = vmatprep.subr.mxu0 0.0
      %2115 = vmatpush2.msra.mxu0 0.0
      %2116 = vmatprep.subr.mxu0 0.0
      %2117 = vmatpush2.msra.mxu0 0.0
      %2118 = vmatprep.subr.mxu0 0.0
      %2119 = vmatpush2.msra.mxu0 0.0
      %2120 = vmatprep.subr.mxu0 0.0
      %2121 = vmatpush2.msra.mxu0 0.0
      %2122 = vmatprep.mubr.f32.mxu0 0.0
      %2123 = vmatmul.mubr.f32.gmra.mxu0 %v2053
      %v2124 = vpop.f32.mrf.mxu0
      %v2125 = vadd.f32 0.0, %v2124
      %v2126 = vpop.f32.mrf.mxu0
      %2127 = vmatprep.mubr.f32.mxu0 0.0
      %2128 = vmatmul.mubr.f32.gmra.mxu0 %v2056
      %v2129 = vpop.f32.mrf.mxu0
      %v2130 = vadd.f32 0.0, %v2129
      %v2131 = vpop.f32.mrf.mxu0
      %2132 = vdwg.mxu0
      %s2133 = scalar_lea.vmem %s8, 1024
      %v2134 = vld [vmem:[%s2133] sm:$0xff]
      %v2135 = vld [vmem:[%s2133 + $0x8] sm:$0xff]
      %v2136 = vld [vmem:[%s2133 + $0x10] sm:$0xff]
      %v2137 = vld [vmem:[%s2133 + $0x18] sm:$0xff]
      %v2138 = vld [vmem:[%s2133 + $0x20] sm:$0xff]
      %v2139 = vld [vmem:[%s2133 + $0x28] sm:$0xff]
      %v2140 = vld [vmem:[%s2133 + $0x30] sm:$0xff]
      %v2141 = vld [vmem:[%s2133 + $0x38] sm:$0xff]
      %v2142 = vld [vmem:[%s2133 + $0x40] sm:$0xff]
      %v2143 = vld [vmem:[%s2133 + $0x48] sm:$0xff]
      %v2144 = vld [vmem:[%s2133 + $0x50] sm:$0xff]
      %v2145 = vld [vmem:[%s2133 + $0x58] sm:$0xff]
      %v2146 = vld [vmem:[%s2133 + $0x60] sm:$0xff]
      %v2147 = vld [vmem:[%s2133 + $0x68] sm:$0xff]
      %v2148 = vld [vmem:[%s2133 + $0x70] sm:$0xff]
      %v2149 = vld [vmem:[%s2133 + $0x78] sm:$0xff]
      %2150 = vmatprep.subr.mxu0 0.0
      %2151 = vmatpush1.msra.mxu0 %v2149
      %2152 = vmatprep.subr.mxu0 0.0
      %2153 = vmatpush1.msra.mxu0 %v2148
      %2154 = vmatprep.subr.mxu0 0.0
      %2155 = vmatpush1.msra.mxu0 %v2147
      %2156 = vmatprep.subr.mxu0 0.0
      %2157 = vmatpush1.msra.mxu0 %v2146
      %2158 = vmatprep.subr.mxu0 0.0
      %2159 = vmatpush1.msra.mxu0 %v2145
      %2160 = vmatprep.subr.mxu0 0.0
      %2161 = vmatpush1.msra.mxu0 %v2144
      %2162 = vmatprep.subr.mxu0 0.0
      %2163 = vmatpush1.msra.mxu0 %v2143
      %2164 = vmatprep.subr.mxu0 0.0
      %2165 = vmatpush1.msra.mxu0 %v2142
      %2166 = vmatprep.subr.mxu0 0.0
      %2167 = vmatpush1.msra.mxu0 %v2141
      %2168 = vmatprep.subr.mxu0 0.0
      %2169 = vmatpush1.msra.mxu0 %v2140
      %2170 = vmatprep.subr.mxu0 0.0
      %2171 = vmatpush1.msra.mxu0 %v2139
      %2172 = vmatprep.subr.mxu0 0.0
      %2173 = vmatpush1.msra.mxu0 %v2138
      %2174 = vmatprep.subr.mxu0 0.0
      %2175 = vmatpush1.msra.mxu0 %v2137
      %2176 = vmatprep.subr.mxu0 0.0
      %2177 = vmatpush1.msra.mxu0 %v2136
      %2178 = vmatprep.subr.mxu0 0.0
      %2179 = vmatpush1.msra.mxu0 %v2135
      %2180 = vmatprep.subr.mxu0 0.0
      %2181 = vmatpush1.msra.mxu0 %v2134
      %2182 = vmatprep.subr.mxu0 0.0
      %2183 = vmatpush2.msra.mxu0 0.0
      %2184 = vmatprep.subr.mxu0 0.0
      %2185 = vmatpush2.msra.mxu0 0.0
      %2186 = vmatprep.subr.mxu0 0.0
      %2187 = vmatpush2.msra.mxu0 0.0
      %2188 = vmatprep.subr.mxu0 0.0
      %2189 = vmatpush2.msra.mxu0 0.0
      %2190 = vmatprep.subr.mxu0 0.0
      %2191 = vmatpush2.msra.mxu0 0.0
      %2192 = vmatprep.subr.mxu0 0.0
      %2193 = vmatpush2.msra.mxu0 0.0
      %2194 = vmatprep.subr.mxu0 0.0
      %2195 = vmatpush2.msra.mxu0 0.0
      %2196 = vmatprep.subr.mxu0 0.0
      %2197 = vmatpush2.msra.mxu0 0.0
      %2198 = vmatprep.subr.mxu0 0.0
      %2199 = vmatpush2.msra.mxu0 0.0
      %2200 = vmatprep.subr.mxu0 0.0
      %2201 = vmatpush2.msra.mxu0 0.0
      %2202 = vmatprep.subr.mxu0 0.0
      %2203 = vmatpush2.msra.mxu0 0.0
      %2204 = vmatprep.subr.mxu0 0.0
      %2205 = vmatpush2.msra.mxu0 0.0
      %2206 = vmatprep.subr.mxu0 0.0
      %2207 = vmatpush2.msra.mxu0 0.0
      %2208 = vmatprep.subr.mxu0 0.0
      %2209 = vmatpush2.msra.mxu0 0.0
      %2210 = vmatprep.subr.mxu0 0.0
      %2211 = vmatpush2.msra.mxu0 0.0
      %2212 = vmatprep.subr.mxu0 0.0
      %2213 = vmatpush2.msra.mxu0 0.0
      %2214 = vmatprep.mubr.f32.mxu0 0.0
      %2215 = vmatmul.mubr.f32.gmra.mxu0 %v2125
      %v2216 = vpop.f32.mrf.mxu0
      %v2217 = vadd.f32 0.0, %v2216
      %v2218 = vpop.f32.mrf.mxu0
      %2219 = vmatprep.mubr.f32.mxu0 0.0
      %2220 = vmatmul.mubr.f32.gmra.mxu0 %v2130
      %v2221 = vpop.f32.mrf.mxu0
      %v2222 = vadd.f32 0.0, %v2221
      %v2223 = vpop.f32.mrf.mxu0
      %2224 = vdwg.mxu0
      %v2225 = vadd.f32 %v2047, %v2217
      %v2226 = vadd.f32 %v2048, %v2222
      %v2227 = vmul.f32 %v352, 0.3
      %v2228 = vmul.f32 %v353, 0.3
      %v2229 = vsub.f32 %v350, %v2227
      %v2230 = vsub.f32 %v351, %v2228
      %v2231 = vmul.f32 %v2229, 0.6
      %v2232 = vmul.f32 %v2230, 0.6
      %v2233 = vadd.f32 %v2231, %v2225
      %v2234 = vadd.f32 %v2232, %v2226
      %vm2235 = vcmp.gt.f32.partialorder %v2233, 0.3
      %vm2236 = vcmp.gt.f32.partialorder %v2234, 0.3
      %v2237 = vsel %vm2235, 1, 0
      %v2238 = vsel %vm2236, 1, 0
      %v2239 = vcvt.s32.f32 %v2237
      %v2240 = vcvt.s32.f32 %v2238
      %v2241 = vld [vmem:[%s9] sm:$0xff]
      %v2242 = vld [vmem:[%s9 + $0x8] sm:$0xff]
      %v2243 = vld [vmem:[%s9 + $0x10] sm:$0xff]
      %v2244 = vld [vmem:[%s9 + $0x18] sm:$0xff]
      %v2245 = vld [vmem:[%s9 + $0x20] sm:$0xff]
      %v2246 = vld [vmem:[%s9 + $0x28] sm:$0xff]
      %v2247 = vld [vmem:[%s9 + $0x30] sm:$0xff]
      %v2248 = vld [vmem:[%s9 + $0x38] sm:$0xff]
      %v2249 = vld [vmem:[%s9 + $0x40] sm:$0xff]
      %v2250 = vld [vmem:[%s9 + $0x48] sm:$0xff]
      %v2251 = vld [vmem:[%s9 + $0x50] sm:$0xff]
      %v2252 = vld [vmem:[%s9 + $0x58] sm:$0xff]
      %v2253 = vld [vmem:[%s9 + $0x60] sm:$0xff]
      %v2254 = vld [vmem:[%s9 + $0x68] sm:$0xff]
      %v2255 = vld [vmem:[%s9 + $0x70] sm:$0xff]
      %v2256 = vld [vmem:[%s9 + $0x78] sm:$0xff]
      %2257 = vmatprep.subr.mxu0 0.0
      %2258 = vmatpush1.msra.mxu0 %v2256
      %2259 = vmatprep.subr.mxu0 0.0
      %2260 = vmatpush1.msra.mxu0 %v2255
      %2261 = vmatprep.subr.mxu0 0.0
      %2262 = vmatpush1.msra.mxu0 %v2254
      %2263 = vmatprep.subr.mxu0 0.0
      %2264 = vmatpush1.msra.mxu0 %v2253
      %2265 = vmatprep.subr.mxu0 0.0
      %2266 = vmatpush1.msra.mxu0 %v2252
      %2267 = vmatprep.subr.mxu0 0.0
      %2268 = vmatpush1.msra.mxu0 %v2251
      %2269 = vmatprep.subr.mxu0 0.0
      %2270 = vmatpush1.msra.mxu0 %v2250
      %2271 = vmatprep.subr.mxu0 0.0
      %2272 = vmatpush1.msra.mxu0 %v2249
      %2273 = vmatprep.subr.mxu0 0.0
      %2274 = vmatpush1.msra.mxu0 %v2248
      %2275 = vmatprep.subr.mxu0 0.0
      %2276 = vmatpush1.msra.mxu0 %v2247
      %2277 = vmatprep.subr.mxu0 0.0
      %2278 = vmatpush1.msra.mxu0 %v2246
      %2279 = vmatprep.subr.mxu0 0.0
      %2280 = vmatpush1.msra.mxu0 %v2245
      %2281 = vmatprep.subr.mxu0 0.0
      %2282 = vmatpush1.msra.mxu0 %v2244
      %2283 = vmatprep.subr.mxu0 0.0
      %2284 = vmatpush1.msra.mxu0 %v2243
      %2285 = vmatprep.subr.mxu0 0.0
      %2286 = vmatpush1.msra.mxu0 %v2242
      %2287 = vmatprep.subr.mxu0 0.0
      %2288 = vmatpush1.msra.mxu0 %v2241
      %2289 = vmatprep.subr.mxu0 0.0
      %2290 = vmatpush2.msra.mxu0 0.0
      %2291 = vmatprep.subr.mxu0 0.0
      %2292 = vmatpush2.msra.mxu0 0.0
      %2293 = vmatprep.subr.mxu0 0.0
      %2294 = vmatpush2.msra.mxu0 0.0
      %2295 = vmatprep.subr.mxu0 0.0
      %2296 = vmatpush2.msra.mxu0 0.0
      %2297 = vmatprep.subr.mxu0 0.0
      %2298 = vmatpush2.msra.mxu0 0.0
      %2299 = vmatprep.subr.mxu0 0.0
      %2300 = vmatpush2.msra.mxu0 0.0
      %2301 = vmatprep.subr.mxu0 0.0
      %2302 = vmatpush2.msra.mxu0 0.0
      %2303 = vmatprep.subr.mxu0 0.0
      %2304 = vmatpush2.msra.mxu0 0.0
      %2305 = vmatprep.subr.mxu0 0.0
      %2306 = vmatpush2.msra.mxu0 0.0
      %2307 = vmatprep.subr.mxu0 0.0
      %2308 = vmatpush2.msra.mxu0 0.0
      %2309 = vmatprep.subr.mxu0 0.0
      %2310 = vmatpush2.msra.mxu0 0.0
      %2311 = vmatprep.subr.mxu0 0.0
      %2312 = vmatpush2.msra.mxu0 0.0
      %2313 = vmatprep.subr.mxu0 0.0
      %2314 = vmatpush2.msra.mxu0 0.0
      %2315 = vmatprep.subr.mxu0 0.0
      %2316 = vmatpush2.msra.mxu0 0.0
      %2317 = vmatprep.subr.mxu0 0.0
      %2318 = vmatpush2.msra.mxu0 0.0
      %2319 = vmatprep.subr.mxu0 0.0
      %2320 = vmatpush2.msra.mxu0 0.0
      %2321 = vmatprep.mubr.f32.mxu0 0.0
      %2322 = vmatmul.mubr.f32.gmra.mxu0 %v2239
      %v2323 = vpop.f32.mrf.mxu0
      %v2324 = vadd.f32 0.0, %v2323
      %v2325 = vpop.f32.mrf.mxu0
      %2326 = vmatprep.mubr.f32.mxu0 0.0
      %2327 = vmatmul.mubr.f32.gmra.mxu0 %v2240
      %v2328 = vpop.f32.mrf.mxu0
      %v2329 = vadd.f32 0.0, %v2328
      %v2330 = vpop.f32.mrf.mxu0
      %2331 = vdwg.mxu0
      %v2332 = vmul.f32 %v2324, %v612
      %v2333 = vmul.f32 %v2329, %v612
      %v2334 = vld [vmem:[%s11] sm:$0xff]
      %v2335 = vld [vmem:[%s11 + $0x8] sm:$0xff]
      %v2336 = vld [vmem:[#allocation9] sm:$0xff]
      %v2337 = vld [vmem:[#allocation9 + $0x8] sm:$0xff]
      %vm2338 = vcmask 130048
      %v2340 = vsel %vm2338, %v2336, 0
      %v2343 = vsel %vm2338, %v2337, 0
      %2345 = vmatprep.subr.mxu0 0.0
      %2346 = vmatpush1.msra.mxu0 0.0
      %2347 = vmatprep.subr.mxu0 0.0
      %2348 = vmatpush1.msra.mxu0 0.0
      %2349 = vmatprep.subr.mxu0 0.0
      %2350 = vmatpush1.msra.mxu0 0.0
      %2351 = vmatprep.subr.mxu0 0.0
      %2352 = vmatpush1.msra.mxu0 0.0
      %2353 = vmatprep.subr.mxu0 0.0
      %2354 = vmatpush1.msra.mxu0 0.0
      %2355 = vmatprep.subr.mxu0 0.0
      %2356 = vmatpush1.msra.mxu0 0.0
      %2357 = vmatprep.subr.mxu0 0.0
      %2358 = vmatpush1.msra.mxu0 0.0
      %2359 = vmatprep.subr.mxu0 0.0
      %2360 = vmatpush1.msra.mxu0 0.0
      %2361 = vmatprep.subr.mxu0 0.0
      %2362 = vmatpush1.msra.mxu0 0.0
      %2363 = vmatprep.subr.mxu0 0.0
      %2364 = vmatpush1.msra.mxu0 0.0
      %2365 = vmatprep.subr.mxu0 0.0
      %2366 = vmatpush1.msra.mxu0 0.0
      %2367 = vmatprep.subr.mxu0 0.0
      %2368 = vmatpush1.msra.mxu0 0.0
      %2369 = vmatprep.subr.mxu0 0.0
      %2370 = vmatpush1.msra.mxu0 0.0
      %2371 = vmatprep.subr.mxu0 0.0
      %2372 = vmatpush1.msra.mxu0 0.0
      %2373 = vmatprep.subr.mxu0 0.0
      %2374 = vmatpush1.msra.mxu0 %v2333
      %2375 = vmatprep.subr.mxu0 0.0
      %2376 = vmatpush1.msra.mxu0 %v2332
      %2377 = vmatprep.subr.mxu0 0.0
      %2378 = vmatpush2.msra.mxu0 0.0
      %2379 = vmatprep.subr.mxu0 0.0
      %2380 = vmatpush2.msra.mxu0 0.0
      %2381 = vmatprep.subr.mxu0 0.0
      %2382 = vmatpush2.msra.mxu0 0.0
      %2383 = vmatprep.subr.mxu0 0.0
      %2384 = vmatpush2.msra.mxu0 0.0
      %2385 = vmatprep.subr.mxu0 0.0
      %2386 = vmatpush2.msra.mxu0 0.0
      %2387 = vmatprep.subr.mxu0 0.0
      %2388 = vmatpush2.msra.mxu0 0.0
      %2389 = vmatprep.subr.mxu0 0.0
      %2390 = vmatpush2.msra.mxu0 0.0
      %2391 = vmatprep.subr.mxu0 0.0
      %2392 = vmatpush2.msra.mxu0 0.0
      %2393 = vmatprep.subr.mxu0 0.0
      %2394 = vmatpush2.msra.mxu0 0.0
      %2395 = vmatprep.subr.mxu0 0.0
      %2396 = vmatpush2.msra.mxu0 0.0
      %2397 = vmatprep.subr.mxu0 0.0
      %2398 = vmatpush2.msra.mxu0 0.0
      %2399 = vmatprep.subr.mxu0 0.0
      %2400 = vmatpush2.msra.mxu0 0.0
      %2401 = vmatprep.subr.mxu0 0.0
      %2402 = vmatpush2.msra.mxu0 0.0
      %2403 = vmatprep.subr.mxu0 0.0
      %2404 = vmatpush2.msra.mxu0 0.0
      %2405 = vmatprep.subr.mxu0 0.0
      %2406 = vmatpush2.msra.mxu0 0.0
      %2407 = vmatprep.subr.mxu0 0.0
      %2408 = vmatpush2.msra.mxu0 0.0
      %2409 = vmatprep.mubr.f32.mxu0 0.0
      %2410 = vmatmul.mubr.f32.gmra.mxu0 %v2340
      %v2411 = vpop.f32.mrf.mxu0
      %v2412 = vadd.f32 0.0, %v2411
      %v2413 = vpop.f32.mrf.mxu0
      %2414 = vmatprep.mubr.f32.mxu0 0.0
      %2415 = vmatmul.mubr.f32.gmra.mxu0 %v2343
      %v2416 = vpop.f32.mrf.mxu0
      %v2417 = vadd.f32 0.0, %v2416
      %v2418 = vpop.f32.mrf.mxu0
      %2419 = vdwg.mxu0
      %v2420 = vld [vmem:[#allocation11] sm:$0xff]
      %v2421 = vld [vmem:[#allocation11 + $0x8] sm:$0xff]
      %v2422 = vld [vmem:[#allocation11 + $0x10] sm:$0xff]
      %v2423 = vld [vmem:[#allocation11 + $0x18] sm:$0xff]
      %vm2424 = vcmask 261120
      %v2426 = vsel %vm2424, %v2412, 0
      %v2429 = vsel %vm2424, %v2417, 0
      %2431 = vmatprep.subr.mxu0 0.0
      %2432 = vmatpush1.msra.mxu0 0.0
      %2433 = vmatprep.subr.mxu0 0.0
      %2434 = vmatpush1.msra.mxu0 0.0
      %2435 = vmatprep.subr.mxu0 0.0
      %2436 = vmatpush1.msra.mxu0 0.0
      %2437 = vmatprep.subr.mxu0 0.0
      %2438 = vmatpush1.msra.mxu0 0.0
      %2439 = vmatprep.subr.mxu0 0.0
      %2440 = vmatpush1.msra.mxu0 0.0
      %2441 = vmatprep.subr.mxu0 0.0
      %2442 = vmatpush1.msra.mxu0 0.0
      %2443 = vmatprep.subr.mxu0 0.0
      %2444 = vmatpush1.msra.mxu0 0.0
      %2445 = vmatprep.subr.mxu0 0.0
      %2446 = vmatpush1.msra.mxu0 0.0
      %2447 = vmatprep.subr.mxu0 0.0
      %2448 = vmatpush1.msra.mxu0 0.0
      %2449 = vmatprep.subr.mxu0 0.0
      %2450 = vmatpush1.msra.mxu0 0.0
      %2451 = vmatprep.subr.mxu0 0.0
      %2452 = vmatpush1.msra.mxu0 0.0
      %2453 = vmatprep.subr.mxu0 0.0
      %2454 = vmatpush1.msra.mxu0 0.0
      %2455 = vmatprep.subr.mxu0 0.0
      %2456 = vmatpush1.msra.mxu0 %v2423
      %2457 = vmatprep.subr.mxu0 0.0
      %2458 = vmatpush1.msra.mxu0 %v2422
      %2459 = vmatprep.subr.mxu0 0.0
      %2460 = vmatpush1.msra.mxu0 %v2421
      %2461 = vmatprep.subr.mxu0 0.0
      %2462 = vmatpush1.msra.mxu0 %v2420
      %2463 = vmatprep.subr.mxu0 0.0
      %2464 = vmatpush2.msra.mxu0 0.0
      %2465 = vmatprep.subr.mxu0 0.0
      %2466 = vmatpush2.msra.mxu0 0.0
      %2467 = vmatprep.subr.mxu0 0.0
      %2468 = vmatpush2.msra.mxu0 0.0
      %2469 = vmatprep.subr.mxu0 0.0
      %2470 = vmatpush2.msra.mxu0 0.0
      %2471 = vmatprep.subr.mxu0 0.0
      %2472 = vmatpush2.msra.mxu0 0.0
      %2473 = vmatprep.subr.mxu0 0.0
      %2474 = vmatpush2.msra.mxu0 0.0
      %2475 = vmatprep.subr.mxu0 0.0
      %2476 = vmatpush2.msra.mxu0 0.0
      %2477 = vmatprep.subr.mxu0 0.0
      %2478 = vmatpush2.msra.mxu0 0.0
      %2479 = vmatprep.subr.mxu0 0.0
      %2480 = vmatpush2.msra.mxu0 0.0
      %2481 = vmatprep.subr.mxu0 0.0
      %2482 = vmatpush2.msra.mxu0 0.0
      %2483 = vmatprep.subr.mxu0 0.0
      %2484 = vmatpush2.msra.mxu0 0.0
      %2485 = vmatprep.subr.mxu0 0.0
      %2486 = vmatpush2.msra.mxu0 0.0
      %2487 = vmatprep.subr.mxu0 0.0
      %2488 = vmatpush2.msra.mxu0 0.0
      %2489 = vmatprep.subr.mxu0 0.0
      %2490 = vmatpush2.msra.mxu0 0.0
      %2491 = vmatprep.subr.mxu0 0.0
      %2492 = vmatpush2.msra.mxu0 0.0
      %2493 = vmatprep.subr.mxu0 0.0
      %2494 = vmatpush2.msra.mxu0 0.0
      %2495 = vmatprep.mubr.f32.mxu0 0.0
      %2496 = vmatmul.mubr.f32.gmra.mxu0 %v2426
      %v2497 = vpop.f32.mrf.mxu0
      %v2498 = vadd.f32 0.0, %v2497
      %v2499 = vpop.f32.mrf.mxu0
      %2500 = vmatprep.mubr.f32.mxu0 0.0
      %2501 = vmatmul.mubr.f32.gmra.mxu0 %v2429
      %v2502 = vpop.f32.mrf.mxu0
      %v2503 = vadd.f32 0.0, %v2502
      %v2504 = vpop.f32.mrf.mxu0
      %2505 = vdwg.mxu0
      %2507 = vset.pattern.permute.xlu0 0
      %2508 = vperm.xlu0 %2507, %v2334
      %v2509 = vpop.permute.xlu0 %2508
      %2512 = vset.pattern.permute.xlu0 0
      %2513 = vperm.xlu0 %2512, %v2335
      %v2514 = vpop.permute.xlu0 %2513
      %v2516 = vadd.f32 %v2509, %v2498
      %v2517 = vadd.f32 %v2514, %v2503
      %s2518 = scalar_lea.vmem [#allocation9], 16
      %v2519 = vld [vmem:[%s2518] sm:$0xff]
      %v2520 = vld [vmem:[%s2518 + $0x8] sm:$0xff]
      %v2522 = vsel %vm2338, %v2519, 0
      %v2525 = vsel %vm2338, %v2520, 0
      %2527 = vmatprep.subr.mxu0 0.0
      %2528 = vmatpush1.msra.mxu0 0.0
      %2529 = vmatprep.subr.mxu0 0.0
      %2530 = vmatpush1.msra.mxu0 0.0
      %2531 = vmatprep.subr.mxu0 0.0
      %2532 = vmatpush1.msra.mxu0 0.0
      %2533 = vmatprep.subr.mxu0 0.0
      %2534 = vmatpush1.msra.mxu0 0.0
      %2535 = vmatprep.subr.mxu0 0.0
      %2536 = vmatpush1.msra.mxu0 0.0
      %2537 = vmatprep.subr.mxu0 0.0
      %2538 = vmatpush1.msra.mxu0 0.0
      %2539 = vmatprep.subr.mxu0 0.0
      %2540 = vmatpush1.msra.mxu0 0.0
      %2541 = vmatprep.subr.mxu0 0.0
      %2542 = vmatpush1.msra.mxu0 0.0
      %2543 = vmatprep.subr.mxu0 0.0
      %2544 = vmatpush1.msra.mxu0 0.0
      %2545 = vmatprep.subr.mxu0 0.0
      %2546 = vmatpush1.msra.mxu0 0.0
      %2547 = vmatprep.subr.mxu0 0.0
      %2548 = vmatpush1.msra.mxu0 0.0
      %2549 = vmatprep.subr.mxu0 0.0
      %2550 = vmatpush1.msra.mxu0 0.0
      %2551 = vmatprep.subr.mxu0 0.0
      %2552 = vmatpush1.msra.mxu0 0.0
      %2553 = vmatprep.subr.mxu0 0.0
      %2554 = vmatpush1.msra.mxu0 0.0
      %2555 = vmatprep.subr.mxu0 0.0
      %2556 = vmatpush1.msra.mxu0 %v2333
      %2557 = vmatprep.subr.mxu0 0.0
      %2558 = vmatpush1.msra.mxu0 %v2332
      %2559 = vmatprep.subr.mxu0 0.0
      %2560 = vmatpush2.msra.mxu0 0.0
      %2561 = vmatprep.subr.mxu0 0.0
      %2562 = vmatpush2.msra.mxu0 0.0
      %2563 = vmatprep.subr.mxu0 0.0
      %2564 = vmatpush2.msra.mxu0 0.0
      %2565 = vmatprep.subr.mxu0 0.0
      %2566 = vmatpush2.msra.mxu0 0.0
      %2567 = vmatprep.subr.mxu0 0.0
      %2568 = vmatpush2.msra.mxu0 0.0
      %2569 = vmatprep.subr.mxu0 0.0
      %2570 = vmatpush2.msra.mxu0 0.0
      %2571 = vmatprep.subr.mxu0 0.0
      %2572 = vmatpush2.msra.mxu0 0.0
      %2573 = vmatprep.subr.mxu0 0.0
      %2574 = vmatpush2.msra.mxu0 0.0
      %2575 = vmatprep.subr.mxu0 0.0
      %2576 = vmatpush2.msra.mxu0 0.0
      %2577 = vmatprep.subr.mxu0 0.0
      %2578 = vmatpush2.msra.mxu0 0.0
      %2579 = vmatprep.subr.mxu0 0.0
      %2580 = vmatpush2.msra.mxu0 0.0
      %2581 = vmatprep.subr.mxu0 0.0
      %2582 = vmatpush2.msra.mxu0 0.0
      %2583 = vmatprep.subr.mxu0 0.0
      %2584 = vmatpush2.msra.mxu0 0.0
      %2585 = vmatprep.subr.mxu0 0.0
      %2586 = vmatpush2.msra.mxu0 0.0
      %2587 = vmatprep.subr.mxu0 0.0
      %2588 = vmatpush2.msra.mxu0 0.0
      %2589 = vmatprep.subr.mxu0 0.0
      %2590 = vmatpush2.msra.mxu0 0.0
      %2591 = vmatprep.mubr.f32.mxu0 0.0
      %2592 = vmatmul.mubr.f32.gmra.mxu0 %v2522
      %v2593 = vpop.f32.mrf.mxu0
      %v2594 = vadd.f32 0.0, %v2593
      %v2595 = vpop.f32.mrf.mxu0
      %2596 = vmatprep.mubr.f32.mxu0 0.0
      %2597 = vmatmul.mubr.f32.gmra.mxu0 %v2525
      %v2598 = vpop.f32.mrf.mxu0
      %v2599 = vadd.f32 0.0, %v2598
      %v2600 = vpop.f32.mrf.mxu0
      %2601 = vdwg.mxu0
      %s2602 = scalar_lea.vmem [#allocation11], 32
      %v2603 = vld [vmem:[%s2602] sm:$0xff]
      %v2604 = vld [vmem:[%s2602 + $0x8] sm:$0xff]
      %v2605 = vld [vmem:[%s2602 + $0x10] sm:$0xff]
      %v2606 = vld [vmem:[%s2602 + $0x18] sm:$0xff]
      %v2608 = vsel %vm2424, %v2594, 0
      %v2611 = vsel %vm2424, %v2599, 0
      %2613 = vmatprep.subr.mxu0 0.0
      %2614 = vmatpush1.msra.mxu0 0.0
      %2615 = vmatprep.subr.mxu0 0.0
      %2616 = vmatpush1.msra.mxu0 0.0
      %2617 = vmatprep.subr.mxu0 0.0
      %2618 = vmatpush1.msra.mxu0 0.0
      %2619 = vmatprep.subr.mxu0 0.0
      %2620 = vmatpush1.msra.mxu0 0.0
      %2621 = vmatprep.subr.mxu0 0.0
      %2622 = vmatpush1.msra.mxu0 0.0
      %2623 = vmatprep.subr.mxu0 0.0
      %2624 = vmatpush1.msra.mxu0 0.0
      %2625 = vmatprep.subr.mxu0 0.0
      %2626 = vmatpush1.msra.mxu0 0.0
      %2627 = vmatprep.subr.mxu0 0.0
      %2628 = vmatpush1.msra.mxu0 0.0
      %2629 = vmatprep.subr.mxu0 0.0
      %2630 = vmatpush1.msra.mxu0 0.0
      %2631 = vmatprep.subr.mxu0 0.0
      %2632 = vmatpush1.msra.mxu0 0.0
      %2633 = vmatprep.subr.mxu0 0.0
      %2634 = vmatpush1.msra.mxu0 0.0
      %2635 = vmatprep.subr.mxu0 0.0
      %2636 = vmatpush1.msra.mxu0 0.0
      %2637 = vmatprep.subr.mxu0 0.0
      %2638 = vmatpush1.msra.mxu0 %v2606
      %2639 = vmatprep.subr.mxu0 0.0
      %2640 = vmatpush1.msra.mxu0 %v2605
      %2641 = vmatprep.subr.mxu0 0.0
      %2642 = vmatpush1.msra.mxu0 %v2604
      %2643 = vmatprep.subr.mxu0 0.0
      %2644 = vmatpush1.msra.mxu0 %v2603
      %2645 = vmatprep.subr.mxu0 0.0
      %2646 = vmatpush2.msra.mxu0 0.0
      %2647 = vmatprep.subr.mxu0 0.0
      %2648 = vmatpush2.msra.mxu0 0.0
      %2649 = vmatprep.subr.mxu0 0.0
      %2650 = vmatpush2.msra.mxu0 0.0
      %2651 = vmatprep.subr.mxu0 0.0
      %2652 = vmatpush2.msra.mxu0 0.0
      %2653 = vmatprep.subr.mxu0 0.0
      %2654 = vmatpush2.msra.mxu0 0.0
      %2655 = vmatprep.subr.mxu0 0.0
      %2656 = vmatpush2.msra.mxu0 0.0
      %2657 = vmatprep.subr.mxu0 0.0
      %2658 = vmatpush2.msra.mxu0 0.0
      %2659 = vmatprep.subr.mxu0 0.0
      %2660 = vmatpush2.msra.mxu0 0.0
      %2661 = vmatprep.subr.mxu0 0.0
      %2662 = vmatpush2.msra.mxu0 0.0
      %2663 = vmatprep.subr.mxu0 0.0
      %2664 = vmatpush2.msra.mxu0 0.0
      %2665 = vmatprep.subr.mxu0 0.0
      %2666 = vmatpush2.msra.mxu0 0.0
      %2667 = vmatprep.subr.mxu0 0.0
      %2668 = vmatpush2.msra.mxu0 0.0
      %2669 = vmatprep.subr.mxu0 0.0
      %2670 = vmatpush2.msra.mxu0 0.0
      %2671 = vmatprep.subr.mxu0 0.0
      %2672 = vmatpush2.msra.mxu0 0.0
      %2673 = vmatprep.subr.mxu0 0.0
      %2674 = vmatpush2.msra.mxu0 0.0
      %2675 = vmatprep.subr.mxu0 0.0
      %2676 = vmatpush2.msra.mxu0 0.0
      %2677 = vmatprep.mubr.f32.mxu0 0.0
      %2678 = vmatmul.mubr.f32.gmra.mxu0 %v2608
      %v2679 = vpop.f32.mrf.mxu0
      %v2680 = vadd.f32 0.0, %v2679
      %v2681 = vpop.f32.mrf.mxu0
      %2682 = vmatprep.mubr.f32.mxu0 0.0
      %2683 = vmatmul.mubr.f32.gmra.mxu0 %v2611
      %v2684 = vpop.f32.mrf.mxu0
      %v2685 = vadd.f32 0.0, %v2684
      %v2686 = vpop.f32.mrf.mxu0
      %2687 = vdwg.mxu0
      %v2688 = vadd.f32 %v2516, %v2680
      %v2689 = vadd.f32 %v2517, %v2685
      %s2690 = scalar_lea.vmem [#allocation9], 32
      %v2691 = vld [vmem:[%s2690] sm:$0xff]
      %v2692 = vld [vmem:[%s2690 + $0x8] sm:$0xff]
      %v2694 = vsel %vm2338, %v2691, 0
      %v2697 = vsel %vm2338, %v2692, 0
      %2699 = vmatprep.subr.mxu0 0.0
      %2700 = vmatpush1.msra.mxu0 0.0
      %2701 = vmatprep.subr.mxu0 0.0
      %2702 = vmatpush1.msra.mxu0 0.0
      %2703 = vmatprep.subr.mxu0 0.0
      %2704 = vmatpush1.msra.mxu0 0.0
      %2705 = vmatprep.subr.mxu0 0.0
      %2706 = vmatpush1.msra.mxu0 0.0
      %2707 = vmatprep.subr.mxu0 0.0
      %2708 = vmatpush1.msra.mxu0 0.0
      %2709 = vmatprep.subr.mxu0 0.0
      %2710 = vmatpush1.msra.mxu0 0.0
      %2711 = vmatprep.subr.mxu0 0.0
      %2712 = vmatpush1.msra.mxu0 0.0
      %2713 = vmatprep.subr.mxu0 0.0
      %2714 = vmatpush1.msra.mxu0 0.0
      %2715 = vmatprep.subr.mxu0 0.0
      %2716 = vmatpush1.msra.mxu0 0.0
      %2717 = vmatprep.subr.mxu0 0.0
      %2718 = vmatpush1.msra.mxu0 0.0
      %2719 = vmatprep.subr.mxu0 0.0
      %2720 = vmatpush1.msra.mxu0 0.0
      %2721 = vmatprep.subr.mxu0 0.0
      %2722 = vmatpush1.msra.mxu0 0.0
      %2723 = vmatprep.subr.mxu0 0.0
      %2724 = vmatpush1.msra.mxu0 0.0
      %2725 = vmatprep.subr.mxu0 0.0
      %2726 = vmatpush1.msra.mxu0 0.0
      %2727 = vmatprep.subr.mxu0 0.0
      %2728 = vmatpush1.msra.mxu0 %v2333
      %2729 = vmatprep.subr.mxu0 0.0
      %2730 = vmatpush1.msra.mxu0 %v2332
      %2731 = vmatprep.subr.mxu0 0.0
      %2732 = vmatpush2.msra.mxu0 0.0
      %2733 = vmatprep.subr.mxu0 0.0
      %2734 = vmatpush2.msra.mxu0 0.0
      %2735 = vmatprep.subr.mxu0 0.0
      %2736 = vmatpush2.msra.mxu0 0.0
      %2737 = vmatprep.subr.mxu0 0.0
      %2738 = vmatpush2.msra.mxu0 0.0
      %2739 = vmatprep.subr.mxu0 0.0
      %2740 = vmatpush2.msra.mxu0 0.0
      %2741 = vmatprep.subr.mxu0 0.0
      %2742 = vmatpush2.msra.mxu0 0.0
      %2743 = vmatprep.subr.mxu0 0.0
      %2744 = vmatpush2.msra.mxu0 0.0
      %2745 = vmatprep.subr.mxu0 0.0
      %2746 = vmatpush2.msra.mxu0 0.0
      %2747 = vmatprep.subr.mxu0 0.0
      %2748 = vmatpush2.msra.mxu0 0.0
      %2749 = vmatprep.subr.mxu0 0.0
      %2750 = vmatpush2.msra.mxu0 0.0
      %2751 = vmatprep.subr.mxu0 0.0
      %2752 = vmatpush2.msra.mxu0 0.0
      %2753 = vmatprep.subr.mxu0 0.0
      %2754 = vmatpush2.msra.mxu0 0.0
      %2755 = vmatprep.subr.mxu0 0.0
      %2756 = vmatpush2.msra.mxu0 0.0
      %2757 = vmatprep.subr.mxu0 0.0
      %2758 = vmatpush2.msra.mxu0 0.0
      %2759 = vmatprep.subr.mxu0 0.0
      %2760 = vmatpush2.msra.mxu0 0.0
      %2761 = vmatprep.subr.mxu0 0.0
      %2762 = vmatpush2.msra.mxu0 0.0
      %2763 = vmatprep.mubr.f32.mxu0 0.0
      %2764 = vmatmul.mubr.f32.gmra.mxu0 %v2694
      %v2765 = vpop.f32.mrf.mxu0
      %v2766 = vadd.f32 0.0, %v2765
      %v2767 = vpop.f32.mrf.mxu0
      %2768 = vmatprep.mubr.f32.mxu0 0.0
      %2769 = vmatmul.mubr.f32.gmra.mxu0 %v2697
      %v2770 = vpop.f32.mrf.mxu0
      %v2771 = vadd.f32 0.0, %v2770
      %v2772 = vpop.f32.mrf.mxu0
      %2773 = vdwg.mxu0
      %s2774 = scalar_lea.vmem [#allocation11], 64
      %v2775 = vld [vmem:[%s2774] sm:$0xff]
      %v2776 = vld [vmem:[%s2774 + $0x8] sm:$0xff]
      %v2777 = vld [vmem:[%s2774 + $0x10] sm:$0xff]
      %v2778 = vld [vmem:[%s2774 + $0x18] sm:$0xff]
      %v2780 = vsel %vm2424, %v2766, 0
      %v2783 = vsel %vm2424, %v2771, 0
      %2785 = vmatprep.subr.mxu0 0.0
      %2786 = vmatpush1.msra.mxu0 0.0
      %2787 = vmatprep.subr.mxu0 0.0
      %2788 = vmatpush1.msra.mxu0 0.0
      %2789 = vmatprep.subr.mxu0 0.0
      %2790 = vmatpush1.msra.mxu0 0.0
      %2791 = vmatprep.subr.mxu0 0.0
      %2792 = vmatpush1.msra.mxu0 0.0
      %2793 = vmatprep.subr.mxu0 0.0
      %2794 = vmatpush1.msra.mxu0 0.0
      %2795 = vmatprep.subr.mxu0 0.0
      %2796 = vmatpush1.msra.mxu0 0.0
      %2797 = vmatprep.subr.mxu0 0.0
      %2798 = vmatpush1.msra.mxu0 0.0
      %2799 = vmatprep.subr.mxu0 0.0
      %2800 = vmatpush1.msra.mxu0 0.0
      %2801 = vmatprep.subr.mxu0 0.0
      %2802 = vmatpush1.msra.mxu0 0.0
      %2803 = vmatprep.subr.mxu0 0.0
      %2804 = vmatpush1.msra.mxu0 0.0
      %2805 = vmatprep.subr.mxu0 0.0
      %2806 = vmatpush1.msra.mxu0 0.0
      %2807 = vmatprep.subr.mxu0 0.0
      %2808 = vmatpush1.msra.mxu0 0.0
      %2809 = vmatprep.subr.mxu0 0.0
      %2810 = vmatpush1.msra.mxu0 %v2778
      %2811 = vmatprep.subr.mxu0 0.0
      %2812 = vmatpush1.msra.mxu0 %v2777
      %2813 = vmatprep.subr.mxu0 0.0
      %2814 = vmatpush1.msra.mxu0 %v2776
      %2815 = vmatprep.subr.mxu0 0.0
      %2816 = vmatpush1.msra.mxu0 %v2775
      %2817 = vmatprep.subr.mxu0 0.0
      %2818 = vmatpush2.msra.mxu0 0.0
      %2819 = vmatprep.subr.mxu0 0.0
      %2820 = vmatpush2.msra.mxu0 0.0
      %2821 = vmatprep.subr.mxu0 0.0
      %2822 = vmatpush2.msra.mxu0 0.0
      %2823 = vmatprep.subr.mxu0 0.0
      %2824 = vmatpush2.msra.mxu0 0.0
      %2825 = vmatprep.subr.mxu0 0.0
      %2826 = vmatpush2.msra.mxu0 0.0
      %2827 = vmatprep.subr.mxu0 0.0
      %2828 = vmatpush2.msra.mxu0 0.0
      %2829 = vmatprep.subr.mxu0 0.0
      %2830 = vmatpush2.msra.mxu0 0.0
      %2831 = vmatprep.subr.mxu0 0.0
      %2832 = vmatpush2.msra.mxu0 0.0
      %2833 = vmatprep.subr.mxu0 0.0
      %2834 = vmatpush2.msra.mxu0 0.0
      %2835 = vmatprep.subr.mxu0 0.0
      %2836 = vmatpush2.msra.mxu0 0.0
      %2837 = vmatprep.subr.mxu0 0.0
      %2838 = vmatpush2.msra.mxu0 0.0
      %2839 = vmatprep.subr.mxu0 0.0
      %2840 = vmatpush2.msra.mxu0 0.0
      %2841 = vmatprep.subr.mxu0 0.0
      %2842 = vmatpush2.msra.mxu0 0.0
      %2843 = vmatprep.subr.mxu0 0.0
      %2844 = vmatpush2.msra.mxu0 0.0
      %2845 = vmatprep.subr.mxu0 0.0
      %2846 = vmatpush2.msra.mxu0 0.0
      %2847 = vmatprep.subr.mxu0 0.0
      %2848 = vmatpush2.msra.mxu0 0.0
      %2849 = vmatprep.mubr.f32.mxu0 0.0
      %2850 = vmatmul.mubr.f32.gmra.mxu0 %v2780
      %v2851 = vpop.f32.mrf.mxu0
      %v2852 = vadd.f32 0.0, %v2851
      %v2853 = vpop.f32.mrf.mxu0
      %2854 = vmatprep.mubr.f32.mxu0 0.0
      %2855 = vmatmul.mubr.f32.gmra.mxu0 %v2783
      %v2856 = vpop.f32.mrf.mxu0
      %v2857 = vadd.f32 0.0, %v2856
      %v2858 = vpop.f32.mrf.mxu0
      %2859 = vdwg.mxu0
      %v2860 = vadd.f32 %v2688, %v2852
      %v2861 = vadd.f32 %v2689, %v2857
      %s2862 = scalar_lea.vmem [#allocation9], 48
      %v2863 = vld [vmem:[%s2862] sm:$0xff]
      %v2864 = vld [vmem:[%s2862 + $0x8] sm:$0xff]
      %v2866 = vsel %vm2338, %v2863, 0
      %v2869 = vsel %vm2338, %v2864, 0
      %2871 = vmatprep.subr.mxu0 0.0
      %2872 = vmatpush1.msra.mxu0 0.0
      %2873 = vmatprep.subr.mxu0 0.0
      %2874 = vmatpush1.msra.mxu0 0.0
      %2875 = vmatprep.subr.mxu0 0.0
      %2876 = vmatpush1.msra.mxu0 0.0
      %2877 = vmatprep.subr.mxu0 0.0
      %2878 = vmatpush1.msra.mxu0 0.0
      %2879 = vmatprep.subr.mxu0 0.0
      %2880 = vmatpush1.msra.mxu0 0.0
      %2881 = vmatprep.subr.mxu0 0.0
      %2882 = vmatpush1.msra.mxu0 0.0
      %2883 = vmatprep.subr.mxu0 0.0
      %2884 = vmatpush1.msra.mxu0 0.0
      %2885 = vmatprep.subr.mxu0 0.0
      %2886 = vmatpush1.msra.mxu0 0.0
      %2887 = vmatprep.subr.mxu0 0.0
      %2888 = vmatpush1.msra.mxu0 0.0
      %2889 = vmatprep.subr.mxu0 0.0
      %2890 = vmatpush1.msra.mxu0 0.0
      %2891 = vmatprep.subr.mxu0 0.0
      %2892 = vmatpush1.msra.mxu0 0.0
      %2893 = vmatprep.subr.mxu0 0.0
      %2894 = vmatpush1.msra.mxu0 0.0
      %2895 = vmatprep.subr.mxu0 0.0
      %2896 = vmatpush1.msra.mxu0 0.0
      %2897 = vmatprep.subr.mxu0 0.0
      %2898 = vmatpush1.msra.mxu0 0.0
      %2899 = vmatprep.subr.mxu0 0.0
      %2900 = vmatpush1.msra.mxu0 %v2333
      %2901 = vmatprep.subr.mxu0 0.0
      %2902 = vmatpush1.msra.mxu0 %v2332
      %2903 = vmatprep.subr.mxu0 0.0
      %2904 = vmatpush2.msra.mxu0 0.0
      %2905 = vmatprep.subr.mxu0 0.0
      %2906 = vmatpush2.msra.mxu0 0.0
      %2907 = vmatprep.subr.mxu0 0.0
      %2908 = vmatpush2.msra.mxu0 0.0
      %2909 = vmatprep.subr.mxu0 0.0
      %2910 = vmatpush2.msra.mxu0 0.0
      %2911 = vmatprep.subr.mxu0 0.0
      %2912 = vmatpush2.msra.mxu0 0.0
      %2913 = vmatprep.subr.mxu0 0.0
      %2914 = vmatpush2.msra.mxu0 0.0
      %2915 = vmatprep.subr.mxu0 0.0
      %2916 = vmatpush2.msra.mxu0 0.0
      %2917 = vmatprep.subr.mxu0 0.0
      %2918 = vmatpush2.msra.mxu0 0.0
      %2919 = vmatprep.subr.mxu0 0.0
      %2920 = vmatpush2.msra.mxu0 0.0
      %2921 = vmatprep.subr.mxu0 0.0
      %2922 = vmatpush2.msra.mxu0 0.0
      %2923 = vmatprep.subr.mxu0 0.0
      %2924 = vmatpush2.msra.mxu0 0.0
      %2925 = vmatprep.subr.mxu0 0.0
      %2926 = vmatpush2.msra.mxu0 0.0
      %2927 = vmatprep.subr.mxu0 0.0
      %2928 = vmatpush2.msra.mxu0 0.0
      %2929 = vmatprep.subr.mxu0 0.0
      %2930 = vmatpush2.msra.mxu0 0.0
      %2931 = vmatprep.subr.mxu0 0.0
      %2932 = vmatpush2.msra.mxu0 0.0
      %2933 = vmatprep.subr.mxu0 0.0
      %2934 = vmatpush2.msra.mxu0 0.0
      %2935 = vmatprep.mubr.f32.mxu0 0.0
      %2936 = vmatmul.mubr.f32.gmra.mxu0 %v2866
      %v2937 = vpop.f32.mrf.mxu0
      %v2938 = vadd.f32 0.0, %v2937
      %v2939 = vpop.f32.mrf.mxu0
      %2940 = vmatprep.mubr.f32.mxu0 0.0
      %2941 = vmatmul.mubr.f32.gmra.mxu0 %v2869
      %v2942 = vpop.f32.mrf.mxu0
      %v2943 = vadd.f32 0.0, %v2942
      %v2944 = vpop.f32.mrf.mxu0
      %2945 = vdwg.mxu0
      %s2946 = scalar_lea.vmem [#allocation11], 96
      %v2947 = vld [vmem:[%s2946] sm:$0xff]
      %v2948 = vld [vmem:[%s2946 + $0x8] sm:$0xff]
      %v2949 = vld [vmem:[%s2946 + $0x10] sm:$0xff]
      %v2950 = vld [vmem:[%s2946 + $0x18] sm:$0xff]
      %v2952 = vsel %vm2424, %v2938, 0
      %v2955 = vsel %vm2424, %v2943, 0
      %2957 = vmatprep.subr.mxu0 0.0
      %2958 = vmatpush1.msra.mxu0 0.0
      %2959 = vmatprep.subr.mxu0 0.0
      %2960 = vmatpush1.msra.mxu0 0.0
      %2961 = vmatprep.subr.mxu0 0.0
      %2962 = vmatpush1.msra.mxu0 0.0
      %2963 = vmatprep.subr.mxu0 0.0
      %2964 = vmatpush1.msra.mxu0 0.0
      %2965 = vmatprep.subr.mxu0 0.0
      %2966 = vmatpush1.msra.mxu0 0.0
      %2967 = vmatprep.subr.mxu0 0.0
      %2968 = vmatpush1.msra.mxu0 0.0
      %2969 = vmatprep.subr.mxu0 0.0
      %2970 = vmatpush1.msra.mxu0 0.0
      %2971 = vmatprep.subr.mxu0 0.0
      %2972 = vmatpush1.msra.mxu0 0.0
      %2973 = vmatprep.subr.mxu0 0.0
      %2974 = vmatpush1.msra.mxu0 0.0
      %2975 = vmatprep.subr.mxu0 0.0
      %2976 = vmatpush1.msra.mxu0 0.0
      %2977 = vmatprep.subr.mxu0 0.0
      %2978 = vmatpush1.msra.mxu0 0.0
      %2979 = vmatprep.subr.mxu0 0.0
      %2980 = vmatpush1.msra.mxu0 0.0
      %2981 = vmatprep.subr.mxu0 0.0
      %2982 = vmatpush1.msra.mxu0 %v2950
      %2983 = vmatprep.subr.mxu0 0.0
      %2984 = vmatpush1.msra.mxu0 %v2949
      %2985 = vmatprep.subr.mxu0 0.0
      %2986 = vmatpush1.msra.mxu0 %v2948
      %2987 = vmatprep.subr.mxu0 0.0
      %2988 = vmatpush1.msra.mxu0 %v2947
      %2989 = vmatprep.subr.mxu0 0.0
      %2990 = vmatpush2.msra.mxu0 0.0
      %2991 = vmatprep.subr.mxu0 0.0
      %2992 = vmatpush2.msra.mxu0 0.0
      %2993 = vmatprep.subr.mxu0 0.0
      %2994 = vmatpush2.msra.mxu0 0.0
      %2995 = vmatprep.subr.mxu0 0.0
      %2996 = vmatpush2.msra.mxu0 0.0
      %2997 = vmatprep.subr.mxu0 0.0
      %2998 = vmatpush2.msra.mxu0 0.0
      %2999 = vmatprep.subr.mxu0 0.0
      %3000 = vmatpush2.msra.mxu0 0.0
      %3001 = vmatprep.subr.mxu0 0.0
      %3002 = vmatpush2.msra.mxu0 0.0
      %3003 = vmatprep.subr.mxu0 0.0
      %3004 = vmatpush2.msra.mxu0 0.0
      %3005 = vmatprep.subr.mxu0 0.0
      %3006 = vmatpush2.msra.mxu0 0.0
      %3007 = vmatprep.subr.mxu0 0.0
      %3008 = vmatpush2.msra.mxu0 0.0
      %3009 = vmatprep.subr.mxu0 0.0
      %3010 = vmatpush2.msra.mxu0 0.0
      %3011 = vmatprep.subr.mxu0 0.0
      %3012 = vmatpush2.msra.mxu0 0.0
      %3013 = vmatprep.subr.mxu0 0.0
      %3014 = vmatpush2.msra.mxu0 0.0
      %3015 = vmatprep.subr.mxu0 0.0
      %3016 = vmatpush2.msra.mxu0 0.0
      %3017 = vmatprep.subr.mxu0 0.0
      %3018 = vmatpush2.msra.mxu0 0.0
      %3019 = vmatprep.subr.mxu0 0.0
      %3020 = vmatpush2.msra.mxu0 0.0
      %3021 = vmatprep.mubr.f32.mxu0 0.0
      %3022 = vmatmul.mubr.f32.gmra.mxu0 %v2952
      %v3023 = vpop.f32.mrf.mxu0
      %v3024 = vadd.f32 0.0, %v3023
      %v3025 = vpop.f32.mrf.mxu0
      %3026 = vmatprep.mubr.f32.mxu0 0.0
      %3027 = vmatmul.mubr.f32.gmra.mxu0 %v2955
      %v3028 = vpop.f32.mrf.mxu0
      %v3029 = vadd.f32 0.0, %v3028
      %v3030 = vpop.f32.mrf.mxu0
      %3031 = vdwg.mxu0
      %v3032 = vadd.f32 %v2860, %v3024
      %v3033 = vadd.f32 %v2861, %v3029
      %s3034 = scalar_lea.vmem [#allocation9], 64
      %v3035 = vld [vmem:[%s3034] sm:$0xff]
      %v3036 = vld [vmem:[%s3034 + $0x8] sm:$0xff]
      %v3038 = vsel %vm2338, %v3035, 0
      %v3041 = vsel %vm2338, %v3036, 0
      %3043 = vmatprep.subr.mxu0 0.0
      %3044 = vmatpush1.msra.mxu0 0.0
      %3045 = vmatprep.subr.mxu0 0.0
      %3046 = vmatpush1.msra.mxu0 0.0
      %3047 = vmatprep.subr.mxu0 0.0
      %3048 = vmatpush1.msra.mxu0 0.0
      %3049 = vmatprep.subr.mxu0 0.0
      %3050 = vmatpush1.msra.mxu0 0.0
      %3051 = vmatprep.subr.mxu0 0.0
      %3052 = vmatpush1.msra.mxu0 0.0
      %3053 = vmatprep.subr.mxu0 0.0
      %3054 = vmatpush1.msra.mxu0 0.0
      %3055 = vmatprep.subr.mxu0 0.0
      %3056 = vmatpush1.msra.mxu0 0.0
      %3057 = vmatprep.subr.mxu0 0.0
      %3058 = vmatpush1.msra.mxu0 0.0
      %3059 = vmatprep.subr.mxu0 0.0
      %3060 = vmatpush1.msra.mxu0 0.0
      %3061 = vmatprep.subr.mxu0 0.0
      %3062 = vmatpush1.msra.mxu0 0.0
      %3063 = vmatprep.subr.mxu0 0.0
      %3064 = vmatpush1.msra.mxu0 0.0
      %3065 = vmatprep.subr.mxu0 0.0
      %3066 = vmatpush1.msra.mxu0 0.0
      %3067 = vmatprep.subr.mxu0 0.0
      %3068 = vmatpush1.msra.mxu0 0.0
      %3069 = vmatprep.subr.mxu0 0.0
      %3070 = vmatpush1.msra.mxu0 0.0
      %3071 = vmatprep.subr.mxu0 0.0
      %3072 = vmatpush1.msra.mxu0 %v2333
      %3073 = vmatprep.subr.mxu0 0.0
      %3074 = vmatpush1.msra.mxu0 %v2332
      %3075 = vmatprep.subr.mxu0 0.0
      %3076 = vmatpush2.msra.mxu0 0.0
      %3077 = vmatprep.subr.mxu0 0.0
      %3078 = vmatpush2.msra.mxu0 0.0
      %3079 = vmatprep.subr.mxu0 0.0
      %3080 = vmatpush2.msra.mxu0 0.0
      %3081 = vmatprep.subr.mxu0 0.0
      %3082 = vmatpush2.msra.mxu0 0.0
      %3083 = vmatprep.subr.mxu0 0.0
      %3084 = vmatpush2.msra.mxu0 0.0
      %3085 = vmatprep.subr.mxu0 0.0
      %3086 = vmatpush2.msra.mxu0 0.0
      %3087 = vmatprep.subr.mxu0 0.0
      %3088 = vmatpush2.msra.mxu0 0.0
      %3089 = vmatprep.subr.mxu0 0.0
      %3090 = vmatpush2.msra.mxu0 0.0
      %3091 = vmatprep.subr.mxu0 0.0
      %3092 = vmatpush2.msra.mxu0 0.0
      %3093 = vmatprep.subr.mxu0 0.0
      %3094 = vmatpush2.msra.mxu0 0.0
      %3095 = vmatprep.subr.mxu0 0.0
      %3096 = vmatpush2.msra.mxu0 0.0
      %3097 = vmatprep.subr.mxu0 0.0
      %3098 = vmatpush2.msra.mxu0 0.0
      %3099 = vmatprep.subr.mxu0 0.0
      %3100 = vmatpush2.msra.mxu0 0.0
      %3101 = vmatprep.subr.mxu0 0.0
      %3102 = vmatpush2.msra.mxu0 0.0
      %3103 = vmatprep.subr.mxu0 0.0
      %3104 = vmatpush2.msra.mxu0 0.0
      %3105 = vmatprep.subr.mxu0 0.0
      %3106 = vmatpush2.msra.mxu0 0.0
      %3107 = vmatprep.mubr.f32.mxu0 0.0
      %3108 = vmatmul.mubr.f32.gmra.mxu0 %v3038
      %v3109 = vpop.f32.mrf.mxu0
      %v3110 = vadd.f32 0.0, %v3109
      %v3111 = vpop.f32.mrf.mxu0
      %3112 = vmatprep.mubr.f32.mxu0 0.0
      %3113 = vmatmul.mubr.f32.gmra.mxu0 %v3041
      %v3114 = vpop.f32.mrf.mxu0
      %v3115 = vadd.f32 0.0, %v3114
      %v3116 = vpop.f32.mrf.mxu0
      %3117 = vdwg.mxu0
      %s3118 = scalar_lea.vmem [#allocation11], 128
      %v3119 = vld [vmem:[%s3118] sm:$0xff]
      %v3120 = vld [vmem:[%s3118 + $0x8] sm:$0xff]
      %v3121 = vld [vmem:[%s3118 + $0x10] sm:$0xff]
      %v3122 = vld [vmem:[%s3118 + $0x18] sm:$0xff]
      %v3124 = vsel %vm2424, %v3110, 0
      %v3127 = vsel %vm2424, %v3115, 0
      %3129 = vmatprep.subr.mxu0 0.0
      %3130 = vmatpush1.msra.mxu0 0.0
      %3131 = vmatprep.subr.mxu0 0.0
      %3132 = vmatpush1.msra.mxu0 0.0
      %3133 = vmatprep.subr.mxu0 0.0
      %3134 = vmatpush1.msra.mxu0 0.0
      %3135 = vmatprep.subr.mxu0 0.0
      %3136 = vmatpush1.msra.mxu0 0.0
      %3137 = vmatprep.subr.mxu0 0.0
      %3138 = vmatpush1.msra.mxu0 0.0
      %3139 = vmatprep.subr.mxu0 0.0
      %3140 = vmatpush1.msra.mxu0 0.0
      %3141 = vmatprep.subr.mxu0 0.0
      %3142 = vmatpush1.msra.mxu0 0.0
      %3143 = vmatprep.subr.mxu0 0.0
      %3144 = vmatpush1.msra.mxu0 0.0
      %3145 = vmatprep.subr.mxu0 0.0
      %3146 = vmatpush1.msra.mxu0 0.0
      %3147 = vmatprep.subr.mxu0 0.0
      %3148 = vmatpush1.msra.mxu0 0.0
      %3149 = vmatprep.subr.mxu0 0.0
      %3150 = vmatpush1.msra.mxu0 0.0
      %3151 = vmatprep.subr.mxu0 0.0
      %3152 = vmatpush1.msra.mxu0 0.0
      %3153 = vmatprep.subr.mxu0 0.0
      %3154 = vmatpush1.msra.mxu0 %v3122
      %3155 = vmatprep.subr.mxu0 0.0
      %3156 = vmatpush1.msra.mxu0 %v3121
      %3157 = vmatprep.subr.mxu0 0.0
      %3158 = vmatpush1.msra.mxu0 %v3120
      %3159 = vmatprep.subr.mxu0 0.0
      %3160 = vmatpush1.msra.mxu0 %v3119
      %3161 = vmatprep.subr.mxu0 0.0
      %3162 = vmatpush2.msra.mxu0 0.0
      %3163 = vmatprep.subr.mxu0 0.0
      %3164 = vmatpush2.msra.mxu0 0.0
      %3165 = vmatprep.subr.mxu0 0.0
      %3166 = vmatpush2.msra.mxu0 0.0
      %3167 = vmatprep.subr.mxu0 0.0
      %3168 = vmatpush2.msra.mxu0 0.0
      %3169 = vmatprep.subr.mxu0 0.0
      %3170 = vmatpush2.msra.mxu0 0.0
      %3171 = vmatprep.subr.mxu0 0.0
      %3172 = vmatpush2.msra.mxu0 0.0
      %3173 = vmatprep.subr.mxu0 0.0
      %3174 = vmatpush2.msra.mxu0 0.0
      %3175 = vmatprep.subr.mxu0 0.0
      %3176 = vmatpush2.msra.mxu0 0.0
      %3177 = vmatprep.subr.mxu0 0.0
      %3178 = vmatpush2.msra.mxu0 0.0
      %3179 = vmatprep.subr.mxu0 0.0
      %3180 = vmatpush2.msra.mxu0 0.0
      %3181 = vmatprep.subr.mxu0 0.0
      %3182 = vmatpush2.msra.mxu0 0.0
      %3183 = vmatprep.subr.mxu0 0.0
      %3184 = vmatpush2.msra.mxu0 0.0
      %3185 = vmatprep.subr.mxu0 0.0
      %3186 = vmatpush2.msra.mxu0 0.0
      %3187 = vmatprep.subr.mxu0 0.0
      %3188 = vmatpush2.msra.mxu0 0.0
      %3189 = vmatprep.subr.mxu0 0.0
      %3190 = vmatpush2.msra.mxu0 0.0
      %3191 = vmatprep.subr.mxu0 0.0
      %3192 = vmatpush2.msra.mxu0 0.0
      %3193 = vmatprep.mubr.f32.mxu0 0.0
      %3194 = vmatmul.mubr.f32.gmra.mxu0 %v3124
      %v3195 = vpop.f32.mrf.mxu0
      %v3196 = vadd.f32 0.0, %v3195
      %v3197 = vpop.f32.mrf.mxu0
      %3198 = vmatprep.mubr.f32.mxu0 0.0
      %3199 = vmatmul.mubr.f32.gmra.mxu0 %v3127
      %v3200 = vpop.f32.mrf.mxu0
      %v3201 = vadd.f32 0.0, %v3200
      %v3202 = vpop.f32.mrf.mxu0
      %3203 = vdwg.mxu0
      %v3204 = vadd.f32 %v3032, %v3196
      %v3205 = vadd.f32 %v3033, %v3201
      %s3206 = scalar_lea.vmem [#allocation9], 80
      %v3207 = vld [vmem:[%s3206] sm:$0xff]
      %v3208 = vld [vmem:[%s3206 + $0x8] sm:$0xff]
      %v3210 = vsel %vm2338, %v3207, 0
      %v3213 = vsel %vm2338, %v3208, 0
      %3215 = vmatprep.subr.mxu0 0.0
      %3216 = vmatpush1.msra.mxu0 0.0
      %3217 = vmatprep.subr.mxu0 0.0
      %3218 = vmatpush1.msra.mxu0 0.0
      %3219 = vmatprep.subr.mxu0 0.0
      %3220 = vmatpush1.msra.mxu0 0.0
      %3221 = vmatprep.subr.mxu0 0.0
      %3222 = vmatpush1.msra.mxu0 0.0
      %3223 = vmatprep.subr.mxu0 0.0
      %3224 = vmatpush1.msra.mxu0 0.0
      %3225 = vmatprep.subr.mxu0 0.0
      %3226 = vmatpush1.msra.mxu0 0.0
      %3227 = vmatprep.subr.mxu0 0.0
      %3228 = vmatpush1.msra.mxu0 0.0
      %3229 = vmatprep.subr.mxu0 0.0
      %3230 = vmatpush1.msra.mxu0 0.0
      %3231 = vmatprep.subr.mxu0 0.0
      %3232 = vmatpush1.msra.mxu0 0.0
      %3233 = vmatprep.subr.mxu0 0.0
      %3234 = vmatpush1.msra.mxu0 0.0
      %3235 = vmatprep.subr.mxu0 0.0
      %3236 = vmatpush1.msra.mxu0 0.0
      %3237 = vmatprep.subr.mxu0 0.0
      %3238 = vmatpush1.msra.mxu0 0.0
      %3239 = vmatprep.subr.mxu0 0.0
      %3240 = vmatpush1.msra.mxu0 0.0
      %3241 = vmatprep.subr.mxu0 0.0
      %3242 = vmatpush1.msra.mxu0 0.0
      %3243 = vmatprep.subr.mxu0 0.0
      %3244 = vmatpush1.msra.mxu0 %v2333
      %3245 = vmatprep.subr.mxu0 0.0
      %3246 = vmatpush1.msra.mxu0 %v2332
      %3247 = vmatprep.subr.mxu0 0.0
      %3248 = vmatpush2.msra.mxu0 0.0
      %3249 = vmatprep.subr.mxu0 0.0
      %3250 = vmatpush2.msra.mxu0 0.0
      %3251 = vmatprep.subr.mxu0 0.0
      %3252 = vmatpush2.msra.mxu0 0.0
      %3253 = vmatprep.subr.mxu0 0.0
      %3254 = vmatpush2.msra.mxu0 0.0
      %3255 = vmatprep.subr.mxu0 0.0
      %3256 = vmatpush2.msra.mxu0 0.0
      %3257 = vmatprep.subr.mxu0 0.0
      %3258 = vmatpush2.msra.mxu0 0.0
      %3259 = vmatprep.subr.mxu0 0.0
      %3260 = vmatpush2.msra.mxu0 0.0
      %3261 = vmatprep.subr.mxu0 0.0
      %3262 = vmatpush2.msra.mxu0 0.0
      %3263 = vmatprep.subr.mxu0 0.0
      %3264 = vmatpush2.msra.mxu0 0.0
      %3265 = vmatprep.subr.mxu0 0.0
      %3266 = vmatpush2.msra.mxu0 0.0
      %3267 = vmatprep.subr.mxu0 0.0
      %3268 = vmatpush2.msra.mxu0 0.0
      %3269 = vmatprep.subr.mxu0 0.0
      %3270 = vmatpush2.msra.mxu0 0.0
      %3271 = vmatprep.subr.mxu0 0.0
      %3272 = vmatpush2.msra.mxu0 0.0
      %3273 = vmatprep.subr.mxu0 0.0
      %3274 = vmatpush2.msra.mxu0 0.0
      %3275 = vmatprep.subr.mxu0 0.0
      %3276 = vmatpush2.msra.mxu0 0.0
      %3277 = vmatprep.subr.mxu0 0.0
      %3278 = vmatpush2.msra.mxu0 0.0
      %3279 = vmatprep.mubr.f32.mxu0 0.0
      %3280 = vmatmul.mubr.f32.gmra.mxu0 %v3210
      %v3281 = vpop.f32.mrf.mxu0
      %v3282 = vadd.f32 0.0, %v3281
      %v3283 = vpop.f32.mrf.mxu0
      %3284 = vmatprep.mubr.f32.mxu0 0.0
      %3285 = vmatmul.mubr.f32.gmra.mxu0 %v3213
      %v3286 = vpop.f32.mrf.mxu0
      %v3287 = vadd.f32 0.0, %v3286
      %v3288 = vpop.f32.mrf.mxu0
      %3289 = vdwg.mxu0
      %s3290 = scalar_lea.vmem [#allocation11], 160
      %v3291 = vld [vmem:[%s3290] sm:$0xff]
      %v3292 = vld [vmem:[%s3290 + $0x8] sm:$0xff]
      %v3293 = vld [vmem:[%s3290 + $0x10] sm:$0xff]
      %v3294 = vld [vmem:[%s3290 + $0x18] sm:$0xff]
      %v3296 = vsel %vm2424, %v3282, 0
      %v3299 = vsel %vm2424, %v3287, 0
      %3301 = vmatprep.subr.mxu0 0.0
      %3302 = vmatpush1.msra.mxu0 0.0
      %3303 = vmatprep.subr.mxu0 0.0
      %3304 = vmatpush1.msra.mxu0 0.0
      %3305 = vmatprep.subr.mxu0 0.0
      %3306 = vmatpush1.msra.mxu0 0.0
      %3307 = vmatprep.subr.mxu0 0.0
      %3308 = vmatpush1.msra.mxu0 0.0
      %3309 = vmatprep.subr.mxu0 0.0
      %3310 = vmatpush1.msra.mxu0 0.0
      %3311 = vmatprep.subr.mxu0 0.0
      %3312 = vmatpush1.msra.mxu0 0.0
      %3313 = vmatprep.subr.mxu0 0.0
      %3314 = vmatpush1.msra.mxu0 0.0
      %3315 = vmatprep.subr.mxu0 0.0
      %3316 = vmatpush1.msra.mxu0 0.0
      %3317 = vmatprep.subr.mxu0 0.0
      %3318 = vmatpush1.msra.mxu0 0.0
      %3319 = vmatprep.subr.mxu0 0.0
      %3320 = vmatpush1.msra.mxu0 0.0
      %3321 = vmatprep.subr.mxu0 0.0
      %3322 = vmatpush1.msra.mxu0 0.0
      %3323 = vmatprep.subr.mxu0 0.0
      %3324 = vmatpush1.msra.mxu0 0.0
      %3325 = vmatprep.subr.mxu0 0.0
      %3326 = vmatpush1.msra.mxu0 %v3294
      %3327 = vmatprep.subr.mxu0 0.0
      %3328 = vmatpush1.msra.mxu0 %v3293
      %3329 = vmatprep.subr.mxu0 0.0
      %3330 = vmatpush1.msra.mxu0 %v3292
      %3331 = vmatprep.subr.mxu0 0.0
      %3332 = vmatpush1.msra.mxu0 %v3291
      %3333 = vmatprep.subr.mxu0 0.0
      %3334 = vmatpush2.msra.mxu0 0.0
      %3335 = vmatprep.subr.mxu0 0.0
      %3336 = vmatpush2.msra.mxu0 0.0
      %3337 = vmatprep.subr.mxu0 0.0
      %3338 = vmatpush2.msra.mxu0 0.0
      %3339 = vmatprep.subr.mxu0 0.0
      %3340 = vmatpush2.msra.mxu0 0.0
      %3341 = vmatprep.subr.mxu0 0.0
      %3342 = vmatpush2.msra.mxu0 0.0
      %3343 = vmatprep.subr.mxu0 0.0
      %3344 = vmatpush2.msra.mxu0 0.0
      %3345 = vmatprep.subr.mxu0 0.0
      %3346 = vmatpush2.msra.mxu0 0.0
      %3347 = vmatprep.subr.mxu0 0.0
      %3348 = vmatpush2.msra.mxu0 0.0
      %3349 = vmatprep.subr.mxu0 0.0
      %3350 = vmatpush2.msra.mxu0 0.0
      %3351 = vmatprep.subr.mxu0 0.0
      %3352 = vmatpush2.msra.mxu0 0.0
      %3353 = vmatprep.subr.mxu0 0.0
      %3354 = vmatpush2.msra.mxu0 0.0
      %3355 = vmatprep.subr.mxu0 0.0
      %3356 = vmatpush2.msra.mxu0 0.0
      %3357 = vmatprep.subr.mxu0 0.0
      %3358 = vmatpush2.msra.mxu0 0.0
      %3359 = vmatprep.subr.mxu0 0.0
      %3360 = vmatpush2.msra.mxu0 0.0
      %3361 = vmatprep.subr.mxu0 0.0
      %3362 = vmatpush2.msra.mxu0 0.0
      %3363 = vmatprep.subr.mxu0 0.0
      %3364 = vmatpush2.msra.mxu0 0.0
      %3365 = vmatprep.mubr.f32.mxu0 0.0
      %3366 = vmatmul.mubr.f32.gmra.mxu0 %v3296
      %v3367 = vpop.f32.mrf.mxu0
      %v3368 = vadd.f32 0.0, %v3367
      %v3369 = vpop.f32.mrf.mxu0
      %3370 = vmatprep.mubr.f32.mxu0 0.0
      %3371 = vmatmul.mubr.f32.gmra.mxu0 %v3299
      %v3372 = vpop.f32.mrf.mxu0
      %v3373 = vadd.f32 0.0, %v3372
      %v3374 = vpop.f32.mrf.mxu0
      %3375 = vdwg.mxu0
      %v3376 = vadd.f32 %v3204, %v3368
      %v3377 = vadd.f32 %v3205, %v3373
      %s3378 = scalar_lea.vmem [#allocation9], 96
      %v3379 = vld [vmem:[%s3378] sm:$0xff]
      %v3380 = vld [vmem:[%s3378 + $0x8] sm:$0xff]
      %v3382 = vsel %vm2338, %v3379, 0
      %v3385 = vsel %vm2338, %v3380, 0
      %3387 = vmatprep.subr.mxu0 0.0
      %3388 = vmatpush1.msra.mxu0 0.0
      %3389 = vmatprep.subr.mxu0 0.0
      %3390 = vmatpush1.msra.mxu0 0.0
      %3391 = vmatprep.subr.mxu0 0.0
      %3392 = vmatpush1.msra.mxu0 0.0
      %3393 = vmatprep.subr.mxu0 0.0
      %3394 = vmatpush1.msra.mxu0 0.0
      %3395 = vmatprep.subr.mxu0 0.0
      %3396 = vmatpush1.msra.mxu0 0.0
      %3397 = vmatprep.subr.mxu0 0.0
      %3398 = vmatpush1.msra.mxu0 0.0
      %3399 = vmatprep.subr.mxu0 0.0
      %3400 = vmatpush1.msra.mxu0 0.0
      %3401 = vmatprep.subr.mxu0 0.0
      %3402 = vmatpush1.msra.mxu0 0.0
      %3403 = vmatprep.subr.mxu0 0.0
      %3404 = vmatpush1.msra.mxu0 0.0
      %3405 = vmatprep.subr.mxu0 0.0
      %3406 = vmatpush1.msra.mxu0 0.0
      %3407 = vmatprep.subr.mxu0 0.0
      %3408 = vmatpush1.msra.mxu0 0.0
      %3409 = vmatprep.subr.mxu0 0.0
      %3410 = vmatpush1.msra.mxu0 0.0
      %3411 = vmatprep.subr.mxu0 0.0
      %3412 = vmatpush1.msra.mxu0 0.0
      %3413 = vmatprep.subr.mxu0 0.0
      %3414 = vmatpush1.msra.mxu0 0.0
      %3415 = vmatprep.subr.mxu0 0.0
      %3416 = vmatpush1.msra.mxu0 %v2333
      %3417 = vmatprep.subr.mxu0 0.0
      %3418 = vmatpush1.msra.mxu0 %v2332
      %3419 = vmatprep.subr.mxu0 0.0
      %3420 = vmatpush2.msra.mxu0 0.0
      %3421 = vmatprep.subr.mxu0 0.0
      %3422 = vmatpush2.msra.mxu0 0.0
      %3423 = vmatprep.subr.mxu0 0.0
      %3424 = vmatpush2.msra.mxu0 0.0
      %3425 = vmatprep.subr.mxu0 0.0
      %3426 = vmatpush2.msra.mxu0 0.0
      %3427 = vmatprep.subr.mxu0 0.0
      %3428 = vmatpush2.msra.mxu0 0.0
      %3429 = vmatprep.subr.mxu0 0.0
      %3430 = vmatpush2.msra.mxu0 0.0
      %3431 = vmatprep.subr.mxu0 0.0
      %3432 = vmatpush2.msra.mxu0 0.0
      %3433 = vmatprep.subr.mxu0 0.0
      %3434 = vmatpush2.msra.mxu0 0.0
      %3435 = vmatprep.subr.mxu0 0.0
      %3436 = vmatpush2.msra.mxu0 0.0
      %3437 = vmatprep.subr.mxu0 0.0
      %3438 = vmatpush2.msra.mxu0 0.0
      %3439 = vmatprep.subr.mxu0 0.0
      %3440 = vmatpush2.msra.mxu0 0.0
      %3441 = vmatprep.subr.mxu0 0.0
      %3442 = vmatpush2.msra.mxu0 0.0
      %3443 = vmatprep.subr.mxu0 0.0
      %3444 = vmatpush2.msra.mxu0 0.0
      %3445 = vmatprep.subr.mxu0 0.0
      %3446 = vmatpush2.msra.mxu0 0.0
      %3447 = vmatprep.subr.mxu0 0.0
      %3448 = vmatpush2.msra.mxu0 0.0
      %3449 = vmatprep.subr.mxu0 0.0
      %3450 = vmatpush2.msra.mxu0 0.0
      %3451 = vmatprep.mubr.f32.mxu0 0.0
      %3452 = vmatmul.mubr.f32.gmra.mxu0 %v3382
      %v3453 = vpop.f32.mrf.mxu0
      %v3454 = vadd.f32 0.0, %v3453
      %v3455 = vpop.f32.mrf.mxu0
      %3456 = vmatprep.mubr.f32.mxu0 0.0
      %3457 = vmatmul.mubr.f32.gmra.mxu0 %v3385
      %v3458 = vpop.f32.mrf.mxu0
      %v3459 = vadd.f32 0.0, %v3458
      %v3460 = vpop.f32.mrf.mxu0
      %3461 = vdwg.mxu0
      %s3462 = scalar_lea.vmem [#allocation11], 192
      %v3463 = vld [vmem:[%s3462] sm:$0xff]
      %v3464 = vld [vmem:[%s3462 + $0x8] sm:$0xff]
      %v3465 = vld [vmem:[%s3462 + $0x10] sm:$0xff]
      %v3466 = vld [vmem:[%s3462 + $0x18] sm:$0xff]
      %v3468 = vsel %vm2424, %v3454, 0
      %v3471 = vsel %vm2424, %v3459, 0
      %3473 = vmatprep.subr.mxu0 0.0
      %3474 = vmatpush1.msra.mxu0 0.0
      %3475 = vmatprep.subr.mxu0 0.0
      %3476 = vmatpush1.msra.mxu0 0.0
      %3477 = vmatprep.subr.mxu0 0.0
      %3478 = vmatpush1.msra.mxu0 0.0
      %3479 = vmatprep.subr.mxu0 0.0
      %3480 = vmatpush1.msra.mxu0 0.0
      %3481 = vmatprep.subr.mxu0 0.0
      %3482 = vmatpush1.msra.mxu0 0.0
      %3483 = vmatprep.subr.mxu0 0.0
      %3484 = vmatpush1.msra.mxu0 0.0
      %3485 = vmatprep.subr.mxu0 0.0
      %3486 = vmatpush1.msra.mxu0 0.0
      %3487 = vmatprep.subr.mxu0 0.0
      %3488 = vmatpush1.msra.mxu0 0.0
      %3489 = vmatprep.subr.mxu0 0.0
      %3490 = vmatpush1.msra.mxu0 0.0
      %3491 = vmatprep.subr.mxu0 0.0
      %3492 = vmatpush1.msra.mxu0 0.0
      %3493 = vmatprep.subr.mxu0 0.0
      %3494 = vmatpush1.msra.mxu0 0.0
      %3495 = vmatprep.subr.mxu0 0.0
      %3496 = vmatpush1.msra.mxu0 0.0
      %3497 = vmatprep.subr.mxu0 0.0
      %3498 = vmatpush1.msra.mxu0 %v3466
      %3499 = vmatprep.subr.mxu0 0.0
      %3500 = vmatpush1.msra.mxu0 %v3465
      %3501 = vmatprep.subr.mxu0 0.0
      %3502 = vmatpush1.msra.mxu0 %v3464
      %3503 = vmatprep.subr.mxu0 0.0
      %3504 = vmatpush1.msra.mxu0 %v3463
      %3505 = vmatprep.subr.mxu0 0.0
      %3506 = vmatpush2.msra.mxu0 0.0
      %3507 = vmatprep.subr.mxu0 0.0
      %3508 = vmatpush2.msra.mxu0 0.0
      %3509 = vmatprep.subr.mxu0 0.0
      %3510 = vmatpush2.msra.mxu0 0.0
      %3511 = vmatprep.subr.mxu0 0.0
      %3512 = vmatpush2.msra.mxu0 0.0
      %3513 = vmatprep.subr.mxu0 0.0
      %3514 = vmatpush2.msra.mxu0 0.0
      %3515 = vmatprep.subr.mxu0 0.0
      %3516 = vmatpush2.msra.mxu0 0.0
      %3517 = vmatprep.subr.mxu0 0.0
      %3518 = vmatpush2.msra.mxu0 0.0
      %3519 = vmatprep.subr.mxu0 0.0
      %3520 = vmatpush2.msra.mxu0 0.0
      %3521 = vmatprep.subr.mxu0 0.0
      %3522 = vmatpush2.msra.mxu0 0.0
      %3523 = vmatprep.subr.mxu0 0.0
      %3524 = vmatpush2.msra.mxu0 0.0
      %3525 = vmatprep.subr.mxu0 0.0
      %3526 = vmatpush2.msra.mxu0 0.0
      %3527 = vmatprep.subr.mxu0 0.0
      %3528 = vmatpush2.msra.mxu0 0.0
      %3529 = vmatprep.subr.mxu0 0.0
      %3530 = vmatpush2.msra.mxu0 0.0
      %3531 = vmatprep.subr.mxu0 0.0
      %3532 = vmatpush2.msra.mxu0 0.0
      %3533 = vmatprep.subr.mxu0 0.0
      %3534 = vmatpush2.msra.mxu0 0.0
      %3535 = vmatprep.subr.mxu0 0.0
      %3536 = vmatpush2.msra.mxu0 0.0
      %3537 = vmatprep.mubr.f32.mxu0 0.0
      %3538 = vmatmul.mubr.f32.gmra.mxu0 %v3468
      %v3539 = vpop.f32.mrf.mxu0
      %v3540 = vadd.f32 0.0, %v3539
      %v3541 = vpop.f32.mrf.mxu0
      %3542 = vmatprep.mubr.f32.mxu0 0.0
      %3543 = vmatmul.mubr.f32.gmra.mxu0 %v3471
      %v3544 = vpop.f32.mrf.mxu0
      %v3545 = vadd.f32 0.0, %v3544
      %v3546 = vpop.f32.mrf.mxu0
      %3547 = vdwg.mxu0
      %v3548 = vadd.f32 %v3376, %v3540
      %v3549 = vadd.f32 %v3377, %v3545
      %s3550 = scalar_lea.vmem [#allocation9], 112
      %v3551 = vld [vmem:[%s3550] sm:$0xff]
      %v3552 = vld [vmem:[%s3550 + $0x8] sm:$0xff]
      %v3554 = vsel %vm2338, %v3551, 0
      %v3557 = vsel %vm2338, %v3552, 0
      %3559 = vmatprep.subr.mxu0 0.0
      %3560 = vmatpush1.msra.mxu0 0.0
      %3561 = vmatprep.subr.mxu0 0.0
      %3562 = vmatpush1.msra.mxu0 0.0
      %3563 = vmatprep.subr.mxu0 0.0
      %3564 = vmatpush1.msra.mxu0 0.0
      %3565 = vmatprep.subr.mxu0 0.0
      %3566 = vmatpush1.msra.mxu0 0.0
      %3567 = vmatprep.subr.mxu0 0.0
      %3568 = vmatpush1.msra.mxu0 0.0
      %3569 = vmatprep.subr.mxu0 0.0
      %3570 = vmatpush1.msra.mxu0 0.0
      %3571 = vmatprep.subr.mxu0 0.0
      %3572 = vmatpush1.msra.mxu0 0.0
      %3573 = vmatprep.subr.mxu0 0.0
      %3574 = vmatpush1.msra.mxu0 0.0
      %3575 = vmatprep.subr.mxu0 0.0
      %3576 = vmatpush1.msra.mxu0 0.0
      %3577 = vmatprep.subr.mxu0 0.0
      %3578 = vmatpush1.msra.mxu0 0.0
      %3579 = vmatprep.subr.mxu0 0.0
      %3580 = vmatpush1.msra.mxu0 0.0
      %3581 = vmatprep.subr.mxu0 0.0
      %3582 = vmatpush1.msra.mxu0 0.0
      %3583 = vmatprep.subr.mxu0 0.0
      %3584 = vmatpush1.msra.mxu0 0.0
      %3585 = vmatprep.subr.mxu0 0.0
      %3586 = vmatpush1.msra.mxu0 0.0
      %3587 = vmatprep.subr.mxu0 0.0
      %3588 = vmatpush1.msra.mxu0 %v2333
      %3589 = vmatprep.subr.mxu0 0.0
      %3590 = vmatpush1.msra.mxu0 %v2332
      %3591 = vmatprep.subr.mxu0 0.0
      %3592 = vmatpush2.msra.mxu0 0.0
      %3593 = vmatprep.subr.mxu0 0.0
      %3594 = vmatpush2.msra.mxu0 0.0
      %3595 = vmatprep.subr.mxu0 0.0
      %3596 = vmatpush2.msra.mxu0 0.0
      %3597 = vmatprep.subr.mxu0 0.0
      %3598 = vmatpush2.msra.mxu0 0.0
      %3599 = vmatprep.subr.mxu0 0.0
      %3600 = vmatpush2.msra.mxu0 0.0
      %3601 = vmatprep.subr.mxu0 0.0
      %3602 = vmatpush2.msra.mxu0 0.0
      %3603 = vmatprep.subr.mxu0 0.0
      %3604 = vmatpush2.msra.mxu0 0.0
      %3605 = vmatprep.subr.mxu0 0.0
      %3606 = vmatpush2.msra.mxu0 0.0
      %3607 = vmatprep.subr.mxu0 0.0
      %3608 = vmatpush2.msra.mxu0 0.0
      %3609 = vmatprep.subr.mxu0 0.0
      %3610 = vmatpush2.msra.mxu0 0.0
      %3611 = vmatprep.subr.mxu0 0.0
      %3612 = vmatpush2.msra.mxu0 0.0
      %3613 = vmatprep.subr.mxu0 0.0
      %3614 = vmatpush2.msra.mxu0 0.0
      %3615 = vmatprep.subr.mxu0 0.0
      %3616 = vmatpush2.msra.mxu0 0.0
      %3617 = vmatprep.subr.mxu0 0.0
      %3618 = vmatpush2.msra.mxu0 0.0
      %3619 = vmatprep.subr.mxu0 0.0
      %3620 = vmatpush2.msra.mxu0 0.0
      %3621 = vmatprep.subr.mxu0 0.0
      %3622 = vmatpush2.msra.mxu0 0.0
      %3623 = vmatprep.mubr.f32.mxu0 0.0
      %3624 = vmatmul.mubr.f32.gmra.mxu0 %v3554
      %v3625 = vpop.f32.mrf.mxu0
      %v3626 = vadd.f32 0.0, %v3625
      %v3627 = vpop.f32.mrf.mxu0
      %3628 = vmatprep.mubr.f32.mxu0 0.0
      %3629 = vmatmul.mubr.f32.gmra.mxu0 %v3557
      %v3630 = vpop.f32.mrf.mxu0
      %v3631 = vadd.f32 0.0, %v3630
      %v3632 = vpop.f32.mrf.mxu0
      %3633 = vdwg.mxu0
      %s3634 = scalar_lea.vmem [#allocation11], 224
      %v3635 = vld [vmem:[%s3634] sm:$0xff]
      %v3636 = vld [vmem:[%s3634 + $0x8] sm:$0xff]
      %v3637 = vld [vmem:[%s3634 + $0x10] sm:$0xff]
      %v3638 = vld [vmem:[%s3634 + $0x18] sm:$0xff]
      %v3640 = vsel %vm2424, %v3626, 0
      %v3643 = vsel %vm2424, %v3631, 0
      %3645 = vmatprep.subr.mxu0 0.0
      %3646 = vmatpush1.msra.mxu0 0.0
      %3647 = vmatprep.subr.mxu0 0.0
      %3648 = vmatpush1.msra.mxu0 0.0
      %3649 = vmatprep.subr.mxu0 0.0
      %3650 = vmatpush1.msra.mxu0 0.0
      %3651 = vmatprep.subr.mxu0 0.0
      %3652 = vmatpush1.msra.mxu0 0.0
      %3653 = vmatprep.subr.mxu0 0.0
      %3654 = vmatpush1.msra.mxu0 0.0
      %3655 = vmatprep.subr.mxu0 0.0
      %3656 = vmatpush1.msra.mxu0 0.0
      %3657 = vmatprep.subr.mxu0 0.0
      %3658 = vmatpush1.msra.mxu0 0.0
      %3659 = vmatprep.subr.mxu0 0.0
      %3660 = vmatpush1.msra.mxu0 0.0
      %3661 = vmatprep.subr.mxu0 0.0
      %3662 = vmatpush1.msra.mxu0 0.0
      %3663 = vmatprep.subr.mxu0 0.0
      %3664 = vmatpush1.msra.mxu0 0.0
      %3665 = vmatprep.subr.mxu0 0.0
      %3666 = vmatpush1.msra.mxu0 0.0
      %3667 = vmatprep.subr.mxu0 0.0
      %3668 = vmatpush1.msra.mxu0 0.0
      %3669 = vmatprep.subr.mxu0 0.0
      %3670 = vmatpush1.msra.mxu0 %v3638
      %3671 = vmatprep.subr.mxu0 0.0
      %3672 = vmatpush1.msra.mxu0 %v3637
      %3673 = vmatprep.subr.mxu0 0.0
      %3674 = vmatpush1.msra.mxu0 %v3636
      %3675 = vmatprep.subr.mxu0 0.0
      %3676 = vmatpush1.msra.mxu0 %v3635
      %3677 = vmatprep.subr.mxu0 0.0
      %3678 = vmatpush2.msra.mxu0 0.0
      %3679 = vmatprep.subr.mxu0 0.0
      %3680 = vmatpush2.msra.mxu0 0.0
      %3681 = vmatprep.subr.mxu0 0.0
      %3682 = vmatpush2.msra.mxu0 0.0
      %3683 = vmatprep.subr.mxu0 0.0
      %3684 = vmatpush2.msra.mxu0 0.0
      %3685 = vmatprep.subr.mxu0 0.0
      %3686 = vmatpush2.msra.mxu0 0.0
      %3687 = vmatprep.subr.mxu0 0.0
      %3688 = vmatpush2.msra.mxu0 0.0
      %3689 = vmatprep.subr.mxu0 0.0
      %3690 = vmatpush2.msra.mxu0 0.0
      %3691 = vmatprep.subr.mxu0 0.0
      %3692 = vmatpush2.msra.mxu0 0.0
      %3693 = vmatprep.subr.mxu0 0.0
      %3694 = vmatpush2.msra.mxu0 0.0
      %3695 = vmatprep.subr.mxu0 0.0
      %3696 = vmatpush2.msra.mxu0 0.0
      %3697 = vmatprep.subr.mxu0 0.0
      %3698 = vmatpush2.msra.mxu0 0.0
      %3699 = vmatprep.subr.mxu0 0.0
      %3700 = vmatpush2.msra.mxu0 0.0
      %3701 = vmatprep.subr.mxu0 0.0
      %3702 = vmatpush2.msra.mxu0 0.0
      %3703 = vmatprep.subr.mxu0 0.0
      %3704 = vmatpush2.msra.mxu0 0.0
      %3705 = vmatprep.subr.mxu0 0.0
      %3706 = vmatpush2.msra.mxu0 0.0
      %3707 = vmatprep.subr.mxu0 0.0
      %3708 = vmatpush2.msra.mxu0 0.0
      %3709 = vmatprep.mubr.f32.mxu0 0.0
      %3710 = vmatmul.mubr.f32.gmra.mxu0 %v3640
      %v3711 = vpop.f32.mrf.mxu0
      %v3712 = vadd.f32 0.0, %v3711
      %v3713 = vpop.f32.mrf.mxu0
      %3714 = vmatprep.mubr.f32.mxu0 0.0
      %3715 = vmatmul.mubr.f32.gmra.mxu0 %v3643
      %v3716 = vpop.f32.mrf.mxu0
      %v3717 = vadd.f32 0.0, %v3716
      %v3718 = vpop.f32.mrf.mxu0
      %3719 = vdwg.mxu0
      %v3720 = vadd.f32 %v3548, %v3712
      %v3721 = vadd.f32 %v3549, %v3717
      %s3722 = scalar_lea.vmem [#allocation9], 128
      %v3723 = vld [vmem:[%s3722] sm:$0xff]
      %v3724 = vld [vmem:[%s3722 + $0x8] sm:$0xff]
      %v3726 = vsel %vm2338, %v3723, 0
      %v3729 = vsel %vm2338, %v3724, 0
      %3731 = vmatprep.subr.mxu0 0.0
      %3732 = vmatpush1.msra.mxu0 0.0
      %3733 = vmatprep.subr.mxu0 0.0
      %3734 = vmatpush1.msra.mxu0 0.0
      %3735 = vmatprep.subr.mxu0 0.0
      %3736 = vmatpush1.msra.mxu0 0.0
      %3737 = vmatprep.subr.mxu0 0.0
      %3738 = vmatpush1.msra.mxu0 0.0
      %3739 = vmatprep.subr.mxu0 0.0
      %3740 = vmatpush1.msra.mxu0 0.0
      %3741 = vmatprep.subr.mxu0 0.0
      %3742 = vmatpush1.msra.mxu0 0.0
      %3743 = vmatprep.subr.mxu0 0.0
      %3744 = vmatpush1.msra.mxu0 0.0
      %3745 = vmatprep.subr.mxu0 0.0
      %3746 = vmatpush1.msra.mxu0 0.0
      %3747 = vmatprep.subr.mxu0 0.0
      %3748 = vmatpush1.msra.mxu0 0.0
      %3749 = vmatprep.subr.mxu0 0.0
      %3750 = vmatpush1.msra.mxu0 0.0
      %3751 = vmatprep.subr.mxu0 0.0
      %3752 = vmatpush1.msra.mxu0 0.0
      %3753 = vmatprep.subr.mxu0 0.0
      %3754 = vmatpush1.msra.mxu0 0.0
      %3755 = vmatprep.subr.mxu0 0.0
      %3756 = vmatpush1.msra.mxu0 0.0
      %3757 = vmatprep.subr.mxu0 0.0
      %3758 = vmatpush1.msra.mxu0 0.0
      %3759 = vmatprep.subr.mxu0 0.0
      %3760 = vmatpush1.msra.mxu0 %v2333
      %3761 = vmatprep.subr.mxu0 0.0
      %3762 = vmatpush1.msra.mxu0 %v2332
      %3763 = vmatprep.subr.mxu0 0.0
      %3764 = vmatpush2.msra.mxu0 0.0
      %3765 = vmatprep.subr.mxu0 0.0
      %3766 = vmatpush2.msra.mxu0 0.0
      %3767 = vmatprep.subr.mxu0 0.0
      %3768 = vmatpush2.msra.mxu0 0.0
      %3769 = vmatprep.subr.mxu0 0.0
      %3770 = vmatpush2.msra.mxu0 0.0
      %3771 = vmatprep.subr.mxu0 0.0
      %3772 = vmatpush2.msra.mxu0 0.0
      %3773 = vmatprep.subr.mxu0 0.0
      %3774 = vmatpush2.msra.mxu0 0.0
      %3775 = vmatprep.subr.mxu0 0.0
      %3776 = vmatpush2.msra.mxu0 0.0
      %3777 = vmatprep.subr.mxu0 0.0
      %3778 = vmatpush2.msra.mxu0 0.0
      %3779 = vmatprep.subr.mxu0 0.0
      %3780 = vmatpush2.msra.mxu0 0.0
      %3781 = vmatprep.subr.mxu0 0.0
      %3782 = vmatpush2.msra.mxu0 0.0
      %3783 = vmatprep.subr.mxu0 0.0
      %3784 = vmatpush2.msra.mxu0 0.0
      %3785 = vmatprep.subr.mxu0 0.0
      %3786 = vmatpush2.msra.mxu0 0.0
      %3787 = vmatprep.subr.mxu0 0.0
      %3788 = vmatpush2.msra.mxu0 0.0
      %3789 = vmatprep.subr.mxu0 0.0
      %3790 = vmatpush2.msra.mxu0 0.0
      %3791 = vmatprep.subr.mxu0 0.0
      %3792 = vmatpush2.msra.mxu0 0.0
      %3793 = vmatprep.subr.mxu0 0.0
      %3794 = vmatpush2.msra.mxu0 0.0
      %3795 = vmatprep.mubr.f32.mxu0 0.0
      %3796 = vmatmul.mubr.f32.gmra.mxu0 %v3726
      %v3797 = vpop.f32.mrf.mxu0
      %v3798 = vadd.f32 0.0, %v3797
      %v3799 = vpop.f32.mrf.mxu0
      %3800 = vmatprep.mubr.f32.mxu0 0.0
      %3801 = vmatmul.mubr.f32.gmra.mxu0 %v3729
      %v3802 = vpop.f32.mrf.mxu0
      %v3803 = vadd.f32 0.0, %v3802
      %v3804 = vpop.f32.mrf.mxu0
      %3805 = vdwg.mxu0
      %s3806 = scalar_lea.vmem [#allocation11], 256
      %v3807 = vld [vmem:[%s3806] sm:$0xff]
      %v3808 = vld [vmem:[%s3806 + $0x8] sm:$0xff]
      %v3809 = vld [vmem:[%s3806 + $0x10] sm:$0xff]
      %v3810 = vld [vmem:[%s3806 + $0x18] sm:$0xff]
      %v3812 = vsel %vm2424, %v3798, 0
      %v3815 = vsel %vm2424, %v3803, 0
      %3817 = vmatprep.subr.mxu0 0.0
      %3818 = vmatpush1.msra.mxu0 0.0
      %3819 = vmatprep.subr.mxu0 0.0
      %3820 = vmatpush1.msra.mxu0 0.0
      %3821 = vmatprep.subr.mxu0 0.0
      %3822 = vmatpush1.msra.mxu0 0.0
      %3823 = vmatprep.subr.mxu0 0.0
      %3824 = vmatpush1.msra.mxu0 0.0
      %3825 = vmatprep.subr.mxu0 0.0
      %3826 = vmatpush1.msra.mxu0 0.0
      %3827 = vmatprep.subr.mxu0 0.0
      %3828 = vmatpush1.msra.mxu0 0.0
      %3829 = vmatprep.subr.mxu0 0.0
      %3830 = vmatpush1.msra.mxu0 0.0
      %3831 = vmatprep.subr.mxu0 0.0
      %3832 = vmatpush1.msra.mxu0 0.0
      %3833 = vmatprep.subr.mxu0 0.0
      %3834 = vmatpush1.msra.mxu0 0.0
      %3835 = vmatprep.subr.mxu0 0.0
      %3836 = vmatpush1.msra.mxu0 0.0
      %3837 = vmatprep.subr.mxu0 0.0
      %3838 = vmatpush1.msra.mxu0 0.0
      %3839 = vmatprep.subr.mxu0 0.0
      %3840 = vmatpush1.msra.mxu0 0.0
      %3841 = vmatprep.subr.mxu0 0.0
      %3842 = vmatpush1.msra.mxu0 %v3810
      %3843 = vmatprep.subr.mxu0 0.0
      %3844 = vmatpush1.msra.mxu0 %v3809
      %3845 = vmatprep.subr.mxu0 0.0
      %3846 = vmatpush1.msra.mxu0 %v3808
      %3847 = vmatprep.subr.mxu0 0.0
      %3848 = vmatpush1.msra.mxu0 %v3807
      %3849 = vmatprep.subr.mxu0 0.0
      %3850 = vmatpush2.msra.mxu0 0.0
      %3851 = vmatprep.subr.mxu0 0.0
      %3852 = vmatpush2.msra.mxu0 0.0
      %3853 = vmatprep.subr.mxu0 0.0
      %3854 = vmatpush2.msra.mxu0 0.0
      %3855 = vmatprep.subr.mxu0 0.0
      %3856 = vmatpush2.msra.mxu0 0.0
      %3857 = vmatprep.subr.mxu0 0.0
      %3858 = vmatpush2.msra.mxu0 0.0
      %3859 = vmatprep.subr.mxu0 0.0
      %3860 = vmatpush2.msra.mxu0 0.0
      %3861 = vmatprep.subr.mxu0 0.0
      %3862 = vmatpush2.msra.mxu0 0.0
      %3863 = vmatprep.subr.mxu0 0.0
      %3864 = vmatpush2.msra.mxu0 0.0
      %3865 = vmatprep.subr.mxu0 0.0
      %3866 = vmatpush2.msra.mxu0 0.0
      %3867 = vmatprep.subr.mxu0 0.0
      %3868 = vmatpush2.msra.mxu0 0.0
      %3869 = vmatprep.subr.mxu0 0.0
      %3870 = vmatpush2.msra.mxu0 0.0
      %3871 = vmatprep.subr.mxu0 0.0
      %3872 = vmatpush2.msra.mxu0 0.0
      %3873 = vmatprep.subr.mxu0 0.0
      %3874 = vmatpush2.msra.mxu0 0.0
      %3875 = vmatprep.subr.mxu0 0.0
      %3876 = vmatpush2.msra.mxu0 0.0
      %3877 = vmatprep.subr.mxu0 0.0
      %3878 = vmatpush2.msra.mxu0 0.0
      %3879 = vmatprep.subr.mxu0 0.0
      %3880 = vmatpush2.msra.mxu0 0.0
      %3881 = vmatprep.mubr.f32.mxu0 0.0
      %3882 = vmatmul.mubr.f32.gmra.mxu0 %v3812
      %v3883 = vpop.f32.mrf.mxu0
      %v3884 = vadd.f32 0.0, %v3883
      %v3885 = vpop.f32.mrf.mxu0
      %3886 = vmatprep.mubr.f32.mxu0 0.0
      %3887 = vmatmul.mubr.f32.gmra.mxu0 %v3815
      %v3888 = vpop.f32.mrf.mxu0
      %v3889 = vadd.f32 0.0, %v3888
      %v3890 = vpop.f32.mrf.mxu0
      %3891 = vdwg.mxu0
      %v3892 = vadd.f32 %v3720, %v3884
      %v3893 = vadd.f32 %v3721, %v3889
      %v3894 = vmul.f32 %v356, 0.3
      %v3895 = vmul.f32 %v357, 0.3
      %v3896 = vsub.f32 %v354, %v3894
      %v3897 = vsub.f32 %v355, %v3895
      %v3898 = vmul.f32 %v3896, 0.6
      %v3899 = vmul.f32 %v3897, 0.6
      %v3900 = vadd.f32 %v3898, %v3892
      %v3901 = vadd.f32 %v3899, %v3893
      %vm3902 = vcmp.gt.f32.partialorder %v3900, 0.3
      %vm3903 = vcmp.gt.f32.partialorder %v3901, 0.3
      %v3904 = vsel %vm3902, 1, 0
      %v3905 = vsel %vm3903, 1, 0
      %v3906 = vcvt.s32.f32 %v3904
      %v3907 = vcvt.s32.f32 %v3905
      %v3908 = vld [vmem:[%s13] sm:$0xff]
      %v3909 = vld [vmem:[%s13 + $0x8] sm:$0xff]
      %v3910 = vld [vmem:[%s13 + $0x10] sm:$0xff]
      %v3911 = vld [vmem:[%s13 + $0x18] sm:$0xff]
      %v3913 = vsel %vm2424, %v3906, 0
      %v3916 = vsel %vm2424, %v3907, 0
      %3918 = vmatprep.subr.mxu0 0.0
      %3919 = vmatpush1.msra.mxu0 0.0
      %3920 = vmatprep.subr.mxu0 0.0
      %3921 = vmatpush1.msra.mxu0 0.0
      %3922 = vmatprep.subr.mxu0 0.0
      %3923 = vmatpush1.msra.mxu0 0.0
      %3924 = vmatprep.subr.mxu0 0.0
      %3925 = vmatpush1.msra.mxu0 0.0
      %3926 = vmatprep.subr.mxu0 0.0
      %3927 = vmatpush1.msra.mxu0 0.0
      %3928 = vmatprep.subr.mxu0 0.0
      %3929 = vmatpush1.msra.mxu0 0.0
      %3930 = vmatprep.subr.mxu0 0.0
      %3931 = vmatpush1.msra.mxu0 0.0
      %3932 = vmatprep.subr.mxu0 0.0
      %3933 = vmatpush1.msra.mxu0 0.0
      %3934 = vmatprep.subr.mxu0 0.0
      %3935 = vmatpush1.msra.mxu0 0.0
      %3936 = vmatprep.subr.mxu0 0.0
      %3937 = vmatpush1.msra.mxu0 0.0
      %3938 = vmatprep.subr.mxu0 0.0
      %3939 = vmatpush1.msra.mxu0 0.0
      %3940 = vmatprep.subr.mxu0 0.0
      %3941 = vmatpush1.msra.mxu0 0.0
      %3942 = vmatprep.subr.mxu0 0.0
      %3943 = vmatpush1.msra.mxu0 %v3911
      %3944 = vmatprep.subr.mxu0 0.0
      %3945 = vmatpush1.msra.mxu0 %v3910
      %3946 = vmatprep.subr.mxu0 0.0
      %3947 = vmatpush1.msra.mxu0 %v3909
      %3948 = vmatprep.subr.mxu0 0.0
      %3949 = vmatpush1.msra.mxu0 %v3908
      %3950 = vmatprep.subr.mxu0 0.0
      %3951 = vmatpush2.msra.mxu0 0.0
      %3952 = vmatprep.subr.mxu0 0.0
      %3953 = vmatpush2.msra.mxu0 0.0
      %3954 = vmatprep.subr.mxu0 0.0
      %3955 = vmatpush2.msra.mxu0 0.0
      %3956 = vmatprep.subr.mxu0 0.0
      %3957 = vmatpush2.msra.mxu0 0.0
      %3958 = vmatprep.subr.mxu0 0.0
      %3959 = vmatpush2.msra.mxu0 0.0
      %3960 = vmatprep.subr.mxu0 0.0
      %3961 = vmatpush2.msra.mxu0 0.0
      %3962 = vmatprep.subr.mxu0 0.0
      %3963 = vmatpush2.msra.mxu0 0.0
      %3964 = vmatprep.subr.mxu0 0.0
      %3965 = vmatpush2.msra.mxu0 0.0
      %3966 = vmatprep.subr.mxu0 0.0
      %3967 = vmatpush2.msra.mxu0 0.0
      %3968 = vmatprep.subr.mxu0 0.0
      %3969 = vmatpush2.msra.mxu0 0.0
      %3970 = vmatprep.subr.mxu0 0.0
      %3971 = vmatpush2.msra.mxu0 0.0
      %3972 = vmatprep.subr.mxu0 0.0
      %3973 = vmatpush2.msra.mxu0 0.0
      %3974 = vmatprep.subr.mxu0 0.0
      %3975 = vmatpush2.msra.mxu0 0.0
      %3976 = vmatprep.subr.mxu0 0.0
      %3977 = vmatpush2.msra.mxu0 0.0
      %3978 = vmatprep.subr.mxu0 0.0
      %3979 = vmatpush2.msra.mxu0 0.0
      %3980 = vmatprep.subr.mxu0 0.0
      %3981 = vmatpush2.msra.mxu0 0.0
      %3982 = vmatprep.mubr.f32.mxu0 0.0
      %3983 = vmatmul.mubr.f32.gmra.mxu0 %v3913
      %v3984 = vpop.f32.mrf.mxu0
      %v3985 = vadd.f32 0.0, %v3984
      %v3986 = vpop.f32.mrf.mxu0
      %3987 = vmatprep.mubr.f32.mxu0 0.0
      %3988 = vmatmul.mubr.f32.gmra.mxu0 %v3916
      %v3989 = vpop.f32.mrf.mxu0
      %v3990 = vadd.f32 0.0, %v3989
      %v3991 = vpop.f32.mrf.mxu0
      %3992 = vdwg.mxu0
      %v3993 = vld [vmem:[%s14] sm:$0xff]
      %v3994 = vld [vmem:[%s14 + $0x8] sm:$0xff]
      %v3995 = vld [vmem:[%s14 + $0x10] sm:$0xff]
      %v3996 = vld [vmem:[%s14 + $0x18] sm:$0xff]
      %v3997 = vld [vmem:[%s14 + $0x20] sm:$0xff]
      %v3998 = vld [vmem:[%s14 + $0x28] sm:$0xff]
      %v3999 = vld [vmem:[%s14 + $0x30] sm:$0xff]
      %v4000 = vld [vmem:[%s14 + $0x38] sm:$0xff]
      %s4001 = scalar_lea.vmem %s13, 32
      %v4002 = vld [vmem:[%s4001] sm:$0xff]
      %v4003 = vld [vmem:[%s4001 + $0x8] sm:$0xff]
      %v4004 = vld [vmem:[%s4001 + $0x10] sm:$0xff]
      %v4005 = vld [vmem:[%s4001 + $0x18] sm:$0xff]
      %4006 = vmatprep.subr.mxu0 0.0
      %4007 = vmatpush1.msra.mxu0 0.0
      %4008 = vmatprep.subr.mxu0 0.0
      %4009 = vmatpush1.msra.mxu0 0.0
      %4010 = vmatprep.subr.mxu0 0.0
      %4011 = vmatpush1.msra.mxu0 0.0
      %4012 = vmatprep.subr.mxu0 0.0
      %4013 = vmatpush1.msra.mxu0 0.0
      %4014 = vmatprep.subr.mxu0 0.0
      %4015 = vmatpush1.msra.mxu0 0.0
      %4016 = vmatprep.subr.mxu0 0.0
      %4017 = vmatpush1.msra.mxu0 0.0
      %4018 = vmatprep.subr.mxu0 0.0
      %4019 = vmatpush1.msra.mxu0 0.0
      %4020 = vmatprep.subr.mxu0 0.0
      %4021 = vmatpush1.msra.mxu0 0.0
      %4022 = vmatprep.subr.mxu0 0.0
      %4023 = vmatpush1.msra.mxu0 0.0
      %4024 = vmatprep.subr.mxu0 0.0
      %4025 = vmatpush1.msra.mxu0 0.0
      %4026 = vmatprep.subr.mxu0 0.0
      %4027 = vmatpush1.msra.mxu0 0.0
      %4028 = vmatprep.subr.mxu0 0.0
      %4029 = vmatpush1.msra.mxu0 0.0
      %4030 = vmatprep.subr.mxu0 0.0
      %4031 = vmatpush1.msra.mxu0 %v4005
      %4032 = vmatprep.subr.mxu0 0.0
      %4033 = vmatpush1.msra.mxu0 %v4004
      %4034 = vmatprep.subr.mxu0 0.0
      %4035 = vmatpush1.msra.mxu0 %v4003
      %4036 = vmatprep.subr.mxu0 0.0
      %4037 = vmatpush1.msra.mxu0 %v4002
      %4038 = vmatprep.subr.mxu0 0.0
      %4039 = vmatpush2.msra.mxu0 0.0
      %4040 = vmatprep.subr.mxu0 0.0
      %4041 = vmatpush2.msra.mxu0 0.0
      %4042 = vmatprep.subr.mxu0 0.0
      %4043 = vmatpush2.msra.mxu0 0.0
      %4044 = vmatprep.subr.mxu0 0.0
      %4045 = vmatpush2.msra.mxu0 0.0
      %4046 = vmatprep.subr.mxu0 0.0
      %4047 = vmatpush2.msra.mxu0 0.0
      %4048 = vmatprep.subr.mxu0 0.0
      %4049 = vmatpush2.msra.mxu0 0.0
      %4050 = vmatprep.subr.mxu0 0.0
      %4051 = vmatpush2.msra.mxu0 0.0
      %4052 = vmatprep.subr.mxu0 0.0
      %4053 = vmatpush2.msra.mxu0 0.0
      %4054 = vmatprep.subr.mxu0 0.0
      %4055 = vmatpush2.msra.mxu0 0.0
      %4056 = vmatprep.subr.mxu0 0.0
      %4057 = vmatpush2.msra.mxu0 0.0
      %4058 = vmatprep.subr.mxu0 0.0
      %4059 = vmatpush2.msra.mxu0 0.0
      %4060 = vmatprep.subr.mxu0 0.0
      %4061 = vmatpush2.msra.mxu0 0.0
      %4062 = vmatprep.subr.mxu0 0.0
      %4063 = vmatpush2.msra.mxu0 0.0
      %4064 = vmatprep.subr.mxu0 0.0
      %4065 = vmatpush2.msra.mxu0 0.0
      %4066 = vmatprep.subr.mxu0 0.0
      %4067 = vmatpush2.msra.mxu0 0.0
      %4068 = vmatprep.subr.mxu0 0.0
      %4069 = vmatpush2.msra.mxu0 0.0
      %4070 = vmatprep.mubr.f32.mxu0 0.0
      %4071 = vmatmul.mubr.f32.gmra.mxu0 %v3913
      %v4072 = vpop.f32.mrf.mxu0
      %v4073 = vadd.f32 0.0, %v4072
      %v4074 = vpop.f32.mrf.mxu0
      %4075 = vmatprep.mubr.f32.mxu0 0.0
      %4076 = vmatmul.mubr.f32.gmra.mxu0 %v3916
      %v4077 = vpop.f32.mrf.mxu0
      %v4078 = vadd.f32 0.0, %v4077
      %v4079 = vpop.f32.mrf.mxu0
      %4080 = vdwg.mxu0
      %s4081 = scalar_lea.vmem %s14, 64
      %v4082 = vld [vmem:[%s4081] sm:$0xff]
      %v4083 = vld [vmem:[%s4081 + $0x8] sm:$0xff]
      %v4084 = vld [vmem:[%s4081 + $0x10] sm:$0xff]
      %v4085 = vld [vmem:[%s4081 + $0x18] sm:$0xff]
      %v4086 = vld [vmem:[%s4081 + $0x20] sm:$0xff]
      %v4087 = vld [vmem:[%s4081 + $0x28] sm:$0xff]
      %v4088 = vld [vmem:[%s4081 + $0x30] sm:$0xff]
      %v4089 = vld [vmem:[%s4081 + $0x38] sm:$0xff]
      %v4091 = vsel %vm2338, %v4082, 0
      %v4094 = vsel %vm2338, %v4083, 0
      %v4097 = vsel %vm2338, %v4084, 0
      %v4100 = vsel %vm2338, %v4085, 0
      %v4103 = vsel %vm2338, %v4086, 0
      %v4106 = vsel %vm2338, %v4087, 0
      %v4109 = vsel %vm2338, %v4088, 0
      %v4112 = vsel %vm2338, %v4089, 0
      %4114 = vmatprep.subr.mxu0 0.0
      %4115 = vmatpush1.msra.mxu0 0.0
      %4116 = vmatprep.subr.mxu0 0.0
      %4117 = vmatpush1.msra.mxu0 0.0
      %4118 = vmatprep.subr.mxu0 0.0
      %4119 = vmatpush1.msra.mxu0 0.0
      %4120 = vmatprep.subr.mxu0 0.0
      %4121 = vmatpush1.msra.mxu0 0.0
      %4122 = vmatprep.subr.mxu0 0.0
      %4123 = vmatpush1.msra.mxu0 0.0
      %4124 = vmatprep.subr.mxu0 0.0
      %4125 = vmatpush1.msra.mxu0 0.0
      %4126 = vmatprep.subr.mxu0 0.0
      %4127 = vmatpush1.msra.mxu0 0.0
      %4128 = vmatprep.subr.mxu0 0.0
      %4129 = vmatpush1.msra.mxu0 0.0
      %4130 = vmatprep.subr.mxu0 0.0
      %4131 = vmatpush1.msra.mxu0 0.0
      %4132 = vmatprep.subr.mxu0 0.0
      %4133 = vmatpush1.msra.mxu0 0.0
      %4134 = vmatprep.subr.mxu0 0.0
      %4135 = vmatpush1.msra.mxu0 0.0
      %4136 = vmatprep.subr.mxu0 0.0
      %4137 = vmatpush1.msra.mxu0 0.0
      %4138 = vmatprep.subr.mxu0 0.0
      %4139 = vmatpush1.msra.mxu0 0.0
      %4140 = vmatprep.subr.mxu0 0.0
      %4141 = vmatpush1.msra.mxu0 0.0
      %4142 = vmatprep.subr.mxu0 0.0
      %4143 = vmatpush1.msra.mxu0 %v4078
      %4144 = vmatprep.subr.mxu0 0.0
      %4145 = vmatpush1.msra.mxu0 %v4073
      %4146 = vmatprep.subr.mxu0 0.0
      %4147 = vmatpush2.msra.mxu0 0.0
      %4148 = vmatprep.subr.mxu0 0.0
      %4149 = vmatpush2.msra.mxu0 0.0
      %4150 = vmatprep.subr.mxu0 0.0
      %4151 = vmatpush2.msra.mxu0 0.0
      %4152 = vmatprep.subr.mxu0 0.0
      %4153 = vmatpush2.msra.mxu0 0.0
      %4154 = vmatprep.subr.mxu0 0.0
      %4155 = vmatpush2.msra.mxu0 0.0
      %4156 = vmatprep.subr.mxu0 0.0
      %4157 = vmatpush2.msra.mxu0 0.0
      %4158 = vmatprep.subr.mxu0 0.0
      %4159 = vmatpush2.msra.mxu0 0.0
      %4160 = vmatprep.subr.mxu0 0.0
      %4161 = vmatpush2.msra.mxu0 0.0
      %4162 = vmatprep.subr.mxu0 0.0
      %4163 = vmatpush2.msra.mxu0 0.0
      %4164 = vmatprep.subr.mxu0 0.0
      %4165 = vmatpush2.msra.mxu0 0.0
      %4166 = vmatprep.subr.mxu0 0.0
      %4167 = vmatpush2.msra.mxu0 0.0
      %4168 = vmatprep.subr.mxu0 0.0
      %4169 = vmatpush2.msra.mxu0 0.0
      %4170 = vmatprep.subr.mxu0 0.0
      %4171 = vmatpush2.msra.mxu0 0.0
      %4172 = vmatprep.subr.mxu0 0.0
      %4173 = vmatpush2.msra.mxu0 0.0
      %4174 = vmatprep.subr.mxu0 0.0
      %4175 = vmatpush2.msra.mxu0 0.0
      %4176 = vmatprep.subr.mxu0 0.0
      %4177 = vmatpush2.msra.mxu0 0.0
      %4178 = vmatprep.mubr.f32.mxu0 0.0
      %4179 = vmatmul.mubr.f32.gmra.mxu0 %v4091
      %v4180 = vpop.f32.mrf.mxu0
      %v4181 = vadd.f32 0.0, %v4180
      %v4182 = vpop.f32.mrf.mxu0
      %4183 = vmatprep.mubr.f32.mxu0 0.0
      %4184 = vmatmul.mubr.f32.gmra.mxu0 %v4094
      %v4185 = vpop.f32.mrf.mxu0
      %v4186 = vadd.f32 0.0, %v4185
      %v4187 = vpop.f32.mrf.mxu0
      %4188 = vmatprep.mubr.f32.mxu0 0.0
      %4189 = vmatmul.mubr.f32.gmra.mxu0 %v4097
      %v4190 = vpop.f32.mrf.mxu0
      %v4191 = vadd.f32 0.0, %v4190
      %v4192 = vpop.f32.mrf.mxu0
      %4193 = vmatprep.mubr.f32.mxu0 0.0
      %4194 = vmatmul.mubr.f32.gmra.mxu0 %v4100
      %v4195 = vpop.f32.mrf.mxu0
      %v4196 = vadd.f32 0.0, %v4195
      %v4197 = vpop.f32.mrf.mxu0
      %4198 = vmatprep.mubr.f32.mxu0 0.0
      %4199 = vmatmul.mubr.f32.gmra.mxu0 %v4103
      %v4200 = vpop.f32.mrf.mxu0
      %v4201 = vadd.f32 0.0, %v4200
      %v4202 = vpop.f32.mrf.mxu0
      %4203 = vmatprep.mubr.f32.mxu0 0.0
      %4204 = vmatmul.mubr.f32.gmra.mxu0 %v4106
      %v4205 = vpop.f32.mrf.mxu0
      %v4206 = vadd.f32 0.0, %v4205
      %v4207 = vpop.f32.mrf.mxu0
      %4208 = vmatprep.mubr.f32.mxu0 0.0
      %4209 = vmatmul.mubr.f32.gmra.mxu0 %v4109
      %v4210 = vpop.f32.mrf.mxu0
      %v4211 = vadd.f32 0.0, %v4210
      %v4212 = vpop.f32.mrf.mxu0
      %4213 = vmatprep.mubr.f32.mxu0 0.0
      %4214 = vmatmul.mubr.f32.gmra.mxu0 %v4112
      %v4215 = vpop.f32.mrf.mxu0
      %v4216 = vadd.f32 0.0, %v4215
      %v4217 = vpop.f32.mrf.mxu0
      %4218 = vdwg.mxu0
      %v4220 = vsel %vm2338, %v3993, 0
      %v4223 = vsel %vm2338, %v3994, 0
      %v4226 = vsel %vm2338, %v3995, 0
      %v4229 = vsel %vm2338, %v3996, 0
      %v4232 = vsel %vm2338, %v3997, 0
      %v4235 = vsel %vm2338, %v3998, 0
      %v4238 = vsel %vm2338, %v3999, 0
      %v4241 = vsel %vm2338, %v4000, 0
      %4243 = vmatprep.subr.mxu0 0.0
      %4244 = vmatpush1.msra.mxu0 0.0
      %4245 = vmatprep.subr.mxu0 0.0
      %4246 = vmatpush1.msra.mxu0 0.0
      %4247 = vmatprep.subr.mxu0 0.0
      %4248 = vmatpush1.msra.mxu0 0.0
      %4249 = vmatprep.subr.mxu0 0.0
      %4250 = vmatpush1.msra.mxu0 0.0
      %4251 = vmatprep.subr.mxu0 0.0
      %4252 = vmatpush1.msra.mxu0 0.0
      %4253 = vmatprep.subr.mxu0 0.0
      %4254 = vmatpush1.msra.mxu0 0.0
      %4255 = vmatprep.subr.mxu0 0.0
      %4256 = vmatpush1.msra.mxu0 0.0
      %4257 = vmatprep.subr.mxu0 0.0
      %4258 = vmatpush1.msra.mxu0 0.0
      %4259 = vmatprep.subr.mxu0 0.0
      %4260 = vmatpush1.msra.mxu0 0.0
      %4261 = vmatprep.subr.mxu0 0.0
      %4262 = vmatpush1.msra.mxu0 0.0
      %4263 = vmatprep.subr.mxu0 0.0
      %4264 = vmatpush1.msra.mxu0 0.0
      %4265 = vmatprep.subr.mxu0 0.0
      %4266 = vmatpush1.msra.mxu0 0.0
      %4267 = vmatprep.subr.mxu0 0.0
      %4268 = vmatpush1.msra.mxu0 0.0
      %4269 = vmatprep.subr.mxu0 0.0
      %4270 = vmatpush1.msra.mxu0 0.0
      %4271 = vmatprep.subr.mxu0 0.0
      %4272 = vmatpush1.msra.mxu0 %v3990
      %4273 = vmatprep.subr.mxu0 0.0
      %4274 = vmatpush1.msra.mxu0 %v3985
      %4275 = vmatprep.subr.mxu0 0.0
      %4276 = vmatpush2.msra.mxu0 0.0
      %4277 = vmatprep.subr.mxu0 0.0
      %4278 = vmatpush2.msra.mxu0 0.0
      %4279 = vmatprep.subr.mxu0 0.0
      %4280 = vmatpush2.msra.mxu0 0.0
      %4281 = vmatprep.subr.mxu0 0.0
      %4282 = vmatpush2.msra.mxu0 0.0
      %4283 = vmatprep.subr.mxu0 0.0
      %4284 = vmatpush2.msra.mxu0 0.0
      %4285 = vmatprep.subr.mxu0 0.0
      %4286 = vmatpush2.msra.mxu0 0.0
      %4287 = vmatprep.subr.mxu0 0.0
      %4288 = vmatpush2.msra.mxu0 0.0
      %4289 = vmatprep.subr.mxu0 0.0
      %4290 = vmatpush2.msra.mxu0 0.0
      %4291 = vmatprep.subr.mxu0 0.0
      %4292 = vmatpush2.msra.mxu0 0.0
      %4293 = vmatprep.subr.mxu0 0.0
      %4294 = vmatpush2.msra.mxu0 0.0
      %4295 = vmatprep.subr.mxu0 0.0
      %4296 = vmatpush2.msra.mxu0 0.0
      %4297 = vmatprep.subr.mxu0 0.0
      %4298 = vmatpush2.msra.mxu0 0.0
      %4299 = vmatprep.subr.mxu0 0.0
      %4300 = vmatpush2.msra.mxu0 0.0
      %4301 = vmatprep.subr.mxu0 0.0
      %4302 = vmatpush2.msra.mxu0 0.0
      %4303 = vmatprep.subr.mxu0 0.0
      %4304 = vmatpush2.msra.mxu0 0.0
      %4305 = vmatprep.subr.mxu0 0.0
      %4306 = vmatpush2.msra.mxu0 0.0
      %4307 = vmatprep.mubr.f32.mxu0 0.0
      %4308 = vmatmul.mubr.f32.gmra.mxu0 %v4220
      %v4309 = vpop.f32.mrf.mxu0
      %v4310 = vadd.f32 %v4181, %v4309
      %v4311 = vpop.f32.mrf.mxu0
      %4312 = vmatprep.mubr.f32.mxu0 0.0
      %4313 = vmatmul.mubr.f32.gmra.mxu0 %v4223
      %v4314 = vpop.f32.mrf.mxu0
      %v4315 = vadd.f32 %v4186, %v4314
      %v4316 = vpop.f32.mrf.mxu0
      %4317 = vmatprep.mubr.f32.mxu0 0.0
      %4318 = vmatmul.mubr.f32.gmra.mxu0 %v4226
      %v4319 = vpop.f32.mrf.mxu0
      %v4320 = vadd.f32 %v4191, %v4319
      %v4321 = vpop.f32.mrf.mxu0
      %4322 = vmatprep.mubr.f32.mxu0 0.0
      %4323 = vmatmul.mubr.f32.gmra.mxu0 %v4229
      %v4324 = vpop.f32.mrf.mxu0
      %v4325 = vadd.f32 %v4196, %v4324
      %v4326 = vpop.f32.mrf.mxu0
      %4327 = vmatprep.mubr.f32.mxu0 0.0
      %4328 = vmatmul.mubr.f32.gmra.mxu0 %v4232
      %v4329 = vpop.f32.mrf.mxu0
      %v4330 = vadd.f32 %v4201, %v4329
      %v4331 = vpop.f32.mrf.mxu0
      %4332 = vmatprep.mubr.f32.mxu0 0.0
      %4333 = vmatmul.mubr.f32.gmra.mxu0 %v4235
      %v4334 = vpop.f32.mrf.mxu0
      %v4335 = vadd.f32 %v4206, %v4334
      %v4336 = vpop.f32.mrf.mxu0
      %4337 = vmatprep.mubr.f32.mxu0 0.0
      %4338 = vmatmul.mubr.f32.gmra.mxu0 %v4238
      %v4339 = vpop.f32.mrf.mxu0
      %v4340 = vadd.f32 %v4211, %v4339
      %v4341 = vpop.f32.mrf.mxu0
      %4342 = vmatprep.mubr.f32.mxu0 0.0
      %4343 = vmatmul.mubr.f32.gmra.mxu0 %v4241
      %v4344 = vpop.f32.mrf.mxu0
      %v4345 = vadd.f32 %v4216, %v4344
      %v4346 = vpop.f32.mrf.mxu0
      %4347 = vdwg.mxu0
      %s4348 = scalar_lea.vmem %s13, 64
      %v4349 = vld [vmem:[%s4348] sm:$0xff]
      %v4350 = vld [vmem:[%s4348 + $0x8] sm:$0xff]
      %v4351 = vld [vmem:[%s4348 + $0x10] sm:$0xff]
      %v4352 = vld [vmem:[%s4348 + $0x18] sm:$0xff]
      %4353 = vmatprep.subr.mxu0 0.0
      %4354 = vmatpush1.msra.mxu0 0.0
      %4355 = vmatprep.subr.mxu0 0.0
      %4356 = vmatpush1.msra.mxu0 0.0
      %4357 = vmatprep.subr.mxu0 0.0
      %4358 = vmatpush1.msra.mxu0 0.0
      %4359 = vmatprep.subr.mxu0 0.0
      %4360 = vmatpush1.msra.mxu0 0.0
      %4361 = vmatprep.subr.mxu0 0.0
      %4362 = vmatpush1.msra.mxu0 0.0
      %4363 = vmatprep.subr.mxu0 0.0
      %4364 = vmatpush1.msra.mxu0 0.0
      %4365 = vmatprep.subr.mxu0 0.0
      %4366 = vmatpush1.msra.mxu0 0.0
      %4367 = vmatprep.subr.mxu0 0.0
      %4368 = vmatpush1.msra.mxu0 0.0
      %4369 = vmatprep.subr.mxu0 0.0
      %4370 = vmatpush1.msra.mxu0 0.0
      %4371 = vmatprep.subr.mxu0 0.0
      %4372 = vmatpush1.msra.mxu0 0.0
      %4373 = vmatprep.subr.mxu0 0.0
      %4374 = vmatpush1.msra.mxu0 0.0
      %4375 = vmatprep.subr.mxu0 0.0
      %4376 = vmatpush1.msra.mxu0 0.0
      %4377 = vmatprep.subr.mxu0 0.0
      %4378 = vmatpush1.msra.mxu0 %v4352
      %4379 = vmatprep.subr.mxu0 0.0
      %4380 = vmatpush1.msra.mxu0 %v4351
      %4381 = vmatprep.subr.mxu0 0.0
      %4382 = vmatpush1.msra.mxu0 %v4350
      %4383 = vmatprep.subr.mxu0 0.0
      %4384 = vmatpush1.msra.mxu0 %v4349
      %4385 = vmatprep.subr.mxu0 0.0
      %4386 = vmatpush2.msra.mxu0 0.0
      %4387 = vmatprep.subr.mxu0 0.0
      %4388 = vmatpush2.msra.mxu0 0.0
      %4389 = vmatprep.subr.mxu0 0.0
      %4390 = vmatpush2.msra.mxu0 0.0
      %4391 = vmatprep.subr.mxu0 0.0
      %4392 = vmatpush2.msra.mxu0 0.0
      %4393 = vmatprep.subr.mxu0 0.0
      %4394 = vmatpush2.msra.mxu0 0.0
      %4395 = vmatprep.subr.mxu0 0.0
      %4396 = vmatpush2.msra.mxu0 0.0
      %4397 = vmatprep.subr.mxu0 0.0
      %4398 = vmatpush2.msra.mxu0 0.0
      %4399 = vmatprep.subr.mxu0 0.0
      %4400 = vmatpush2.msra.mxu0 0.0
      %4401 = vmatprep.subr.mxu0 0.0
      %4402 = vmatpush2.msra.mxu0 0.0
      %4403 = vmatprep.subr.mxu0 0.0
      %4404 = vmatpush2.msra.mxu0 0.0
      %4405 = vmatprep.subr.mxu0 0.0
      %4406 = vmatpush2.msra.mxu0 0.0
      %4407 = vmatprep.subr.mxu0 0.0
      %4408 = vmatpush2.msra.mxu0 0.0
      %4409 = vmatprep.subr.mxu0 0.0
      %4410 = vmatpush2.msra.mxu0 0.0
      %4411 = vmatprep.subr.mxu0 0.0
      %4412 = vmatpush2.msra.mxu0 0.0
      %4413 = vmatprep.subr.mxu0 0.0
      %4414 = vmatpush2.msra.mxu0 0.0
      %4415 = vmatprep.subr.mxu0 0.0
      %4416 = vmatpush2.msra.mxu0 0.0
      %4417 = vmatprep.mubr.f32.mxu0 0.0
      %4418 = vmatmul.mubr.f32.gmra.mxu0 %v3913
      %v4419 = vpop.f32.mrf.mxu0
      %v4420 = vadd.f32 0.0, %v4419
      %v4421 = vpop.f32.mrf.mxu0
      %4422 = vmatprep.mubr.f32.mxu0 0.0
      %4423 = vmatmul.mubr.f32.gmra.mxu0 %v3916
      %v4424 = vpop.f32.mrf.mxu0
      %v4425 = vadd.f32 0.0, %v4424
      %v4426 = vpop.f32.mrf.mxu0
      %4427 = vdwg.mxu0
      %s4428 = scalar_lea.vmem %s14, 128
      %v4429 = vld [vmem:[%s4428] sm:$0xff]
      %v4430 = vld [vmem:[%s4428 + $0x8] sm:$0xff]
      %v4431 = vld [vmem:[%s4428 + $0x10] sm:$0xff]
      %v4432 = vld [vmem:[%s4428 + $0x18] sm:$0xff]
      %v4433 = vld [vmem:[%s4428 + $0x20] sm:$0xff]
      %v4434 = vld [vmem:[%s4428 + $0x28] sm:$0xff]
      %v4435 = vld [vmem:[%s4428 + $0x30] sm:$0xff]
      %v4436 = vld [vmem:[%s4428 + $0x38] sm:$0xff]
      %v4438 = vsel %vm2338, %v4429, 0
      %v4441 = vsel %vm2338, %v4430, 0
      %v4444 = vsel %vm2338, %v4431, 0
      %v4447 = vsel %vm2338, %v4432, 0
      %v4450 = vsel %vm2338, %v4433, 0
      %v4453 = vsel %vm2338, %v4434, 0
      %v4456 = vsel %vm2338, %v4435, 0
      %v4459 = vsel %vm2338, %v4436, 0
      %4461 = vmatprep.subr.mxu0 0.0
      %4462 = vmatpush1.msra.mxu0 0.0
      %4463 = vmatprep.subr.mxu0 0.0
      %4464 = vmatpush1.msra.mxu0 0.0
      %4465 = vmatprep.subr.mxu0 0.0
      %4466 = vmatpush1.msra.mxu0 0.0
      %4467 = vmatprep.subr.mxu0 0.0
      %4468 = vmatpush1.msra.mxu0 0.0
      %4469 = vmatprep.subr.mxu0 0.0
      %4470 = vmatpush1.msra.mxu0 0.0
      %4471 = vmatprep.subr.mxu0 0.0
      %4472 = vmatpush1.msra.mxu0 0.0
      %4473 = vmatprep.subr.mxu0 0.0
      %4474 = vmatpush1.msra.mxu0 0.0
      %4475 = vmatprep.subr.mxu0 0.0
      %4476 = vmatpush1.msra.mxu0 0.0
      %4477 = vmatprep.subr.mxu0 0.0
      %4478 = vmatpush1.msra.mxu0 0.0
      %4479 = vmatprep.subr.mxu0 0.0
      %4480 = vmatpush1.msra.mxu0 0.0
      %4481 = vmatprep.subr.mxu0 0.0
      %4482 = vmatpush1.msra.mxu0 0.0
      %4483 = vmatprep.subr.mxu0 0.0
      %4484 = vmatpush1.msra.mxu0 0.0
      %4485 = vmatprep.subr.mxu0 0.0
      %4486 = vmatpush1.msra.mxu0 0.0
      %4487 = vmatprep.subr.mxu0 0.0
      %4488 = vmatpush1.msra.mxu0 0.0
      %4489 = vmatprep.subr.mxu0 0.0
      %4490 = vmatpush1.msra.mxu0 %v4425
      %4491 = vmatprep.subr.mxu0 0.0
      %4492 = vmatpush1.msra.mxu0 %v4420
      %4493 = vmatprep.subr.mxu0 0.0
      %4494 = vmatpush2.msra.mxu0 0.0
      %4495 = vmatprep.subr.mxu0 0.0
      %4496 = vmatpush2.msra.mxu0 0.0
      %4497 = vmatprep.subr.mxu0 0.0
      %4498 = vmatpush2.msra.mxu0 0.0
      %4499 = vmatprep.subr.mxu0 0.0
      %4500 = vmatpush2.msra.mxu0 0.0
      %4501 = vmatprep.subr.mxu0 0.0
      %4502 = vmatpush2.msra.mxu0 0.0
      %4503 = vmatprep.subr.mxu0 0.0
      %4504 = vmatpush2.msra.mxu0 0.0
      %4505 = vmatprep.subr.mxu0 0.0
      %4506 = vmatpush2.msra.mxu0 0.0
      %4507 = vmatprep.subr.mxu0 0.0
      %4508 = vmatpush2.msra.mxu0 0.0
      %4509 = vmatprep.subr.mxu0 0.0
      %4510 = vmatpush2.msra.mxu0 0.0
      %4511 = vmatprep.subr.mxu0 0.0
      %4512 = vmatpush2.msra.mxu0 0.0
      %4513 = vmatprep.subr.mxu0 0.0
      %4514 = vmatpush2.msra.mxu0 0.0
      %4515 = vmatprep.subr.mxu0 0.0
      %4516 = vmatpush2.msra.mxu0 0.0
      %4517 = vmatprep.subr.mxu0 0.0
      %4518 = vmatpush2.msra.mxu0 0.0
      %4519 = vmatprep.subr.mxu0 0.0
      %4520 = vmatpush2.msra.mxu0 0.0
      %4521 = vmatprep.subr.mxu0 0.0
      %4522 = vmatpush2.msra.mxu0 0.0
      %4523 = vmatprep.subr.mxu0 0.0
      %4524 = vmatpush2.msra.mxu0 0.0
      %4525 = vmatprep.mubr.f32.mxu0 0.0
      %4526 = vmatmul.mubr.f32.gmra.mxu0 %v4438
      %v4527 = vpop.f32.mrf.mxu0
      %v4528 = vadd.f32 0.0, %v4527
      %v4529 = vpop.f32.mrf.mxu0
      %4530 = vmatprep.mubr.f32.mxu0 0.0
      %4531 = vmatmul.mubr.f32.gmra.mxu0 %v4441
      %v4532 = vpop.f32.mrf.mxu0
      %v4533 = vadd.f32 0.0, %v4532
      %v4534 = vpop.f32.mrf.mxu0
      %4535 = vmatprep.mubr.f32.mxu0 0.0
      %4536 = vmatmul.mubr.f32.gmra.mxu0 %v4444
      %v4537 = vpop.f32.mrf.mxu0
      %v4538 = vadd.f32 0.0, %v4537
      %v4539 = vpop.f32.mrf.mxu0
      %4540 = vmatprep.mubr.f32.mxu0 0.0
      %4541 = vmatmul.mubr.f32.gmra.mxu0 %v4447
      %v4542 = vpop.f32.mrf.mxu0
      %v4543 = vadd.f32 0.0, %v4542
      %v4544 = vpop.f32.mrf.mxu0
      %4545 = vmatprep.mubr.f32.mxu0 0.0
      %4546 = vmatmul.mubr.f32.gmra.mxu0 %v4450
      %v4547 = vpop.f32.mrf.mxu0
      %v4548 = vadd.f32 0.0, %v4547
      %v4549 = vpop.f32.mrf.mxu0
      %4550 = vmatprep.mubr.f32.mxu0 0.0
      %4551 = vmatmul.mubr.f32.gmra.mxu0 %v4453
      %v4552 = vpop.f32.mrf.mxu0
      %v4553 = vadd.f32 0.0, %v4552
      %v4554 = vpop.f32.mrf.mxu0
      %4555 = vmatprep.mubr.f32.mxu0 0.0
      %4556 = vmatmul.mubr.f32.gmra.mxu0 %v4456
      %v4557 = vpop.f32.mrf.mxu0
      %v4558 = vadd.f32 0.0, %v4557
      %v4559 = vpop.f32.mrf.mxu0
      %4560 = vmatprep.mubr.f32.mxu0 0.0
      %4561 = vmatmul.mubr.f32.gmra.mxu0 %v4459
      %v4562 = vpop.f32.mrf.mxu0
      %v4563 = vadd.f32 0.0, %v4562
      %v4564 = vpop.f32.mrf.mxu0
      %4565 = vdwg.mxu0
      %v4566 = vadd.f32 %v4310, %v4528
      %v4567 = vadd.f32 %v4315, %v4533
      %v4568 = vadd.f32 %v4320, %v4538
      %v4569 = vadd.f32 %v4325, %v4543
      %v4570 = vadd.f32 %v4330, %v4548
      %v4571 = vadd.f32 %v4335, %v4553
      %v4572 = vadd.f32 %v4340, %v4558
      %v4573 = vadd.f32 %v4345, %v4563
      %s4574 = scalar_lea.vmem %s13, 96
      %v4575 = vld [vmem:[%s4574] sm:$0xff]
      %v4576 = vld [vmem:[%s4574 + $0x8] sm:$0xff]
      %v4577 = vld [vmem:[%s4574 + $0x10] sm:$0xff]
      %v4578 = vld [vmem:[%s4574 + $0x18] sm:$0xff]
      %4579 = vmatprep.subr.mxu0 0.0
      %4580 = vmatpush1.msra.mxu0 0.0
      %4581 = vmatprep.subr.mxu0 0.0
      %4582 = vmatpush1.msra.mxu0 0.0
      %4583 = vmatprep.subr.mxu0 0.0
      %4584 = vmatpush1.msra.mxu0 0.0
      %4585 = vmatprep.subr.mxu0 0.0
      %4586 = vmatpush1.msra.mxu0 0.0
      %4587 = vmatprep.subr.mxu0 0.0
      %4588 = vmatpush1.msra.mxu0 0.0
      %4589 = vmatprep.subr.mxu0 0.0
      %4590 = vmatpush1.msra.mxu0 0.0
      %4591 = vmatprep.subr.mxu0 0.0
      %4592 = vmatpush1.msra.mxu0 0.0
      %4593 = vmatprep.subr.mxu0 0.0
      %4594 = vmatpush1.msra.mxu0 0.0
      %4595 = vmatprep.subr.mxu0 0.0
      %4596 = vmatpush1.msra.mxu0 0.0
      %4597 = vmatprep.subr.mxu0 0.0
      %4598 = vmatpush1.msra.mxu0 0.0
      %4599 = vmatprep.subr.mxu0 0.0
      %4600 = vmatpush1.msra.mxu0 0.0
      %4601 = vmatprep.subr.mxu0 0.0
      %4602 = vmatpush1.msra.mxu0 0.0
      %4603 = vmatprep.subr.mxu0 0.0
      %4604 = vmatpush1.msra.mxu0 %v4578
      %4605 = vmatprep.subr.mxu0 0.0
      %4606 = vmatpush1.msra.mxu0 %v4577
      %4607 = vmatprep.subr.mxu0 0.0
      %4608 = vmatpush1.msra.mxu0 %v4576
      %4609 = vmatprep.subr.mxu0 0.0
      %4610 = vmatpush1.msra.mxu0 %v4575
      %4611 = vmatprep.subr.mxu0 0.0
      %4612 = vmatpush2.msra.mxu0 0.0
      %4613 = vmatprep.subr.mxu0 0.0
      %4614 = vmatpush2.msra.mxu0 0.0
      %4615 = vmatprep.subr.mxu0 0.0
      %4616 = vmatpush2.msra.mxu0 0.0
      %4617 = vmatprep.subr.mxu0 0.0
      %4618 = vmatpush2.msra.mxu0 0.0
      %4619 = vmatprep.subr.mxu0 0.0
      %4620 = vmatpush2.msra.mxu0 0.0
      %4621 = vmatprep.subr.mxu0 0.0
      %4622 = vmatpush2.msra.mxu0 0.0
      %4623 = vmatprep.subr.mxu0 0.0
      %4624 = vmatpush2.msra.mxu0 0.0
      %4625 = vmatprep.subr.mxu0 0.0
      %4626 = vmatpush2.msra.mxu0 0.0
      %4627 = vmatprep.subr.mxu0 0.0
      %4628 = vmatpush2.msra.mxu0 0.0
      %4629 = vmatprep.subr.mxu0 0.0
      %4630 = vmatpush2.msra.mxu0 0.0
      %4631 = vmatprep.subr.mxu0 0.0
      %4632 = vmatpush2.msra.mxu0 0.0
      %4633 = vmatprep.subr.mxu0 0.0
      %4634 = vmatpush2.msra.mxu0 0.0
      %4635 = vmatprep.subr.mxu0 0.0
      %4636 = vmatpush2.msra.mxu0 0.0
      %4637 = vmatprep.subr.mxu0 0.0
      %4638 = vmatpush2.msra.mxu0 0.0
      %4639 = vmatprep.subr.mxu0 0.0
      %4640 = vmatpush2.msra.mxu0 0.0
      %4641 = vmatprep.subr.mxu0 0.0
      %4642 = vmatpush2.msra.mxu0 0.0
      %4643 = vmatprep.mubr.f32.mxu0 0.0
      %4644 = vmatmul.mubr.f32.gmra.mxu0 %v3913
      %v4645 = vpop.f32.mrf.mxu0
      %v4646 = vadd.f32 0.0, %v4645
      %v4647 = vpop.f32.mrf.mxu0
      %4648 = vmatprep.mubr.f32.mxu0 0.0
      %4649 = vmatmul.mubr.f32.gmra.mxu0 %v3916
      %v4650 = vpop.f32.mrf.mxu0
      %v4651 = vadd.f32 0.0, %v4650
      %v4652 = vpop.f32.mrf.mxu0
      %4653 = vdwg.mxu0
      %s4654 = scalar_lea.vmem %s14, 192
      %v4655 = vld [vmem:[%s4654] sm:$0xff]
      %v4656 = vld [vmem:[%s4654 + $0x8] sm:$0xff]
      %v4657 = vld [vmem:[%s4654 + $0x10] sm:$0xff]
      %v4658 = vld [vmem:[%s4654 + $0x18] sm:$0xff]
      %v4659 = vld [vmem:[%s4654 + $0x20] sm:$0xff]
      %v4660 = vld [vmem:[%s4654 + $0x28] sm:$0xff]
      %v4661 = vld [vmem:[%s4654 + $0x30] sm:$0xff]
      %v4662 = vld [vmem:[%s4654 + $0x38] sm:$0xff]
      %v4664 = vsel %vm2338, %v4655, 0
      %v4667 = vsel %vm2338, %v4656, 0
      %v4670 = vsel %vm2338, %v4657, 0
      %v4673 = vsel %vm2338, %v4658, 0
      %v4676 = vsel %vm2338, %v4659, 0
      %v4679 = vsel %vm2338, %v4660, 0
      %v4682 = vsel %vm2338, %v4661, 0
      %v4685 = vsel %vm2338, %v4662, 0
      %4687 = vmatprep.subr.mxu0 0.0
      %4688 = vmatpush1.msra.mxu0 0.0
      %4689 = vmatprep.subr.mxu0 0.0
      %4690 = vmatpush1.msra.mxu0 0.0
      %4691 = vmatprep.subr.mxu0 0.0
      %4692 = vmatpush1.msra.mxu0 0.0
      %4693 = vmatprep.subr.mxu0 0.0
      %4694 = vmatpush1.msra.mxu0 0.0
      %4695 = vmatprep.subr.mxu0 0.0
      %4696 = vmatpush1.msra.mxu0 0.0
      %4697 = vmatprep.subr.mxu0 0.0
      %4698 = vmatpush1.msra.mxu0 0.0
      %4699 = vmatprep.subr.mxu0 0.0
      %4700 = vmatpush1.msra.mxu0 0.0
      %4701 = vmatprep.subr.mxu0 0.0
      %4702 = vmatpush1.msra.mxu0 0.0
      %4703 = vmatprep.subr.mxu0 0.0
      %4704 = vmatpush1.msra.mxu0 0.0
      %4705 = vmatprep.subr.mxu0 0.0
      %4706 = vmatpush1.msra.mxu0 0.0
      %4707 = vmatprep.subr.mxu0 0.0
      %4708 = vmatpush1.msra.mxu0 0.0
      %4709 = vmatprep.subr.mxu0 0.0
      %4710 = vmatpush1.msra.mxu0 0.0
      %4711 = vmatprep.subr.mxu0 0.0
      %4712 = vmatpush1.msra.mxu0 0.0
      %4713 = vmatprep.subr.mxu0 0.0
      %4714 = vmatpush1.msra.mxu0 0.0
      %4715 = vmatprep.subr.mxu0 0.0
      %4716 = vmatpush1.msra.mxu0 %v4651
      %4717 = vmatprep.subr.mxu0 0.0
      %4718 = vmatpush1.msra.mxu0 %v4646
      %4719 = vmatprep.subr.mxu0 0.0
      %4720 = vmatpush2.msra.mxu0 0.0
      %4721 = vmatprep.subr.mxu0 0.0
      %4722 = vmatpush2.msra.mxu0 0.0
      %4723 = vmatprep.subr.mxu0 0.0
      %4724 = vmatpush2.msra.mxu0 0.0
      %4725 = vmatprep.subr.mxu0 0.0
      %4726 = vmatpush2.msra.mxu0 0.0
      %4727 = vmatprep.subr.mxu0 0.0
      %4728 = vmatpush2.msra.mxu0 0.0
      %4729 = vmatprep.subr.mxu0 0.0
      %4730 = vmatpush2.msra.mxu0 0.0
      %4731 = vmatprep.subr.mxu0 0.0
      %4732 = vmatpush2.msra.mxu0 0.0
      %4733 = vmatprep.subr.mxu0 0.0
      %4734 = vmatpush2.msra.mxu0 0.0
      %4735 = vmatprep.subr.mxu0 0.0
      %4736 = vmatpush2.msra.mxu0 0.0
      %4737 = vmatprep.subr.mxu0 0.0
      %4738 = vmatpush2.msra.mxu0 0.0
      %4739 = vmatprep.subr.mxu0 0.0
      %4740 = vmatpush2.msra.mxu0 0.0
      %4741 = vmatprep.subr.mxu0 0.0
      %4742 = vmatpush2.msra.mxu0 0.0
      %4743 = vmatprep.subr.mxu0 0.0
      %4744 = vmatpush2.msra.mxu0 0.0
      %4745 = vmatprep.subr.mxu0 0.0
      %4746 = vmatpush2.msra.mxu0 0.0
      %4747 = vmatprep.subr.mxu0 0.0
      %4748 = vmatpush2.msra.mxu0 0.0
      %4749 = vmatprep.subr.mxu0 0.0
      %4750 = vmatpush2.msra.mxu0 0.0
      %4751 = vmatprep.mubr.f32.mxu0 0.0
      %4752 = vmatmul.mubr.f32.gmra.mxu0 %v4664
      %v4753 = vpop.f32.mrf.mxu0
      %v4754 = vadd.f32 0.0, %v4753
      %v4755 = vpop.f32.mrf.mxu0
      %4756 = vmatprep.mubr.f32.mxu0 0.0
      %4757 = vmatmul.mubr.f32.gmra.mxu0 %v4667
      %v4758 = vpop.f32.mrf.mxu0
      %v4759 = vadd.f32 0.0, %v4758
      %v4760 = vpop.f32.mrf.mxu0
      %4761 = vmatprep.mubr.f32.mxu0 0.0
      %4762 = vmatmul.mubr.f32.gmra.mxu0 %v4670
      %v4763 = vpop.f32.mrf.mxu0
      %v4764 = vadd.f32 0.0, %v4763
      %v4765 = vpop.f32.mrf.mxu0
      %4766 = vmatprep.mubr.f32.mxu0 0.0
      %4767 = vmatmul.mubr.f32.gmra.mxu0 %v4673
      %v4768 = vpop.f32.mrf.mxu0
      %v4769 = vadd.f32 0.0, %v4768
      %v4770 = vpop.f32.mrf.mxu0
      %4771 = vmatprep.mubr.f32.mxu0 0.0
      %4772 = vmatmul.mubr.f32.gmra.mxu0 %v4676
      %v4773 = vpop.f32.mrf.mxu0
      %v4774 = vadd.f32 0.0, %v4773
      %v4775 = vpop.f32.mrf.mxu0
      %4776 = vmatprep.mubr.f32.mxu0 0.0
      %4777 = vmatmul.mubr.f32.gmra.mxu0 %v4679
      %v4778 = vpop.f32.mrf.mxu0
      %v4779 = vadd.f32 0.0, %v4778
      %v4780 = vpop.f32.mrf.mxu0
      %4781 = vmatprep.mubr.f32.mxu0 0.0
      %4782 = vmatmul.mubr.f32.gmra.mxu0 %v4682
      %v4783 = vpop.f32.mrf.mxu0
      %v4784 = vadd.f32 0.0, %v4783
      %v4785 = vpop.f32.mrf.mxu0
      %4786 = vmatprep.mubr.f32.mxu0 0.0
      %4787 = vmatmul.mubr.f32.gmra.mxu0 %v4685
      %v4788 = vpop.f32.mrf.mxu0
      %v4789 = vadd.f32 0.0, %v4788
      %v4790 = vpop.f32.mrf.mxu0
      %4791 = vdwg.mxu0
      %v4792 = vadd.f32 %v4566, %v4754
      %v4793 = vadd.f32 %v4567, %v4759
      %v4794 = vadd.f32 %v4568, %v4764
      %v4795 = vadd.f32 %v4569, %v4769
      %v4796 = vadd.f32 %v4570, %v4774
      %v4797 = vadd.f32 %v4571, %v4779
      %v4798 = vadd.f32 %v4572, %v4784
      %v4799 = vadd.f32 %v4573, %v4789
      %v4800 = vmul.f32 %v4792, %v612
      %v4801 = vmul.f32 %v4793, %v612
      %v4802 = vmul.f32 %v4794, %v612
      %v4803 = vmul.f32 %v4795, %v612
      %v4804 = vmul.f32 %v4796, %v612
      %v4805 = vmul.f32 %v4797, %v612
      %v4806 = vmul.f32 %v4798, %v612
      %v4807 = vmul.f32 %v4799, %v612
      %v4808 = vld [vmem:[#allocation12] sm:$0xff]
      %v4809 = vld [vmem:[#allocation12 + $0x8] sm:$0xff]
      %v4810 = vld [vmem:[#allocation12 + $0x10] sm:$0xff]
      %v4811 = vld [vmem:[#allocation12 + $0x18] sm:$0xff]
      %v4812 = vld [vmem:[%s16] sm:$0xff]
      %v4813 = vld [vmem:[%s16 + $0x8] sm:$0xff]
      %v4814 = vld [vmem:[%s16 + $0x10] sm:$0xff]
      %v4815 = vld [vmem:[%s16 + $0x18] sm:$0xff]
      %4817 = vset.pattern.permute.xlu0 0
      %4818 = vperm.xlu0 %4817, %v4812
      %v4819 = vpop.permute.xlu0 %4818
      %4822 = vset.pattern.permute.xlu0 0
      %4823 = vperm.xlu0 %4822, %v4813
      %v4824 = vpop.permute.xlu0 %4823
      %4827 = vset.pattern.permute.xlu0 0
      %4828 = vperm.xlu0 %4827, %v4814
      %v4829 = vpop.permute.xlu0 %4828
      %4832 = vset.pattern.permute.xlu0 0
      %4833 = vperm.xlu0 %4832, %v4815
      %v4834 = vpop.permute.xlu0 %4833
      %vm4836 = vcmask 523264
      %v4838 = vsel %vm4836, %v4808, 0
      %v4841 = vsel %vm4836, %v4809, 0
      %v4844 = vsel %vm4836, %v4810, 0
      %v4847 = vsel %vm4836, %v4811, 0
      %4849 = vmatprep.subr.mxu0 0.0
      %4850 = vmatpush1.msra.mxu0 0.0
      %4851 = vmatprep.subr.mxu0 0.0
      %4852 = vmatpush1.msra.mxu0 0.0
      %4853 = vmatprep.subr.mxu0 0.0
      %4854 = vmatpush1.msra.mxu0 0.0
      %4855 = vmatprep.subr.mxu0 0.0
      %4856 = vmatpush1.msra.mxu0 0.0
      %4857 = vmatprep.subr.mxu0 0.0
      %4858 = vmatpush1.msra.mxu0 0.0
      %4859 = vmatprep.subr.mxu0 0.0
      %4860 = vmatpush1.msra.mxu0 0.0
      %4861 = vmatprep.subr.mxu0 0.0
      %4862 = vmatpush1.msra.mxu0 0.0
      %4863 = vmatprep.subr.mxu0 0.0
      %4864 = vmatpush1.msra.mxu0 0.0
      %4865 = vmatprep.subr.mxu0 0.0
      %4866 = vmatpush1.msra.mxu0 %v4807
      %4867 = vmatprep.subr.mxu0 0.0
      %4868 = vmatpush1.msra.mxu0 %v4806
      %4869 = vmatprep.subr.mxu0 0.0
      %4870 = vmatpush1.msra.mxu0 %v4805
      %4871 = vmatprep.subr.mxu0 0.0
      %4872 = vmatpush1.msra.mxu0 %v4804
      %4873 = vmatprep.subr.mxu0 0.0
      %4874 = vmatpush1.msra.mxu0 %v4803
      %4875 = vmatprep.subr.mxu0 0.0
      %4876 = vmatpush1.msra.mxu0 %v4802
      %4877 = vmatprep.subr.mxu0 0.0
      %4878 = vmatpush1.msra.mxu0 %v4801
      %4879 = vmatprep.subr.mxu0 0.0
      %4880 = vmatpush1.msra.mxu0 %v4800
      %4881 = vmatprep.subr.mxu0 0.0
      %4882 = vmatpush2.msra.mxu0 0.0
      %4883 = vmatprep.subr.mxu0 0.0
      %4884 = vmatpush2.msra.mxu0 0.0
      %4885 = vmatprep.subr.mxu0 0.0
      %4886 = vmatpush2.msra.mxu0 0.0
      %4887 = vmatprep.subr.mxu0 0.0
      %4888 = vmatpush2.msra.mxu0 0.0
      %4889 = vmatprep.subr.mxu0 0.0
      %4890 = vmatpush2.msra.mxu0 0.0
      %4891 = vmatprep.subr.mxu0 0.0
      %4892 = vmatpush2.msra.mxu0 0.0
      %4893 = vmatprep.subr.mxu0 0.0
      %4894 = vmatpush2.msra.mxu0 0.0
      %4895 = vmatprep.subr.mxu0 0.0
      %4896 = vmatpush2.msra.mxu0 0.0
      %4897 = vmatprep.subr.mxu0 0.0
      %4898 = vmatpush2.msra.mxu0 0.0
      %4899 = vmatprep.subr.mxu0 0.0
      %4900 = vmatpush2.msra.mxu0 0.0
      %4901 = vmatprep.subr.mxu0 0.0
      %4902 = vmatpush2.msra.mxu0 0.0
      %4903 = vmatprep.subr.mxu0 0.0
      %4904 = vmatpush2.msra.mxu0 0.0
      %4905 = vmatprep.subr.mxu0 0.0
      %4906 = vmatpush2.msra.mxu0 0.0
      %4907 = vmatprep.subr.mxu0 0.0
      %4908 = vmatpush2.msra.mxu0 0.0
      %4909 = vmatprep.subr.mxu0 0.0
      %4910 = vmatpush2.msra.mxu0 0.0
      %4911 = vmatprep.subr.mxu0 0.0
      %4912 = vmatpush2.msra.mxu0 0.0
      %4913 = vmatprep.mubr.f32.mxu0 0.0
      %4914 = vmatmul.mubr.f32.gmra.mxu0 %v4838
      %v4915 = vpop.f32.mrf.mxu0
      %v4916 = vadd.f32 %v4819, %v4915
      %v4917 = vpop.f32.mrf.mxu0
      %4918 = vmatprep.mubr.f32.mxu0 0.0
      %4919 = vmatmul.mubr.f32.gmra.mxu0 %v4841
      %v4920 = vpop.f32.mrf.mxu0
      %v4921 = vadd.f32 %v4824, %v4920
      %v4922 = vpop.f32.mrf.mxu0
      %4923 = vmatprep.mubr.f32.mxu0 0.0
      %4924 = vmatmul.mubr.f32.gmra.mxu0 %v4844
      %v4925 = vpop.f32.mrf.mxu0
      %v4926 = vadd.f32 %v4829, %v4925
      %v4927 = vpop.f32.mrf.mxu0
      %4928 = vmatprep.mubr.f32.mxu0 0.0
      %4929 = vmatmul.mubr.f32.gmra.mxu0 %v4847
      %v4930 = vpop.f32.mrf.mxu0
      %v4931 = vadd.f32 %v4834, %v4930
      %v4932 = vpop.f32.mrf.mxu0
      %4933 = vdwg.mxu0
      %v4935 = vsel %vm4836, %v372, 0
      %v4938 = vsel %vm4836, %v373, 0
      %v4941 = vsel %vm4836, %v374, 0
      %v4944 = vsel %vm4836, %v375, 0
      %4946 = vmatprep.subr.mxu0 0.0
      %4947 = vmatpush1.msra.mxu0 0.0
      %4948 = vmatprep.subr.mxu0 0.0
      %4949 = vmatpush1.msra.mxu0 0.0
      %4950 = vmatprep.subr.mxu0 0.0
      %4951 = vmatpush1.msra.mxu0 0.0
      %4952 = vmatprep.subr.mxu0 0.0
      %4953 = vmatpush1.msra.mxu0 0.0
      %4954 = vmatprep.subr.mxu0 0.0
      %4955 = vmatpush1.msra.mxu0 0.0
      %4956 = vmatprep.subr.mxu0 0.0
      %4957 = vmatpush1.msra.mxu0 0.0
      %4958 = vmatprep.subr.mxu0 0.0
      %4959 = vmatpush1.msra.mxu0 0.0
      %4960 = vmatprep.subr.mxu0 0.0
      %4961 = vmatpush1.msra.mxu0 0.0
      %4962 = vmatprep.subr.mxu0 0.0
      %4963 = vmatpush1.msra.mxu0 %v4807
      %4964 = vmatprep.subr.mxu0 0.0
      %4965 = vmatpush1.msra.mxu0 %v4806
      %4966 = vmatprep.subr.mxu0 0.0
      %4967 = vmatpush1.msra.mxu0 %v4805
      %4968 = vmatprep.subr.mxu0 0.0
      %4969 = vmatpush1.msra.mxu0 %v4804
      %4970 = vmatprep.subr.mxu0 0.0
      %4971 = vmatpush1.msra.mxu0 %v4803
      %4972 = vmatprep.subr.mxu0 0.0
      %4973 = vmatpush1.msra.mxu0 %v4802
      %4974 = vmatprep.subr.mxu0 0.0
      %4975 = vmatpush1.msra.mxu0 %v4801
      %4976 = vmatprep.subr.mxu0 0.0
      %4977 = vmatpush1.msra.mxu0 %v4800
      %4978 = vmatprep.subr.mxu0 0.0
      %4979 = vmatpush2.msra.mxu0 0.0
      %4980 = vmatprep.subr.mxu0 0.0
      %4981 = vmatpush2.msra.mxu0 0.0
      %4982 = vmatprep.subr.mxu0 0.0
      %4983 = vmatpush2.msra.mxu0 0.0
      %4984 = vmatprep.subr.mxu0 0.0
      %4985 = vmatpush2.msra.mxu0 0.0
      %4986 = vmatprep.subr.mxu0 0.0
      %4987 = vmatpush2.msra.mxu0 0.0
      %4988 = vmatprep.subr.mxu0 0.0
      %4989 = vmatpush2.msra.mxu0 0.0
      %4990 = vmatprep.subr.mxu0 0.0
      %4991 = vmatpush2.msra.mxu0 0.0
      %4992 = vmatprep.subr.mxu0 0.0
      %4993 = vmatpush2.msra.mxu0 0.0
      %4994 = vmatprep.subr.mxu0 0.0
      %4995 = vmatpush2.msra.mxu0 0.0
      %4996 = vmatprep.subr.mxu0 0.0
      %4997 = vmatpush2.msra.mxu0 0.0
      %4998 = vmatprep.subr.mxu0 0.0
      %4999 = vmatpush2.msra.mxu0 0.0
      %5000 = vmatprep.subr.mxu0 0.0
      %5001 = vmatpush2.msra.mxu0 0.0
      %5002 = vmatprep.subr.mxu0 0.0
      %5003 = vmatpush2.msra.mxu0 0.0
      %5004 = vmatprep.subr.mxu0 0.0
      %5005 = vmatpush2.msra.mxu0 0.0
      %5006 = vmatprep.subr.mxu0 0.0
      %5007 = vmatpush2.msra.mxu0 0.0
      %5008 = vmatprep.subr.mxu0 0.0
      %5009 = vmatpush2.msra.mxu0 0.0
      %5010 = vmatprep.mubr.f32.mxu0 0.0
      %5011 = vmatmul.mubr.f32.gmra.mxu0 %v4935
      %v5012 = vpop.f32.mrf.mxu0
      %v5013 = vadd.f32 0.0, %v5012
      %v5014 = vpop.f32.mrf.mxu0
      %5015 = vmatprep.mubr.f32.mxu0 0.0
      %5016 = vmatmul.mubr.f32.gmra.mxu0 %v4938
      %v5017 = vpop.f32.mrf.mxu0
      %v5018 = vadd.f32 0.0, %v5017
      %v5019 = vpop.f32.mrf.mxu0
      %5020 = vmatprep.mubr.f32.mxu0 0.0
      %5021 = vmatmul.mubr.f32.gmra.mxu0 %v4941
      %v5022 = vpop.f32.mrf.mxu0
      %v5023 = vadd.f32 0.0, %v5022
      %v5024 = vpop.f32.mrf.mxu0
      %5025 = vmatprep.mubr.f32.mxu0 0.0
      %5026 = vmatmul.mubr.f32.gmra.mxu0 %v4944
      %v5027 = vpop.f32.mrf.mxu0
      %v5028 = vadd.f32 0.0, %v5027
      %v5029 = vpop.f32.mrf.mxu0
      %5030 = vdwg.mxu0
      %v5031 = vstv %s157
      %v5032 = vmul.f32 %v5031, %v5013
      %v5033 = vmul.f32 %v5031, %v5018
      %v5034 = vmul.f32 %v5031, %v5023
      %v5035 = vmul.f32 %v5031, %v5028
      %v5036 = vadd.f32 %v4916, %v5032
      %v5037 = vadd.f32 %v4921, %v5033
      %v5038 = vadd.f32 %v4926, %v5034
      %v5039 = vadd.f32 %v4931, %v5035
      %v5040 = vmul.f32 %v362, 0.3
      %v5041 = vmul.f32 %v363, 0.3
      %v5042 = vmul.f32 %v364, 0.3
      %v5043 = vmul.f32 %v365, 0.3
      %v5044 = vsub.f32 %v358, %v5040
      %v5045 = vsub.f32 %v359, %v5041
      %v5046 = vsub.f32 %v360, %v5042
      %v5047 = vsub.f32 %v361, %v5043
      %v5048 = vmul.f32 %v5044, 0.6
      %v5049 = vmul.f32 %v5045, 0.6
      %v5050 = vmul.f32 %v5046, 0.6
      %v5051 = vmul.f32 %v5047, 0.6
      %v5052 = vadd.f32 %v5048, %v5036
      %v5053 = vadd.f32 %v5049, %v5037
      %v5054 = vadd.f32 %v5050, %v5038
      %v5055 = vadd.f32 %v5051, %v5039
      %vm5056 = vcmp.gt.f32.partialorder %v5052, 0.3
      %vm5057 = vcmp.gt.f32.partialorder %v5053, 0.3
      %vm5058 = vcmp.gt.f32.partialorder %v5054, 0.3
      %vm5059 = vcmp.gt.f32.partialorder %v5055, 0.3
      %v5060 = vsel %vm5056, 1, 0
      %v5061 = vsel %vm5057, 1, 0
      %v5062 = vsel %vm5058, 1, 0
      %v5063 = vsel %vm5059, 1, 0
      %v5064 = vcvt.s32.f32 %v5060
      %v5065 = vcvt.s32.f32 %v5061
      %v5066 = vcvt.s32.f32 %v5062
      %v5067 = vcvt.s32.f32 %v5063
      %v5068 = vld [vmem:[%s17] sm:$0xff]
      %v5069 = vld [vmem:[%s17 + $0x8] sm:$0xff]
      %v5070 = vld [vmem:[%s17 + $0x10] sm:$0xff]
      %v5071 = vld [vmem:[%s17 + $0x18] sm:$0xff]
      %v5072 = vld [vmem:[%s17 + $0x20] sm:$0xff]
      %v5073 = vld [vmem:[%s17 + $0x28] sm:$0xff]
      %v5074 = vld [vmem:[%s17 + $0x30] sm:$0xff]
      %v5075 = vld [vmem:[%s17 + $0x38] sm:$0xff]
      %5077 = vset.pattern.permute.xlu0 0
      %5078 = vperm.xlu0 %5077, %v5068
      %v5079 = vpop.permute.xlu0 %5078
      %5082 = vset.pattern.permute.xlu0 0
      %5083 = vperm.xlu0 %5082, %v5069
      %v5084 = vpop.permute.xlu0 %5083
      %5087 = vset.pattern.permute.xlu0 0
      %5088 = vperm.xlu0 %5087, %v5070
      %v5089 = vpop.permute.xlu0 %5088
      %5092 = vset.pattern.permute.xlu0 0
      %5093 = vperm.xlu0 %5092, %v5071
      %v5094 = vpop.permute.xlu0 %5093
      %5097 = vset.pattern.permute.xlu0 0
      %5098 = vperm.xlu0 %5097, %v5072
      %v5099 = vpop.permute.xlu0 %5098
      %5102 = vset.pattern.permute.xlu0 0
      %5103 = vperm.xlu0 %5102, %v5073
      %v5104 = vpop.permute.xlu0 %5103
      %5107 = vset.pattern.permute.xlu0 0
      %5108 = vperm.xlu0 %5107, %v5074
      %v5109 = vpop.permute.xlu0 %5108
      %5112 = vset.pattern.permute.xlu0 0
      %5113 = vperm.xlu0 %5112, %v5075
      %v5114 = vpop.permute.xlu0 %5113
      %v5116 = vmul.f32 %v4800, %v5079
      %v5117 = vmul.f32 %v4801, %v5084
      %v5118 = vmul.f32 %v4802, %v5089
      %v5119 = vmul.f32 %v4803, %v5094
      %v5120 = vmul.f32 %v4804, %v5099
      %v5121 = vmul.f32 %v4805, %v5104
      %v5122 = vmul.f32 %v4806, %v5109
      %v5123 = vmul.f32 %v4807, %v5114
      %v5124 = vmul.f32 %v5052, 3.3333333
      %v5125 = vmul.f32 %v5053, 3.3333333
      %v5126 = vmul.f32 %v5054, 3.3333333
      %v5127 = vmul.f32 %v5055, 3.3333333
      %v5128 = vld [vmem:[%s18] sm:$0xff]
      %v5129 = vld [vmem:[%s18 + $0x8] sm:$0xff]
      %v5130 = vld [vmem:[%s18 + $0x10] sm:$0xff]
      %v5131 = vld [vmem:[%s18 + $0x18] sm:$0xff]
      %5133 = vset.pattern.permute.xlu0 0
      %5134 = vperm.xlu0 %5133, %v5128
      %v5135 = vpop.permute.xlu0 %5134
      %5138 = vset.pattern.permute.xlu0 0
      %5139 = vperm.xlu0 %5138, %v5129
      %v5140 = vpop.permute.xlu0 %5139
      %5143 = vset.pattern.permute.xlu0 0
      %5144 = vperm.xlu0 %5143, %v5130
      %v5145 = vpop.permute.xlu0 %5144
      %5148 = vset.pattern.permute.xlu0 0
      %5149 = vperm.xlu0 %5148, %v5131
      %v5150 = vpop.permute.xlu0 %5149
      %v5152 = vsub.f32 %v5124, %v5135
      %v5153 = vsub.f32 %v5125, %v5140
      %v5154 = vsub.f32 %v5126, %v5145
      %v5155 = vsub.f32 %v5127, %v5150
      %vm5156 = vcmask 15360
      %v5158 = vsel %vm5156, %v5152, 0
      %v5161 = vsel %vm5156, %v5153, 0
      %v5164 = vsel %vm5156, %v5154, 0
      %v5167 = vsel %vm5156, %v5155, 0
      %v5170 = vsel %vm5156, %v5116, 0
      %v5173 = vsel %vm5156, %v5117, 0
      %v5176 = vsel %vm5156, %v5118, 0
      %v5179 = vsel %vm5156, %v5119, 0
      %v5182 = vsel %vm5156, %v5120, 0
      %v5185 = vsel %vm5156, %v5121, 0
      %v5188 = vsel %vm5156, %v5122, 0
      %v5191 = vsel %vm5156, %v5123, 0
      %5193 = vmatprep.subr.mxu0 0.0
      %5194 = vmatpush1.xpose.msra.mxu0 0.0
      %5195 = vmatprep.subr.mxu0 0.0
      %5196 = vmatpush1.xpose.msra.mxu0 0.0
      %5197 = vmatprep.subr.mxu0 0.0
      %5198 = vmatpush1.xpose.msra.mxu0 0.0
      %5199 = vmatprep.subr.mxu0 0.0
      %5200 = vmatpush1.xpose.msra.mxu0 0.0
      %5201 = vmatprep.subr.mxu0 0.0
      %5202 = vmatpush1.xpose.msra.mxu0 0.0
      %5203 = vmatprep.subr.mxu0 0.0
      %5204 = vmatpush1.xpose.msra.mxu0 0.0
      %5205 = vmatprep.subr.mxu0 0.0
      %5206 = vmatpush1.xpose.msra.mxu0 0.0
      %5207 = vmatprep.subr.mxu0 0.0
      %5208 = vmatpush1.xpose.msra.mxu0 0.0
      %5209 = vmatprep.subr.mxu0 0.0
      %5210 = vmatpush1.xpose.msra.mxu0 %v5191
      %5211 = vmatprep.subr.mxu0 0.0
      %5212 = vmatpush1.xpose.msra.mxu0 %v5188
      %5213 = vmatprep.subr.mxu0 0.0
      %5214 = vmatpush1.xpose.msra.mxu0 %v5185
      %5215 = vmatprep.subr.mxu0 0.0
      %5216 = vmatpush1.xpose.msra.mxu0 %v5182
      %5217 = vmatprep.subr.mxu0 0.0
      %5218 = vmatpush1.xpose.msra.mxu0 %v5179
      %5219 = vmatprep.subr.mxu0 0.0
      %5220 = vmatpush1.xpose.msra.mxu0 %v5176
      %5221 = vmatprep.subr.mxu0 0.0
      %5222 = vmatpush1.xpose.msra.mxu0 %v5173
      %5223 = vmatprep.subr.mxu0 0.0
      %5224 = vmatpush1.xpose.msra.mxu0 %v5170
      %5225 = vmatprep.subr.mxu0 0.0
      %5226 = vmatpush2.xpose.msra.mxu0 0.0
      %5227 = vmatprep.subr.mxu0 0.0
      %5228 = vmatpush2.xpose.msra.mxu0 0.0
      %5229 = vmatprep.subr.mxu0 0.0
      %5230 = vmatpush2.xpose.msra.mxu0 0.0
      %5231 = vmatprep.subr.mxu0 0.0
      %5232 = vmatpush2.xpose.msra.mxu0 0.0
      %5233 = vmatprep.subr.mxu0 0.0
      %5234 = vmatpush2.xpose.msra.mxu0 0.0
      %5235 = vmatprep.subr.mxu0 0.0
      %5236 = vmatpush2.xpose.msra.mxu0 0.0
      %5237 = vmatprep.subr.mxu0 0.0
      %5238 = vmatpush2.xpose.msra.mxu0 0.0
      %5239 = vmatprep.subr.mxu0 0.0
      %5240 = vmatpush2.xpose.msra.mxu0 0.0
      %5241 = vmatprep.subr.mxu0 0.0
      %5242 = vmatpush2.xpose.msra.mxu0 0.0
      %5243 = vmatprep.subr.mxu0 0.0
      %5244 = vmatpush2.xpose.msra.mxu0 0.0
      %5245 = vmatprep.subr.mxu0 0.0
      %5246 = vmatpush2.xpose.msra.mxu0 0.0
      %5247 = vmatprep.subr.mxu0 0.0
      %5248 = vmatpush2.xpose.msra.mxu0 0.0
      %5249 = vmatprep.subr.mxu0 0.0
      %5250 = vmatpush2.xpose.msra.mxu0 0.0
      %5251 = vmatprep.subr.mxu0 0.0
      %5252 = vmatpush2.xpose.msra.mxu0 0.0
      %5253 = vmatprep.subr.mxu0 0.0
      %5254 = vmatpush2.xpose.msra.mxu0 0.0
      %5255 = vmatprep.subr.mxu0 0.0
      %5256 = vmatpush2.xpose.msra.mxu0 0.0
      %5257 = vmatprep.mubr.f32.mxu0 0.0
      %5258 = vmatmul.mubr.f32.gmra.mxu0 %v5158
      %v5259 = vpop.f32.mrf.mxu0
      %v5260 = vadd.f32 0.0, %v5259
      %v5261 = vpop.f32.mrf.mxu0
      %5262 = vmatprep.mubr.f32.mxu0 0.0
      %5263 = vmatmul.mubr.f32.gmra.mxu0 %v5161
      %v5264 = vpop.f32.mrf.mxu0
      %v5265 = vadd.f32 0.0, %v5264
      %v5266 = vpop.f32.mrf.mxu0
      %5267 = vmatprep.mubr.f32.mxu0 0.0
      %5268 = vmatmul.mubr.f32.gmra.mxu0 %v5164
      %v5269 = vpop.f32.mrf.mxu0
      %v5270 = vadd.f32 0.0, %v5269
      %v5271 = vpop.f32.mrf.mxu0
      %5272 = vmatprep.mubr.f32.mxu0 0.0
      %5273 = vmatmul.mubr.f32.gmra.mxu0 %v5167
      %v5274 = vpop.f32.mrf.mxu0
      %v5275 = vadd.f32 0.0, %v5274
      %v5276 = vpop.f32.mrf.mxu0
      %5277 = vdwg.mxu0
      %v5278 = vmul.f32 %v372, 0.95
      %v5279 = vmul.f32 %v373, 0.95
      %v5280 = vmul.f32 %v374, 0.95
      %v5281 = vmul.f32 %v375, 0.95
      %v5282 = vmul.f32 %v5260, 0.5
      %v5283 = vmul.f32 %v5265, 0.5
      %v5284 = vmul.f32 %v5270, 0.5
      %v5285 = vmul.f32 %v5275, 0.5
      %v5286 = vsub.f32 %v5278, %v5282
      %v5287 = vsub.f32 %v5279, %v5283
      %v5288 = vsub.f32 %v5280, %v5284
      %v5289 = vsub.f32 %v5281, %v5285
      %v5290 = vmax.f32 %v5286, -2.0
      %v5291 = vmax.f32 %v5287, -2.0
      %v5292 = vmax.f32 %v5288, -2.0
      %v5293 = vmax.f32 %v5289, -2.0
      %v5294 = vmin.f32 %v5290, 2.0
      %v5295 = vmin.f32 %v5291, 2.0
      %v5296 = vmin.f32 %v5292, 2.0
      %v5297 = vmin.f32 %v5293, 2.0
      %v5298 = vld [vmem:[%s19] sm:$0xff]
      %v5299 = vld [vmem:[%s19 + $0x8] sm:$0x3]
      %v5300 = vmul.f32 %v5064, %v612
      %v5301 = vmul.f32 %v5065, %v612
      %v5302 = vmul.f32 %v5066, %v612
      %v5303 = vmul.f32 %v5067, %v612
      %v5304 = vld [vmem:[%s20] sm:$0xff]
      %v5305 = vld [vmem:[%s20 + $0x8] sm:$0x3]
      %5307 = vset.pattern.permute.xlu0 0
      %5308 = vperm.xlu0 %5307, %v5304
      %v5309 = vpop.permute.xlu0 %5308
      %5312 = vset.pattern.permute.xlu0 0
      %5313 = vperm.xlu0 %5312, %v5305
      %v5314 = vpop.permute.xlu0 %5313
      %v5317 = vsel %vm2424, %v5298, 0
      %v5320 = vsel %vm2424, %v5299, 0
      %5322 = vmatprep.subr.mxu0 0.0
      %5323 = vmatpush1.msra.mxu0 0.0
      %5324 = vmatprep.subr.mxu0 0.0
      %5325 = vmatpush1.msra.mxu0 0.0
      %5326 = vmatprep.subr.mxu0 0.0
      %5327 = vmatpush1.msra.mxu0 0.0
      %5328 = vmatprep.subr.mxu0 0.0
      %5329 = vmatpush1.msra.mxu0 0.0
      %5330 = vmatprep.subr.mxu0 0.0
      %5331 = vmatpush1.msra.mxu0 0.0
      %5332 = vmatprep.subr.mxu0 0.0
      %5333 = vmatpush1.msra.mxu0 0.0
      %5334 = vmatprep.subr.mxu0 0.0
      %5335 = vmatpush1.msra.mxu0 0.0
      %5336 = vmatprep.subr.mxu0 0.0
      %5337 = vmatpush1.msra.mxu0 0.0
      %5338 = vmatprep.subr.mxu0 0.0
      %5339 = vmatpush1.msra.mxu0 0.0
      %5340 = vmatprep.subr.mxu0 0.0
      %5341 = vmatpush1.msra.mxu0 0.0
      %5342 = vmatprep.subr.mxu0 0.0
      %5343 = vmatpush1.msra.mxu0 0.0
      %5344 = vmatprep.subr.mxu0 0.0
      %5345 = vmatpush1.msra.mxu0 0.0
      %5346 = vmatprep.subr.mxu0 0.0
      %5347 = vmatpush1.msra.mxu0 %v5303
      %5348 = vmatprep.subr.mxu0 0.0
      %5349 = vmatpush1.msra.mxu0 %v5302
      %5350 = vmatprep.subr.mxu0 0.0
      %5351 = vmatpush1.msra.mxu0 %v5301
      %5352 = vmatprep.subr.mxu0 0.0
      %5353 = vmatpush1.msra.mxu0 %v5300
      %5354 = vmatprep.subr.mxu0 0.0
      %5355 = vmatpush2.msra.mxu0 0.0
      %5356 = vmatprep.subr.mxu0 0.0
      %5357 = vmatpush2.msra.mxu0 0.0
      %5358 = vmatprep.subr.mxu0 0.0
      %5359 = vmatpush2.msra.mxu0 0.0
      %5360 = vmatprep.subr.mxu0 0.0
      %5361 = vmatpush2.msra.mxu0 0.0
      %5362 = vmatprep.subr.mxu0 0.0
      %5363 = vmatpush2.msra.mxu0 0.0
      %5364 = vmatprep.subr.mxu0 0.0
      %5365 = vmatpush2.msra.mxu0 0.0
      %5366 = vmatprep.subr.mxu0 0.0
      %5367 = vmatpush2.msra.mxu0 0.0
      %5368 = vmatprep.subr.mxu0 0.0
      %5369 = vmatpush2.msra.mxu0 0.0
      %5370 = vmatprep.subr.mxu0 0.0
      %5371 = vmatpush2.msra.mxu0 0.0
      %5372 = vmatprep.subr.mxu0 0.0
      %5373 = vmatpush2.msra.mxu0 0.0
      %5374 = vmatprep.subr.mxu0 0.0
      %5375 = vmatpush2.msra.mxu0 0.0
      %5376 = vmatprep.subr.mxu0 0.0
      %5377 = vmatpush2.msra.mxu0 0.0
      %5378 = vmatprep.subr.mxu0 0.0
      %5379 = vmatpush2.msra.mxu0 0.0
      %5380 = vmatprep.subr.mxu0 0.0
      %5381 = vmatpush2.msra.mxu0 0.0
      %5382 = vmatprep.subr.mxu0 0.0
      %5383 = vmatpush2.msra.mxu0 0.0
      %5384 = vmatprep.subr.mxu0 0.0
      %5385 = vmatpush2.msra.mxu0 0.0
      %5386 = vmatprep.mubr.f32.mxu0 0.0
      %5387 = vmatmul.mubr.f32.gmra.mxu0 %v5317
      %v5388 = vpop.f32.mrf.mxu0
      %v5389 = vadd.f32 %v5309, %v5388
      %v5390 = vpop.f32.mrf.mxu0
      %5391 = vmatprep.mubr.f32.mxu0 0.0
      %5392 = vmatmul.mubr.f32.gmra.mxu0 %v5320
      %v5393 = vpop.f32.mrf.mxu0
      %v5394 = vadd.f32 %v5314, %v5393
      %v5395 = vpop.f32.mrf.mxu0
      %5396 = vdwg.mxu0
      %v5397 = vmul.f32 %v368, 0.3
      %v5398 = vmul.f32 %v369, 0.3
      %v5399 = vsub.f32 %v366, %v5397
      %v5400 = vsub.f32 %v367, %v5398
      %v5401 = vmul.f32 %v5399, 0.6
      %v5402 = vmul.f32 %v5400, 0.6
      %v5403 = vadd.f32 %v5401, %v5389
      %v5404 = vadd.f32 %v5402, %v5394
      %vm5405 = vcmp.gt.f32.partialorder %v5403, 0.3
      %vm5406 = vcmp.gt.f32.partialorder %v5404, 0.3
      %v5407 = vsel %vm5405, 1, 0
      %v5408 = vsel %vm5406, 1, 0
      %v5409 = vcvt.s32.f32 %v5407
      %v5410 = vcvt.s32.f32 %v5408
      %v5411 = vadd.f32 %v370, %v5409
      %v5412 = vadd.f32 %v371, %v5410
      %s5413 = scalar_select %p378, 1, 0
      %v5414 = vstv %s5413
      %vm5415 = vcmp.eq.s32.totalorder %v5414, 1
      %v5416 = vsel %vm5415, %v392, %v342
      %v5417 = vsel %vm5415, %v393, %v343
      %v5418 = vsel %vm5415, %v394, %v344
      %v5419 = vsel %vm5415, %v395, %v345
      %v5420 = vsel %vm5415, %v404, %v346
      %v5421 = vsel %vm5415, %v405, %v347
      %v5422 = vsel %vm5415, %v406, %v348
      %v5423 = vsel %vm5415, %v407, %v349
      %v5424 = vsel %vm5415, %v2233, %v350
      %v5425 = vsel %vm5415, %v2234, %v351
      %v5426 = vsel %vm5415, %v2239, %v352
      %v5427 = vsel %vm5415, %v2240, %v353
      %v5428 = vsel %vm5415, %v3900, %v354
      %v5429 = vsel %vm5415, %v3901, %v355
      %v5430 = vsel %vm5415, %v3906, %v356
      %v5431 = vsel %vm5415, %v3907, %v357
      %v5432 = vsel %vm5415, %v5052, %v358
      %v5433 = vsel %vm5415, %v5053, %v359
      %v5434 = vsel %vm5415, %v5054, %v360
      %v5435 = vsel %vm5415, %v5055, %v361
      %v5436 = vsel %vm5415, %v5064, %v362
      %v5437 = vsel %vm5415, %v5065, %v363
      %v5438 = vsel %vm5415, %v5066, %v364
      %v5439 = vsel %vm5415, %v5067, %v365
      %v5440 = vsel %vm5415, %v5403, %v366
      %v5441 = vsel %vm5415, %v5404, %v367
      %v5442 = vsel %vm5415, %v5409, %v368
      %v5443 = vsel %vm5415, %v5410, %v369
      %v5444 = vsel %vm5415, %v5411, %v370
      %v5445 = vsel %vm5415, %v5412, %v371
      %v5446 = vsel %vm5415, %v5294, %v372
      %v5447 = vsel %vm5415, %v5295, %v373
      %v5448 = vsel %vm5415, %v5296, %v374
      %v5449 = vsel %vm5415, %v5297, %v375
      %s5450 = scalar_select %p378, %s337, %s377
      %vm5451 = vcmp.gt.f32.partialorder %v5440, 0.3
      %vm5452 = vcmp.gt.f32.partialorder %v5441, 0.3
      %v5453 = vsel %vm5451, 1, 0
      %v5454 = vsel %vm5452, 1, 0
      %v5455 = vcvt.s32.f32 %v5453
      %v5456 = vcvt.s32.f32 %v5454
      %v5457 = vsel %vm5156, %v5455, -inf
      %vm5458 = vcmask 9216
      %v5459 = vsel %vm5458, %v5456, -inf
      %v5460 = vmax.f32 %v5457, %v5459
      %v5461 = vrot.slane %v5460, 4
      %v5462 = vmax.f32 %v5460, %v5461
      %v5463 = vrot.slane %v5462, 2
      %v5464 = vmax.f32 %v5462, %v5463
      %v5465 = vrot.slane %v5464, 1
      %v5466 = vmax.f32 %v5464, %v5465
      %vm5467 = vcmask 8192
      %v5468 = vsel %vm5467, %v5466, 0.0
      %5469 = vadd.xlane.f32.xlu0 %v5468
      %v5470 = vpop.xlane.xlu0 %5469
      %v5471 = vrot.slane %v5470, 4
      %v5472 = vadd.f32 %v5470, %v5471
      %v5473 = vrot.slane %v5472, 2
      %v5474 = vadd.f32 %v5472, %v5473
      %v5475 = vrot.slane %v5474, 1
      %v5476 = vadd.f32 %v5474, %v5475
      %s5477 = vtos %v5476
      %s5478 = smul.f32 %s5477, 0.5
      %p5479 = scmp.gt.f32.partialorder %s5478, 0.8
      %p5480 = scmp.ge.s32.totalorder %s337, 1
      %p5481 = pnand %p5479, %p5480
      %p5482 = pneg %p5481
      %p5483 = pnand %p378, %p5482
      %p5484 = pneg %p5483
      %s5485 = scalar_select %p5484, 1, %s376
    $region118: #{snn_forward.1} parent=1 // loop_footer
      %s341 = sadd.s32 1, %s337
    $region119: #{snn_forward.1} parent=1 // loop_footer_branch
      %336 = sbr.rel target = $region115
    $region120: #{snn_forward.1} parent=1 // loop_exit
      _
    %vm5486 = vcmask 15360
    %5487 = vst.msk [vmem:[%s22] sm:$0xff] %vm5486, %v366
    %vm5488 = vcmask 9216
    %5489 = vst.msk [vmem:[%s22 + $0x8] sm:$0x3] %vm5488, %v367
    %5490 = vst.msk [vmem:[%s23] sm:$0xff] %vm5486, %v370
    %5491 = vst.msk [vmem:[%s23 + $0x8] sm:$0x3] %vm5488, %v371
    %vm5492 = vcmask 523264
    %5493 = vst.msk [vmem:[#allocation15] sm:$0xff] %vm5492, %v372
    %5494 = vst.msk [vmem:[#allocation15 + $0x8] sm:$0xff] %vm5492, %v373
    %5495 = vst.msk [vmem:[#allocation15 + $0x10] sm:$0xff] %vm5492, %v374
    %5496 = vst.msk [vmem:[#allocation15 + $0x18] sm:$0xff] %vm5492, %v375
    %s5497 = scalar_lea.smem [#allocation16], 0
    %5498 = sst [smem:[%s5497]] %s377
    // Predicated region
    $region121: #{snn_forward.1} parent=1 // pred_check
      _
    $region122: #{snn_forward.1} parent=1 // pred_check_branch
      %5500 = sbr.rel (0) target = $region124
    $region123: #{snn_forward.1} parent=1 // pred_region
      _
    $region124: #{snn_forward.1} parent=1 // pred_fallthru
      _
    // Predicated region
    $region125: #{snn_forward.1} parent=1 // pred_check
      _
    $region126: #{snn_forward.1} parent=1 // pred_check_branch
      %5502 = sbr.rel (0) target = $region128
    $region127: #{snn_forward.1} parent=1 // pred_region
      _
    $region128: #{snn_forward.1} parent=1 // pred_fallthru
      _
    // Predicated region
    $region129: #{snn_forward.1} parent=1 // pred_check
      _
    $region130: #{snn_forward.1} parent=1 // pred_check_branch
      %5504 = sbr.rel (0) target = $region132
    $region131: #{snn_forward.1} parent=1 // pred_region
      %s5506 = ssub.s32 512, 512
      %5507 = vsyncadd [#allocation5], %s5506
      %s5508 = sshll.u32 [#allocation15], 4
      %s5509 = int_to_ptr.vmem [resolvable:$true] %s5508
      %5514 = dma.vmem_to_hbm [thread:$0]  %s5509, 512, %s24, [#allocation5], 128, 128, 8
    $region132: #{snn_forward.1} parent=1 // pred_fallthru
      _
    // Predicated region
    $region133: #{snn_forward.1} parent=1 // pred_check
      _
    $region134: #{snn_forward.1} parent=1 // pred_check_branch
      %5516 = sbr.rel (0) target = $region136
    $region135: #{snn_forward.1} parent=1 // pred_region
      %s5518 = ssub.s32 16, 16
      %5519 = vsyncadd [#allocation6], %s5518
      %5522 = dma.smem_to_hbm [#allocation16], 16, %s25, [#allocation6]
    $region136: #{snn_forward.1} parent=1 // pred_fallthru
      _
    // Predicated region
    $region137: #{snn_forward.1} parent=1 // pred_check
      _
    $region138: #{snn_forward.1} parent=1 // pred_check_branch
      %5524 = sbr.rel (0) target = $region140
    $region139: #{snn_forward.1} parent=1 // pred_region
      _
    $region140: #{snn_forward.1} parent=1 // pred_fallthru
      _
    // Predicated region
    $region141: #{snn_forward.1} parent=1 // pred_check
      _
    $region142: #{snn_forward.1} parent=1 // pred_check_branch
      %5526 = sbr.rel (0) target = $region144
    $region143: #{snn_forward.1} parent=1 // pred_region
      _
    $region144: #{snn_forward.1} parent=1 // pred_fallthru
      _
    // Predicated region
    $region145: #{snn_forward.1} parent=1 // pred_check
      _
    $region146: #{snn_forward.1} parent=1 // pred_check_branch
      %5528 = sbr.rel (0) target = $region148
    $region147: #{snn_forward.1} parent=1 // pred_region
      %5529 = dma.done [#allocation5], 512
    $region148: #{snn_forward.1} parent=1 // pred_fallthru
      _
    // Predicated region
    $region149: #{snn_forward.1} parent=1 // pred_check
      _
    $region150: #{snn_forward.1} parent=1 // pred_check_branch
      %5531 = sbr.rel (0) target = $region152
    $region151: #{snn_forward.1} parent=1 // pred_region
      %5532 = dma.done [#allocation6], 16
    $region152: #{snn_forward.1} parent=1 // pred_fallthru
      _
    %5533 = sfence
    %5534 = vsyncpa [#allocation4], 1
    %5535 = vsyncpa [#allocation10], 1
    %5536 = vsyncpa [#allocation13], 1
    %5537 = vsyncpa [#allocation5], 1
    %5538 = vsyncpa [#allocation6], 1
    %5539 = vsyncpa [#allocation7], 1

</llo_original>
